<compile_context>
chip_gen: v5e
topology: v5e:2x2
jax: 0.10.0
libtpu: 0.0.40
codegen_flags: <defaults>
</compile_context>

<pallas_src>
import math
import jax
import jax.numpy as jnp
from jax.experimental import pallas as pl
from jax.experimental.pallas import tpu as pltpu

# --- model hyperparameters (small, consistent with the module) ---------------
LATENT_DIM = 32
LATENT_PAD = 128                               # pad z features to a full lane group
CHANNELS = 1
IMG_SIZE = 16
IMG_FLAT = CHANNELS * IMG_SIZE * IMG_SIZE      # 256
BATCH = 64

HIDDEN = (128, 256, 512, 1024)

# Widest live activation is tile_b x 1024 f32 -> 2 MiB at tile_b = 512; together
# with ~2 MiB resident weights + 1.5 MiB manual-DMA scratch this stays well
# inside v5e's 16 MiB default scoped VMEM.
MAX_BATCH_TILE = 512

# --- packed small-parameter layout (biases + BN gamma/beta) -------------------
# All segment sizes are multiples of 128, so every static slice is lane-aligned.
SMALL_SEGS = (
    ("b1", HIDDEN[0]),
    ("b2", HIDDEN[1]), ("g2", HIDDEN[1]), ("be2", HIDDEN[1]),
    ("b3", HIDDEN[2]), ("g3", HIDDEN[2]), ("be3", HIDDEN[2]),
    ("b4", HIDDEN[3]), ("g4", HIDDEN[3]), ("be4", HIDDEN[3]),
    ("b5", IMG_FLAT),
)
_SMALL_OFFSETS = {}
_off = 0
for _name, _n in SMALL_SEGS:
    _SMALL_OFFSETS[_name] = (_off, _n)
    _off += _n
SMALL_TOTAL = _off                              # 5760 = 45 * 128


def _leaky_relu(x, slope=0.2):
    # slope > 0  =>  max(x, slope*x) == LeakyReLU(x); one VALU op per tile.
    return jnp.maximum(x, slope * x)


def _batchnorm(x, gamma, beta, eps=0.8):
    # training-mode BatchNorm1d: batch mean, biased batch variance.
    # One-pass variance E[x^2]-mean^2 (rescued numerically by eps=0.8), affine
    # folded so the full-tile work is a single multiply-add pass.
    mean = jnp.mean(x, axis=0, keepdims=True)
    mean_sq = jnp.mean(x * x, axis=0, keepdims=True)
    var = mean_sq - mean * mean
    scale = jax.lax.rsqrt(var + eps) * gamma           # (1, N)
    shift = beta - mean * scale                        # (1, N)
    return x * scale + shift


def generator_kernel(z_ref, w1_ref, w2_ref, w3_ref, p_ref, w4_hbm, w5_hbm,
                     out_ref, w4_buf, w5_buf, dma_sem):
    # Start the two big weight DMAs immediately so they overlap with the
    # layer-1..3 matmuls; wait only right before each weight is consumed.
    w4_cp = pltpu.make_async_copy(w4_hbm, w4_buf, dma_sem.at[0])
    w5_cp = pltpu.make_async_copy(w5_hbm, w5_buf, dma_sem.at[1])
    w4_cp.start()
    w5_cp.start()

    def seg(name):
        off, n = _SMALL_OFFSETS[name]
        return p_ref[:, off:off + n]                   # (1, n) f32, lane-aligned

    def linear(x_f32, w_bf16, b):
        # bf16 x bf16 on the MXU, f32 accumulation, f32 bias add.
        return jnp.dot(x_f32.astype(jnp.bfloat16), w_bf16,
                       preferred_element_type=jnp.float32) + b

    # block 1: Linear -> LeakyReLU (no BN)
    h = _leaky_relu(linear(z_ref[...], w1_ref[...], seg("b1")))

    # block 2: Linear -> BN -> LeakyReLU
    h = _leaky_relu(_batchnorm(linear(h, w2_ref[...], seg("b2")),
                               seg("g2"), seg("be2")))

    # block 3
    h = _leaky_relu(_batchnorm(linear(h, w3_ref[...], seg("b3")),
                               seg("g3"), seg("be3")))

    # block 4 (w4 arrives via manual DMA, hidden behind blocks 1-3)
    w4_cp.wait()
    h = _leaky_relu(_batchnorm(linear(h, w4_buf[...], seg("b4")),
                               seg("g4"), seg("be4")))

    # head: Linear -> Tanh (w5 DMA additionally hidden behind block 4)
    w5_cp.wait()
    out_ref[...] = jnp.tanh(linear(h, w5_buf[...], seg("b5")))


def init_params(key):
    """PyTorch-style default Linear init: U(-1/sqrt(fan_in), 1/sqrt(fan_in)).

    Returns:
      weights: list of 5 bf16 matrices [(128p,128),(128,256),(256,512),
               (512,1024),(1024,256)]; w1 is zero-padded on its input dim
               32 -> 128 so the first dot is lane-dense.
      small:   (1, SMALL_TOTAL) f32 packed biases + BN gamma/beta.
    """
    dims = (LATENT_DIM,) + HIDDEN + (IMG_FLAT,)
    weights = []
    smalls = {}
    for i in range(len(dims) - 1):
        fan_in, fan_out = dims[i], dims[i + 1]
        key, kw, kb = jax.random.split(key, 3)
        bound = 1.0 / math.sqrt(fan_in)
        w = jax.random.uniform(kw, (fan_in, fan_out), jnp.float32, -bound, bound)
        b = jax.random.uniform(kb, (1, fan_out), jnp.float32, -bound, bound)
        if i == 0:
            # pad latent input dim 32 -> 128 with zero rows (exact math: the
            # extra z columns are zero too).
            w = jnp.pad(w, ((0, LATENT_PAD - LATENT_DIM), (0, 0)))
        weights.append(w.astype(jnp.bfloat16))
        smalls[f"b{i + 1}"] = b
    # BN affine params for hidden layers 2..4 (gamma=1, beta=0)
    for li, n in zip((2, 3, 4), HIDDEN[1:]):
        smalls[f"g{li}"] = jnp.ones((1, n), jnp.float32)
        smalls[f"be{li}"] = jnp.zeros((1, n), jnp.float32)
    small = jnp.concatenate([smalls[name] for name, _ in SMALL_SEGS], axis=1)
    assert small.shape == (1, SMALL_TOTAL)
    return weights, small


def generator_forward(z, weights, small):
    w1, w2, w3, w4, w5 = weights

    B = z.shape[0]
    # Exact PyTorch train-mode BN needs statistics over the whole batch:
    # process the full batch as one tile whenever it fits VMEM.
    if B <= MAX_BATCH_TILE:
        tile_b = B
    else:
        tile_b = MAX_BATCH_TILE
        assert B % tile_b == 0, "batch must be a multiple of MAX_BATCH_TILE when tiling"
        # TODO(synk): for B > MAX_BATCH_TILE this computes per-tile ("ghost")
        # BN statistics; exact full-batch BN would need a cross-tile stats pass.
    grid = (B // tile_b,)

    # lane-dense z: pad 32 -> 128 features with zeros (matches padded w1 rows)
    z_pad = jnp.pad(z, ((0, 0), (0, LATENT_PAD - LATENT_DIM)))

    def resident(shape):
        # weights / packed small params: same block for every batch tile ->
        # DMA'd into VMEM once and reused across the whole grid.
        return pl.BlockSpec(shape, lambda i: (0, 0))

    in_specs = [
        pl.BlockSpec((tile_b, LATENT_PAD), lambda i: (i, 0)),      # z
        resident((LATENT_PAD, HIDDEN[0])),                         # w1
        resident((HIDDEN[0], HIDDEN[1])),                          # w2
        resident((HIDDEN[1], HIDDEN[2])),                          # w3
        resident((1, SMALL_TOTAL)),                                # packed biases/BN
        pl.BlockSpec(memory_space=pl.ANY),                         # w4 (HBM, manual DMA)
        pl.BlockSpec(memory_space=pl.ANY),                         # w5 (HBM, manual DMA)
    ]
    out_specs = pl.BlockSpec((tile_b, IMG_FLAT), lambda i: (i, 0))

    scratch_shapes = [
        pltpu.VMEM((HIDDEN[2], HIDDEN[3]), jnp.bfloat16),          # w4 landing buffer
        pltpu.VMEM((HIDDEN[3], IMG_FLAT), jnp.bfloat16),           # w5 landing buffer
        pltpu.SemaphoreType.DMA((2,)),
    ]

    # --- advisory cost estimate for the outer XLA scheduler ------------------
    dims = (LATENT_PAD,) + HIDDEN + (IMG_FLAT,)
    layer_sizes = [dims[i] * dims[i + 1] for i in range(len(dims) - 1)]
    flops = 2 * B * sum(layer_sizes)
    transcendentals = B * IMG_FLAT                                  # tanh
    weight_bytes = sum(layer_sizes) * 2                             # bf16
    small_bytes = 4 * SMALL_TOTAL                                   # packed f32
    act_bytes = 4 * B * (LATENT_PAD + IMG_FLAT)                     # z in, img out
    cost = pl.CostEstimate(flops=flops,
                           transcendentals=transcendentals,
                           bytes_accessed=weight_bytes + small_bytes + act_bytes)

    flat = pl.pallas_call(
        generator_kernel,
        out_shape=jax.ShapeDtypeStruct((B, IMG_FLAT), jnp.float32),
        grid=grid,
        in_specs=in_specs,
        out_specs=out_specs,
        scratch_shapes=scratch_shapes,
        compiler_params=pltpu.CompilerParams(
            dimension_semantics=("parallel",)),   # splits batch tiles when grid > 1
        cost_estimate=cost,
    )(z_pad, w1, w2, w3, small, w4, w5)

    # glue: view(B, C, H, W)  (NCHW, matching PyTorch)
    return flat.reshape(B, CHANNELS, IMG_SIZE, IMG_SIZE)


def generator_reference(z, weights, small):
    """Plain-JAX reference mirroring the kernel's precision choices."""
    w1, w2, w3, w4, w5 = weights

    def seg(name):
        off, n = _SMALL_OFFSETS[name]
        return small[:, off:off + n]

    z_pad = jnp.pad(z, ((0, 0), (0, LATENT_PAD - LATENT_DIM)))

    def linear(x, w, b):
        return jnp.dot(x.astype(jnp.bfloat16), w,
                       preferred_element_type=jnp.float32) + b

    h = _leaky_relu(linear(z_pad, w1, seg("b1")))
    h = _leaky_relu(_batchnorm(linear(h, w2, seg("b2")), seg("g2"), seg("be2")))
    h = _leaky_relu(_batchnorm(linear(h, w3, seg("b3")), seg("g3"), seg("be3")))
    h = _leaky_relu(_batchnorm(linear(h, w4, seg("b4")), seg("g4"), seg("be4")))
    h = jnp.tanh(linear(h, w5, seg("b5")))
    return h.reshape(z.shape[0], CHANNELS, IMG_SIZE, IMG_SIZE)


if __name__ == "__main__":
    key = jax.random.PRNGKey(0)
    key, kz, kp = jax.random.split(key, 3)
    z = jax.random.normal(kz, (BATCH, LATENT_DIM), jnp.float32)
    weights, small = init_params(kp)

    img = generator_forward(z, weights, small)
    jax.block_until_ready(img)

    assert img.shape == (BATCH, CHANNELS, IMG_SIZE, IMG_SIZE)
    assert img.dtype == jnp.float32

    ref = generator_reference(z, weights, small)
    assert jnp.max(jnp.abs(img - ref)) < 5e-2

    print("KERNEL_OK")
</pallas_src>

<mosaic_0001>
module attributes {stable_mosaic.version = 11 : i64} {
  func.func @generator_kernel(%arg0: i32, %arg1: memref<64x128xf32, #tpu.memory_space<vmem>>, %arg2: memref<128x128xbf16, #tpu.memory_space<vmem>>, %arg3: memref<128x256xbf16, #tpu.memory_space<vmem>>, %arg4: memref<256x512xbf16, #tpu.memory_space<vmem>>, %arg5: memref<1x5760xf32, #tpu.memory_space<vmem>>, %arg6: memref<512x1024xbf16, #tpu.memory_space<any>>, %arg7: memref<1024x256xbf16, #tpu.memory_space<any>>, %arg8: memref<64x256xf32, #tpu.memory_space<vmem>>, %arg9: memref<512x1024xbf16, #tpu.memory_space<vmem>>, %arg10: memref<1024x256xbf16, #tpu.memory_space<vmem>>, %arg11: memref<2x!tpu.dma_semaphore, #tpu.memory_space<semaphore_mem>>) attributes {dimension_semantics = [#tpu.dimension_semantics<parallel>], iteration_bounds = array<i64: 1>, scalar_prefetch = 0 : i64, scratch_operands = 3 : i64, tpu.core_type = #tpu.core_type<tc>, window_params = [{transform_indices = @transform_0, window_bounds = array<i64: 64, 128>}, {pipeline_mode = #tpu.pipeline_mode<synchronous>, transform_indices = @transform_1, window_bounds = array<i64: 128, 128>}, {pipeline_mode = #tpu.pipeline_mode<synchronous>, transform_indices = @transform_2, window_bounds = array<i64: 128, 256>}, {pipeline_mode = #tpu.pipeline_mode<synchronous>, transform_indices = @transform_3, window_bounds = array<i64: 256, 512>}, {pipeline_mode = #tpu.pipeline_mode<synchronous>, transform_indices = @transform_4, window_bounds = array<i64: 1, 5760>}, {}, {}, {transform_indices = @transform_7, window_bounds = array<i64: 64, 256>}]} {
    %c0_i32 = arith.constant 0 : i32
    %0 = tpu.memref_slice %arg11[%c0_i32] : memref<2x!tpu.dma_semaphore, #tpu.memory_space<semaphore_mem>> -> memref<1x!tpu.dma_semaphore, #tpu.memory_space<semaphore_mem>>
    %1 = tpu.memref_squeeze %0 : memref<1x!tpu.dma_semaphore, #tpu.memory_space<semaphore_mem>> -> memref<!tpu.dma_semaphore, #tpu.memory_space<semaphore_mem>>
    tpu.enqueue_dma source(%arg6 : memref<512x1024xbf16, #tpu.memory_space<any>>) target(%arg9 : memref<512x1024xbf16, #tpu.memory_space<vmem>>) target_semaphore(%1 : memref<!tpu.dma_semaphore, #tpu.memory_space<semaphore_mem>>)
    %c1_i32 = arith.constant 1 : i32
    %2 = tpu.memref_slice %arg11[%c1_i32] : memref<2x!tpu.dma_semaphore, #tpu.memory_space<semaphore_mem>> -> memref<1x!tpu.dma_semaphore, #tpu.memory_space<semaphore_mem>>
    %3 = tpu.memref_squeeze %2 : memref<1x!tpu.dma_semaphore, #tpu.memory_space<semaphore_mem>> -> memref<!tpu.dma_semaphore, #tpu.memory_space<semaphore_mem>>
    tpu.enqueue_dma source(%arg7 : memref<1024x256xbf16, #tpu.memory_space<any>>) target(%arg10 : memref<1024x256xbf16, #tpu.memory_space<vmem>>) target_semaphore(%3 : memref<!tpu.dma_semaphore, #tpu.memory_space<semaphore_mem>>)
    %c0 = arith.constant 0 : index
    %c0_0 = arith.constant 0 : index
    %4 = vector.load %arg1[%c0, %c0_0] : memref<64x128xf32, #tpu.memory_space<vmem>>, vector<64x128xf32>
    %c0_1 = arith.constant 0 : index
    %c0_2 = arith.constant 0 : index
    %5 = vector.load %arg2[%c0_1, %c0_2] : memref<128x128xbf16, #tpu.memory_space<vmem>>, vector<128x128xbf16>
    %c0_3 = arith.constant 0 : index
    %c0_4 = arith.constant 0 : index
    %6 = vector.load %arg5[%c0_3, %c0_4] : memref<1x5760xf32, #tpu.memory_space<vmem>>, vector<1x128xf32>
    %7 = arith.truncf %4 : vector<64x128xf32> to vector<64x128xbf16>
    %cst = arith.constant dense<0.000000e+00> : vector<64x128xf32>
    %8 = tpu.matmul %7, %5, %cst {dimension_numbers = #tpu.dot_dimension_numbers<[1], [0], [0], [1], [0, 0, 1, 1], [], []>} : vector<64x128xbf16>, vector<128x128xbf16>, vector<64x128xf32> -> vector<64x128xf32>
    %9 = vector.broadcast %6 : vector<1x128xf32> to vector<64x128xf32>
    %10 = arith.addf %8, %9 : vector<64x128xf32>
    %cst_5 = arith.constant 2.000000e-01 : f32
    %11 = vector.broadcast %cst_5 : f32 to vector<64x128xf32>
    %12 = arith.mulf %11, %10 : vector<64x128xf32>
    %13 = arith.maximumf %10, %12 : vector<64x128xf32>
    %c0_6 = arith.constant 0 : index
    %c0_7 = arith.constant 0 : index
    %14 = vector.load %arg3[%c0_6, %c0_7] : memref<128x256xbf16, #tpu.memory_space<vmem>>, vector<128x256xbf16>
    %c0_8 = arith.constant 0 : index
    %c128 = arith.constant 128 : index
    %15 = vector.load %arg5[%c0_8, %c128] : memref<1x5760xf32, #tpu.memory_space<vmem>>, vector<1x256xf32>
    %16 = arith.truncf %13 : vector<64x128xf32> to vector<64x128xbf16>
    %cst_9 = arith.constant dense<0.000000e+00> : vector<64x256xf32>
    %17 = tpu.matmul %16, %14, %cst_9 {dimension_numbers = #tpu.dot_dimension_numbers<[1], [0], [0], [1], [0, 0, 1, 1], [], []>} : vector<64x128xbf16>, vector<128x256xbf16>, vector<64x256xf32> -> vector<64x256xf32>
    %18 = vector.broadcast %15 : vector<1x256xf32> to vector<64x256xf32>
    %19 = arith.addf %17, %18 : vector<64x256xf32>
    %c0_10 = arith.constant 0 : index
    %c384 = arith.constant 384 : index
    %20 = vector.load %arg5[%c0_10, %c384] : memref<1x5760xf32, #tpu.memory_space<vmem>>, vector<1x256xf32>
    %c0_11 = arith.constant 0 : index
    %c640 = arith.constant 640 : index
    %21 = vector.load %arg5[%c0_11, %c640] : memref<1x5760xf32, #tpu.memory_space<vmem>>, vector<1x256xf32>
    %cst_12 = arith.constant dense<0.000000e+00> : vector<256xf32>
    %22 = vector.multi_reduction <add>, %19, %cst_12 [0] : vector<64x256xf32> to vector<256xf32>
    %23 = vector.shape_cast %22 : vector<256xf32> to vector<1x256xf32>
    %cst_13 = arith.constant 6.400000e+01 : f32
    %24 = vector.broadcast %cst_13 : f32 to vector<1x256xf32>
    %25 = arith.divf %23, %24 : vector<1x256xf32>
    %26 = arith.mulf %19, %19 : vector<64x256xf32>
    %cst_14 = arith.constant dense<0.000000e+00> : vector<256xf32>
    %27 = vector.multi_reduction <add>, %26, %cst_14 [0] : vector<64x256xf32> to vector<256xf32>
    %28 = vector.shape_cast %27 : vector<256xf32> to vector<1x256xf32>
    %cst_15 = arith.constant 6.400000e+01 : f32
    %29 = vector.broadcast %cst_15 : f32 to vector<1x256xf32>
    %30 = arith.divf %28, %29 : vector<1x256xf32>
    %31 = arith.mulf %25, %25 : vector<1x256xf32>
    %32 = arith.subf %30, %31 : vector<1x256xf32>
    %cst_16 = arith.constant 8.000000e-01 : f32
    %33 = vector.broadcast %cst_16 : f32 to vector<1x256xf32>
    %34 = arith.addf %32, %33 : vector<1x256xf32>
    %35 = math.rsqrt %34 : vector<1x256xf32>
    %36 = arith.mulf %35, %20 : vector<1x256xf32>
    %37 = arith.mulf %25, %36 : vector<1x256xf32>
    %38 = arith.subf %21, %37 : vector<1x256xf32>
    %39 = vector.broadcast %36 : vector<1x256xf32> to vector<64x256xf32>
    %40 = arith.mulf %19, %39 : vector<64x256xf32>
    %41 = vector.broadcast %38 : vector<1x256xf32> to vector<64x256xf32>
    %42 = arith.addf %40, %41 : vector<64x256xf32>
    %cst_17 = arith.constant 2.000000e-01 : f32
    %43 = vector.broadcast %cst_17 : f32 to vector<64x256xf32>
    %44 = arith.mulf %43, %42 : vector<64x256xf32>
    %45 = arith.maximumf %42, %44 : vector<64x256xf32>
    %c0_18 = arith.constant 0 : index
    %c0_19 = arith.constant 0 : index
    %46 = vector.load %arg4[%c0_18, %c0_19] : memref<256x512xbf16, #tpu.memory_space<vmem>>, vector<256x512xbf16>
    %c0_20 = arith.constant 0 : index
    %c896 = arith.constant 896 : index
    %47 = vector.load %arg5[%c0_20, %c896] : memref<1x5760xf32, #tpu.memory_space<vmem>>, vector<1x512xf32>
    %48 = arith.truncf %45 : vector<64x256xf32> to vector<64x256xbf16>
    %cst_21 = arith.constant dense<0.000000e+00> : vector<64x512xf32>
    %49 = tpu.matmul %48, %46, %cst_21 {dimension_numbers = #tpu.dot_dimension_numbers<[1], [0], [0], [1], [0, 0, 1, 1], [], []>} : vector<64x256xbf16>, vector<256x512xbf16>, vector<64x512xf32> -> vector<64x512xf32>
    %50 = vector.broadcast %47 : vector<1x512xf32> to vector<64x512xf32>
    %51 = arith.addf %49, %50 : vector<64x512xf32>
    %c0_22 = arith.constant 0 : index
    %c1408 = arith.constant 1408 : index
    %52 = vector.load %arg5[%c0_22, %c1408] : memref<1x5760xf32, #tpu.memory_space<vmem>>, vector<1x512xf32>
    %c0_23 = arith.constant 0 : index
    %c1920 = arith.constant 1920 : index
    %53 = vector.load %arg5[%c0_23, %c1920] : memref<1x5760xf32, #tpu.memory_space<vmem>>, vector<1x512xf32>
    %cst_24 = arith.constant dense<0.000000e+00> : vector<512xf32>
    %54 = vector.multi_reduction <add>, %51, %cst_24 [0] : vector<64x512xf32> to vector<512xf32>
    %55 = vector.shape_cast %54 : vector<512xf32> to vector<1x512xf32>
    %cst_25 = arith.constant 6.400000e+01 : f32
    %56 = vector.broadcast %cst_25 : f32 to vector<1x512xf32>
    %57 = arith.divf %55, %56 : vector<1x512xf32>
    %58 = arith.mulf %51, %51 : vector<64x512xf32>
    %cst_26 = arith.constant dense<0.000000e+00> : vector<512xf32>
    %59 = vector.multi_reduction <add>, %58, %cst_26 [0] : vector<64x512xf32> to vector<512xf32>
    %60 = vector.shape_cast %59 : vector<512xf32> to vector<1x512xf32>
    %cst_27 = arith.constant 6.400000e+01 : f32
    %61 = vector.broadcast %cst_27 : f32 to vector<1x512xf32>
    %62 = arith.divf %60, %61 : vector<1x512xf32>
    %63 = arith.mulf %57, %57 : vector<1x512xf32>
    %64 = arith.subf %62, %63 : vector<1x512xf32>
    %cst_28 = arith.constant 8.000000e-01 : f32
    %65 = vector.broadcast %cst_28 : f32 to vector<1x512xf32>
    %66 = arith.addf %64, %65 : vector<1x512xf32>
    %67 = math.rsqrt %66 : vector<1x512xf32>
    %68 = arith.mulf %67, %52 : vector<1x512xf32>
    %69 = arith.mulf %57, %68 : vector<1x512xf32>
    %70 = arith.subf %53, %69 : vector<1x512xf32>
    %71 = vector.broadcast %68 : vector<1x512xf32> to vector<64x512xf32>
    %72 = arith.mulf %51, %71 : vector<64x512xf32>
    %73 = vector.broadcast %70 : vector<1x512xf32> to vector<64x512xf32>
    %74 = arith.addf %72, %73 : vector<64x512xf32>
    %cst_29 = arith.constant 2.000000e-01 : f32
    %75 = vector.broadcast %cst_29 : f32 to vector<64x512xf32>
    %76 = arith.mulf %75, %74 : vector<64x512xf32>
    %77 = arith.maximumf %74, %76 : vector<64x512xf32>
    %c0_i32_30 = arith.constant 0 : i32
    %78 = tpu.memref_slice %arg11[%c0_i32_30] : memref<2x!tpu.dma_semaphore, #tpu.memory_space<semaphore_mem>> -> memref<1x!tpu.dma_semaphore, #tpu.memory_space<semaphore_mem>>
    %79 = tpu.memref_squeeze %78 : memref<1x!tpu.dma_semaphore, #tpu.memory_space<semaphore_mem>> -> memref<!tpu.dma_semaphore, #tpu.memory_space<semaphore_mem>>
    tpu.wait_dma2 semaphore(%79 : memref<!tpu.dma_semaphore, #tpu.memory_space<semaphore_mem>>) src(%arg6 : memref<512x1024xbf16, #tpu.memory_space<any>>) dst(%arg9 : memref<512x1024xbf16, #tpu.memory_space<vmem>>)
    %c0_31 = arith.constant 0 : index
    %c0_32 = arith.constant 0 : index
    %80 = vector.load %arg9[%c0_31, %c0_32] : memref<512x1024xbf16, #tpu.memory_space<vmem>>, vector<512x1024xbf16>
    %c0_33 = arith.constant 0 : index
    %c2432 = arith.constant 2432 : index
    %81 = vector.load %arg5[%c0_33, %c2432] : memref<1x5760xf32, #tpu.memory_space<vmem>>, vector<1x1024xf32>
    %82 = arith.truncf %77 : vector<64x512xf32> to vector<64x512xbf16>
    %cst_34 = arith.constant dense<0.000000e+00> : vector<64x1024xf32>
    %83 = tpu.matmul %82, %80, %cst_34 {dimension_numbers = #tpu.dot_dimension_numbers<[1], [0], [0], [1], [0, 0, 1, 1], [], []>} : vector<64x512xbf16>, vector<512x1024xbf16>, vector<64x1024xf32> -> vector<64x1024xf32>
    %84 = vector.broadcast %81 : vector<1x1024xf32> to vector<64x1024xf32>
    %85 = arith.addf %83, %84 : vector<64x1024xf32>
    %c0_35 = arith.constant 0 : index
    %c3456 = arith.constant 3456 : index
    %86 = vector.load %arg5[%c0_35, %c3456] : memref<1x5760xf32, #tpu.memory_space<vmem>>, vector<1x1024xf32>
    %c0_36 = arith.constant 0 : index
    %c4480 = arith.constant 4480 : index
    %87 = vector.load %arg5[%c0_36, %c4480] : memref<1x5760xf32, #tpu.memory_space<vmem>>, vector<1x1024xf32>
    %cst_37 = arith.constant dense<0.000000e+00> : vector<1024xf32>
    %88 = vector.multi_reduction <add>, %85, %cst_37 [0] : vector<64x1024xf32> to vector<1024xf32>
    %89 = vector.shape_cast %88 : vector<1024xf32> to vector<1x1024xf32>
    %cst_38 = arith.constant 6.400000e+01 : f32
    %90 = vector.broadcast %cst_38 : f32 to vector<1x1024xf32>
    %91 = arith.divf %89, %90 : vector<1x1024xf32>
    %92 = arith.mulf %85, %85 : vector<64x1024xf32>
    %cst_39 = arith.constant dense<0.000000e+00> : vector<1024xf32>
    %93 = vector.multi_reduction <add>, %92, %cst_39 [0] : vector<64x1024xf32> to vector<1024xf32>
    %94 = vector.shape_cast %93 : vector<1024xf32> to vector<1x1024xf32>
    %cst_40 = arith.constant 6.400000e+01 : f32
    %95 = vector.broadcast %cst_40 : f32 to vector<1x1024xf32>
    %96 = arith.divf %94, %95 : vector<1x1024xf32>
    %97 = arith.mulf %91, %91 : vector<1x1024xf32>
    %98 = arith.subf %96, %97 : vector<1x1024xf32>
    %cst_41 = arith.constant 8.000000e-01 : f32
    %99 = vector.broadcast %cst_41 : f32 to vector<1x1024xf32>
    %100 = arith.addf %98, %99 : vector<1x1024xf32>
    %101 = math.rsqrt %100 : vector<1x1024xf32>
    %102 = arith.mulf %101, %86 : vector<1x1024xf32>
    %103 = arith.mulf %91, %102 : vector<1x1024xf32>
    %104 = arith.subf %87, %103 : vector<1x1024xf32>
    %105 = vector.broadcast %102 : vector<1x1024xf32> to vector<64x1024xf32>
    %106 = arith.mulf %85, %105 : vector<64x1024xf32>
    %107 = vector.broadcast %104 : vector<1x1024xf32> to vector<64x1024xf32>
    %108 = arith.addf %106, %107 : vector<64x1024xf32>
    %cst_42 = arith.constant 2.000000e-01 : f32
    %109 = vector.broadcast %cst_42 : f32 to vector<64x1024xf32>
    %110 = arith.mulf %109, %108 : vector<64x1024xf32>
    %111 = arith.maximumf %108, %110 : vector<64x1024xf32>
    %c1_i32_43 = arith.constant 1 : i32
    %112 = tpu.memref_slice %arg11[%c1_i32_43] : memref<2x!tpu.dma_semaphore, #tpu.memory_space<semaphore_mem>> -> memref<1x!tpu.dma_semaphore, #tpu.memory_space<semaphore_mem>>
    %113 = tpu.memref_squeeze %112 : memref<1x!tpu.dma_semaphore, #tpu.memory_space<semaphore_mem>> -> memref<!tpu.dma_semaphore, #tpu.memory_space<semaphore_mem>>
    tpu.wait_dma2 semaphore(%113 : memref<!tpu.dma_semaphore, #tpu.memory_space<semaphore_mem>>) src(%arg7 : memref<1024x256xbf16, #tpu.memory_space<any>>) dst(%arg10 : memref<1024x256xbf16, #tpu.memory_space<vmem>>)
    %c0_44 = arith.constant 0 : index
    %c0_45 = arith.constant 0 : index
    %114 = vector.load %arg10[%c0_44, %c0_45] : memref<1024x256xbf16, #tpu.memory_space<vmem>>, vector<1024x256xbf16>
    %c0_46 = arith.constant 0 : index
    %c5504 = arith.constant 5504 : index
    %115 = vector.load %arg5[%c0_46, %c5504] : memref<1x5760xf32, #tpu.memory_space<vmem>>, vector<1x256xf32>
    %116 = arith.truncf %111 : vector<64x1024xf32> to vector<64x1024xbf16>
    %cst_47 = arith.constant dense<0.000000e+00> : vector<64x256xf32>
    %117 = tpu.matmul %116, %114, %cst_47 {dimension_numbers = #tpu.dot_dimension_numbers<[1], [0], [0], [1], [0, 0, 1, 1], [], []>} : vector<64x1024xbf16>, vector<1024x256xbf16>, vector<64x256xf32> -> vector<64x256xf32>
    %118 = vector.broadcast %115 : vector<1x256xf32> to vector<64x256xf32>
    %119 = arith.addf %117, %118 : vector<64x256xf32>
    %120 = math.tanh %119 : vector<64x256xf32>
    %c0_48 = arith.constant 0 : index
    %c0_49 = arith.constant 0 : index
    %121 = vector.load %arg8[%c0_48, %c0_49] : memref<64x256xf32, #tpu.memory_space<vmem>>, vector<64x256xf32>
    tpu.vector_store %arg8[%c0_48, %c0_49], %120 {strides = array<i32>} : memref<64x256xf32, #tpu.memory_space<vmem>>, vector<64x256xf32>,
    return
  }
  func.func @transform_0(%arg0: i32) -> (i32, i32) {
    %c0_i32 = arith.constant 0 : i32
    %c0_i32_0 = arith.constant 0 : i32
    return %arg0, %c0_i32 : i32, i32
  }
  func.func @transform_1(%arg0: i32) -> (i32, i32) {
    %c0_i32 = arith.constant 0 : i32
    %c0_i32_0 = arith.constant 0 : i32
    %c0_i32_1 = arith.constant 0 : i32
    return %c0_i32, %c0_i32_0 : i32, i32
  }
  func.func @transform_2(%arg0: i32) -> (i32, i32) {
    %c0_i32 = arith.constant 0 : i32
    %c0_i32_0 = arith.constant 0 : i32
    %c0_i32_1 = arith.constant 0 : i32
    return %c0_i32, %c0_i32_0 : i32, i32
  }
  func.func @transform_3(%arg0: i32) -> (i32, i32) {
    %c0_i32 = arith.constant 0 : i32
    %c0_i32_0 = arith.constant 0 : i32
    %c0_i32_1 = arith.constant 0 : i32
    return %c0_i32, %c0_i32_0 : i32, i32
  }
  func.func @transform_4(%arg0: i32) -> (i32, i32) {
    %c0_i32 = arith.constant 0 : i32
    %c0_i32_0 = arith.constant 0 : i32
    %c0_i32_1 = arith.constant 0 : i32
    return %c0_i32, %c0_i32_0 : i32, i32
  }
  func.func @transform_7(%arg0: i32) -> (i32, i32) {
    %c0_i32 = arith.constant 0 : i32
    %c0_i32_0 = arith.constant 0 : i32
    return %arg0, %c0_i32 : i32, i32
  }
}

</mosaic_0001>

<llo_original>
// kernel: tpu_custom_call.1
$region0: #{tpu_custom_call.1}
  #allocation0 [shape = 'u32[]', space=smem, size = 0x4, offset = 0x4, fixed_abs, tag = 'smem constant byte address 0x4 - core index']
  #allocation1 [shape = 'u32[72,128]{1,0:T(1,128)}', space=vmem, size = 0x9000, scoped, tag = 'internal scratch']
  #allocation2 [shape = 'bf16[512,1024]{1,0:T(8,128)(2,1)}', space=vmem, size = 0x100000, scoped, tag = 'scratch operand']
  #allocation3 [shape = 'bf16[1024,256]{1,0:T(8,128)(2,1)}', space=vmem, size = 0x80000, scoped, tag = 'scratch operand']
  #allocation4 [shape = 's32[2]{0}', space=sflag, size = 0x8, scoped, tag = 'scratch operand']
  #allocation15 [shape = 's32[]', space=sflag, size = 0x4, offset = 0, fixed_abs, tag = 'sflag constant byte address 0x0 - dummy sync flag']
  #allocation16 [shape = 's32[]', space=sflag, size = 0x4, offset = 0, fixed_abs, tag = 'sflag constant byte address 0x0 - dummy sync flag']
  #allocation17 [shape = 'u32[]', space=smem, size = 0x4, offset = 0x44, fixed_abs, tag = 'smem constant byte address 0x44 - assertion arg 0']
  #allocation18 [shape = 'u32[]', space=smem, size = 0x4, offset = 0x48, fixed_abs, tag = 'smem constant byte address 0x48 - assertion arg 1']
  #allocation19 [shape = 's32[]', space=sflag, size = 0x4, offset = 0, fixed_abs, tag = 'sflag constant byte address 0x0 - dummy sync flag']
  #allocation20 [shape = 's32[]', space=sflag, size = 0x4, offset = 0, fixed_abs, tag = 'sflag constant byte address 0x0 - dummy sync flag']
  %s0 = inlined_call_operand.hbm [shape: f32[64,128], index: 0, kind: input, shape index: {}]
  %s1 = inlined_call_operand.hbm [shape: bf16[128,128], index: 1, kind: input, shape index: {}]
  %s2 = inlined_call_operand.hbm [shape: bf16[128,256], index: 2, kind: input, shape index: {}]
  %s3 = inlined_call_operand.hbm [shape: bf16[256,512], index: 3, kind: input, shape index: {}]
  %s4 = inlined_call_operand.hbm [shape: f32[1,5760], index: 4, kind: input, shape index: {}]
  %s5 = inlined_call_operand.hbm [shape: bf16[512,1024], index: 5, kind: input, shape index: {}]
  %s6 = inlined_call_operand.hbm [shape: bf16[1024,256], index: 6, kind: input, shape index: {}]
  %s7 = inlined_call_operand.hbm [shape: f32[64,256], index: 7, kind: output, shape index: {}]
  %s8 = sld [smem:[#allocation0]]
  $region58: #{tpu_custom_call.1} parent=0
    _
  %s10 = ssub.s32 1, %s8
  %s11 = scalar_select 0, %s10, %s8
  $region1: #{tpu_custom_call.1} parent=0
    #allocation5 [shape = 'u8[32768]{0}', space=vmem, size = 0x8000, scoped, tag = 'input window, operand 0, single buffered']
    #allocation6 [shape = 's32[1]{0}', space=sflag, size = 0x4, scoped, tag = 'scoped memory for tpu_custom_call.1']
    #allocation7 [shape = 's32[1]{0}', space=sflag, size = 0x4, scoped, tag = 'scoped memory for tpu_custom_call.1']
    #allocation8 [shape = 'u8[32768]{0}', space=vmem, size = 0x8000, scoped, tag = 'input window, operand 1, single buffered']
    #allocation9 [shape = 's32[1]{0}', space=sflag, size = 0x4, scoped, tag = 'scoped memory for tpu_custom_call.1']
    #allocation10 [shape = 'u8[65536]{0}', space=vmem, size = 0x10000, scoped, tag = 'input window, operand 2, single buffered']
    #allocation11 [shape = 'u8[262144]{0}', space=vmem, size = 0x40000, scoped, tag = 'input window, operand 3, single buffered']
    #allocation12 [shape = 's32[1]{0}', space=sflag, size = 0x4, scoped, tag = 'scoped memory for tpu_custom_call.1']
    #allocation13 [shape = 'u8[23040]{0}', space=vmem, size = 0x5c00, scoped, tag = 'input window, operand 4, single buffered']
    #allocation14 [shape = 'u8[65536]{0}', space=vmem, size = 0x10000, scoped, tag = 'output window, operand 0, single buffered']
    %12 = vsyncpa [#allocation6], 0
    %13 = vsyncpa [#allocation9], 0
    %14 = vsyncpa [#allocation12], 0
    %15 = vsyncpa [#allocation7], 0
    // Predicated region
    $region2: #{tpu_custom_call.1} parent=1 // pred_check
      _
    $region3: #{tpu_custom_call.1} parent=1 // pred_check_branch
      %17 = sbr.rel (0) target = $region5
    $region4: #{tpu_custom_call.1} parent=1 // pred_region
      %19 = vsyncadd [#allocation6], 0
      %s20 = sshll.u32 %s0, 4
      %s21 = int_to_ptr.hbm [resolvable:$true] %s20
      %s22 = sshll.u32 [#allocation5], 4
      %s23 = int_to_ptr.vmem [resolvable:$true] %s22
      %28 = dma.hbm_to_vmem [thread:$0]  %s21, 1024, %s23, [#allocation6], 128, 128, 8
    $region5: #{tpu_custom_call.1} parent=1 // pred_fallthru
      _
    // Predicated region
    $region6: #{tpu_custom_call.1} parent=1 // pred_check
      _
    $region7: #{tpu_custom_call.1} parent=1 // pred_check_branch
      %30 = sbr.rel (0) target = $region9
    $region8: #{tpu_custom_call.1} parent=1 // pred_region
      %32 = vsyncadd [#allocation9], 0
      %s33 = sshll.u32 %s1, 4
      %s34 = int_to_ptr.hbm [resolvable:$true] %s33
      %s35 = sshll.u32 [#allocation8], 4
      %s36 = int_to_ptr.vmem [resolvable:$true] %s35
      %41 = dma.hbm_to_vmem [thread:$0]  %s34, 1024, %s36, [#allocation9], 64, 64, 4
    $region9: #{tpu_custom_call.1} parent=1 // pred_fallthru
      _
    // Predicated region
    $region10: #{tpu_custom_call.1} parent=1 // pred_check
      _
    $region11: #{tpu_custom_call.1} parent=1 // pred_check_branch
      %43 = sbr.rel (0) target = $region13
    $region12: #{tpu_custom_call.1} parent=1 // pred_region
      %45 = vsyncadd [#allocation9], 0
      %s46 = sshll.u32 %s2, 4
      %s47 = int_to_ptr.hbm [resolvable:$true] %s46
      %s48 = sshll.u32 [#allocation10], 4
      %s49 = int_to_ptr.vmem [resolvable:$true] %s48
      %54 = dma.hbm_to_vmem [thread:$0]  %s47, 2048, %s49, [#allocation9], 128, 128, 8
    $region13: #{tpu_custom_call.1} parent=1 // pred_fallthru
      _
    // Predicated region
    $region14: #{tpu_custom_call.1} parent=1 // pred_check
      _
    $region15: #{tpu_custom_call.1} parent=1 // pred_check_branch
      %56 = sbr.rel (0) target = $region17
    $region16: #{tpu_custom_call.1} parent=1 // pred_region
      %58 = vsyncadd [#allocation12], 0
      %s59 = sshll.u32 %s3, 4
      %s60 = int_to_ptr.hbm [resolvable:$true] %s59
      %s61 = sshll.u32 [#allocation11], 4
      %s62 = int_to_ptr.vmem [resolvable:$true] %s61
      %67 = dma.hbm_to_vmem [thread:$0]  %s60, 8192, %s62, [#allocation12], 256, 256, 16
    $region17: #{tpu_custom_call.1} parent=1 // pred_fallthru
      _
    // Predicated region
    $region18: #{tpu_custom_call.1} parent=1 // pred_check
      _
    $region19: #{tpu_custom_call.1} parent=1 // pred_check_branch
      %69 = sbr.rel (0) target = $region21
    $region20: #{tpu_custom_call.1} parent=1 // pred_region
      %71 = vsyncadd [#allocation12], 0
      %s73 = sshll.u32 %s4, 4
      %s74 = int_to_ptr.hbm [resolvable:$true] %s73
      %s75 = sshll.u32 [#allocation13], 4
      %s76 = int_to_ptr.vmem [resolvable:$true] %s75
      %78 = dma.hbm_to_vmem [thread:$0]  %s74, 720, %s76, [#allocation12]
    $region21: #{tpu_custom_call.1} parent=1 // pred_fallthru
      _
    // Predicated region
    $region22: #{tpu_custom_call.1} parent=1 // pred_check
      _
    $region23: #{tpu_custom_call.1} parent=1 // pred_check_branch
      %80 = sbr.rel (0) target = $region25
    $region24: #{tpu_custom_call.1} parent=1 // pred_region
      %82 = dma.done [#allocation6], 1024
    $region25: #{tpu_custom_call.1} parent=1 // pred_fallthru
      _
    // Predicated region
    $region26: #{tpu_custom_call.1} parent=1 // pred_check
      _
    $region27: #{tpu_custom_call.1} parent=1 // pred_check_branch
      %84 = sbr.rel (0) target = $region29
    $region28: #{tpu_custom_call.1} parent=1 // pred_region
      %86 = dma.done [#allocation9], 1024
    $region29: #{tpu_custom_call.1} parent=1 // pred_fallthru
      _
    // Predicated region
    $region30: #{tpu_custom_call.1} parent=1 // pred_check
      _
    $region31: #{tpu_custom_call.1} parent=1 // pred_check_branch
      %88 = sbr.rel (0) target = $region33
    $region32: #{tpu_custom_call.1} parent=1 // pred_region
      %90 = dma.done [#allocation9], 2048
    $region33: #{tpu_custom_call.1} parent=1 // pred_fallthru
      _
    // Predicated region
    $region34: #{tpu_custom_call.1} parent=1 // pred_check
      _
    $region35: #{tpu_custom_call.1} parent=1 // pred_check_branch
      %92 = sbr.rel (0) target = $region37
    $region36: #{tpu_custom_call.1} parent=1 // pred_region
      %94 = dma.done [#allocation12], 8192
    $region37: #{tpu_custom_call.1} parent=1 // pred_fallthru
      _
    // Predicated region
    $region38: #{tpu_custom_call.1} parent=1 // pred_check
      _
    $region39: #{tpu_custom_call.1} parent=1 // pred_check_branch
      %96 = sbr.rel (0) target = $region41
    $region40: #{tpu_custom_call.1} parent=1 // pred_region
      %98 = dma.done [#allocation12], 720
    $region41: #{tpu_custom_call.1} parent=1 // pred_fallthru
      _
    // Predicated region
    $region42: #{tpu_custom_call.1} parent=1 // pred_check
      _
    $region43: #{tpu_custom_call.1} parent=1 // pred_check_branch
      %100 = sbr.rel target = $region45
    $region44: #{tpu_custom_call.1} parent=1 // pred_region
      %101 = sst [smem:[#allocation17]] [#allocation16]
      %102 = sst [smem:[#allocation18]] [#allocation15]
    $region45: #{tpu_custom_call.1} parent=1 // pred_fallthru
      _
    %104 = shalt.err (0)
    %s106 = sshll.u32 %s5, 4
    %s107 = int_to_ptr.hbm [resolvable:$true] %s106
    %s108 = sshll.u32 [#allocation2], 4
    %s109 = int_to_ptr.vmem [resolvable:$true] %s108
    %111 = dma.hbm_to_vmem [thread:$0]  %s107, 32768, %s109, [#allocation4]
    %s112 = scalar_lea.sflag [#allocation4], 1
    // Predicated region
    $region46: #{tpu_custom_call.1} parent=1 // pred_check
      _
    $region47: #{tpu_custom_call.1} parent=1 // pred_check_branch
      %114 = sbr.rel target = $region49
    $region48: #{tpu_custom_call.1} parent=1 // pred_region
      %115 = sst [smem:[#allocation17]] [#allocation20]
      %116 = sst [smem:[#allocation18]] [#allocation19]
    $region49: #{tpu_custom_call.1} parent=1 // pred_fallthru
      _
    %118 = shalt.err (0)
    %s120 = sshll.u32 %s6, 4
    %s121 = int_to_ptr.hbm [resolvable:$true] %s120
    %s122 = sshll.u32 [#allocation3], 4
    %s123 = int_to_ptr.vmem [resolvable:$true] %s122
    %125 = dma.hbm_to_vmem [thread:$0]  %s121, 16384, %s123, %s112
    %v126 = vld [vmem:[#allocation5] sm:$0xff]
    %v127 = vld [vmem:[#allocation5 + $0x8] sm:$0xff]
    %v128 = vld [vmem:[#allocation5 + $0x10] sm:$0xff]
    %v129 = vld [vmem:[#allocation5 + $0x18] sm:$0xff]
    %v130 = vld [vmem:[#allocation5 + $0x20] sm:$0xff]
    %v131 = vld [vmem:[#allocation5 + $0x28] sm:$0xff]
    %v132 = vld [vmem:[#allocation5 + $0x30] sm:$0xff]
    %v133 = vld [vmem:[#allocation5 + $0x38] sm:$0xff]
    %v134 = vld [vmem:[#allocation8] sm:$0xf]
    %v135 = vld [vmem:[#allocation8 + $0x4] sm:$0xf]
    %v136 = vld [vmem:[#allocation8 + $0x8] sm:$0xf]
    %v137 = vld [vmem:[#allocation8 + $0xc] sm:$0xf]
    %v138 = vld [vmem:[#allocation8 + $0x10] sm:$0xf]
    %v139 = vld [vmem:[#allocation8 + $0x14] sm:$0xf]
    %v140 = vld [vmem:[#allocation8 + $0x18] sm:$0xf]
    %v141 = vld [vmem:[#allocation8 + $0x1c] sm:$0xf]
    %v142 = vld [vmem:[#allocation8 + $0x20] sm:$0xf]
    %v143 = vld [vmem:[#allocation8 + $0x24] sm:$0xf]
    %v144 = vld [vmem:[#allocation8 + $0x28] sm:$0xf]
    %v145 = vld [vmem:[#allocation8 + $0x2c] sm:$0xf]
    %v146 = vld [vmem:[#allocation8 + $0x30] sm:$0xf]
    %v147 = vld [vmem:[#allocation8 + $0x34] sm:$0xf]
    %v148 = vld [vmem:[#allocation8 + $0x38] sm:$0xf]
    %v149 = vld [vmem:[#allocation8 + $0x3c] sm:$0xf]
    %v150 = vld [vmem:[#allocation13] sm:$0x1]
    %v151 = vpack.c.bf16 %v127, %v126
    %v152 = vpack.c.bf16 %v129, %v128
    %v153 = vpack.c.bf16 %v131, %v130
    %v154 = vpack.c.bf16 %v133, %v132
    %v156 = vperm.slane %v150, 0
    %v174 = vunpack.c.l.b16 %v134
    %v175 = vunpack.c.l.b16 %v135
    %v176 = vunpack.c.l.b16 %v136
    %v177 = vunpack.c.l.b16 %v137
    %v178 = vunpack.c.l.b16 %v138
    %v179 = vunpack.c.l.b16 %v139
    %v180 = vunpack.c.l.b16 %v140
    %v181 = vunpack.c.l.b16 %v141
    %v182 = vunpack.c.l.b16 %v142
    %v183 = vunpack.c.l.b16 %v143
    %v184 = vunpack.c.l.b16 %v144
    %v185 = vunpack.c.l.b16 %v145
    %v186 = vunpack.c.l.b16 %v146
    %v187 = vunpack.c.l.b16 %v147
    %v188 = vunpack.c.l.b16 %v148
    %v189 = vunpack.c.l.b16 %v149
    %v190 = vpack.c.b16 %v175, %v174
    %v191 = vpack.c.b16 %v177, %v176
    %v192 = vpack.c.b16 %v179, %v178
    %v193 = vpack.c.b16 %v181, %v180
    %v194 = vpack.c.b16 %v183, %v182
    %v195 = vpack.c.b16 %v185, %v184
    %v196 = vpack.c.b16 %v187, %v186
    %v197 = vpack.c.b16 %v189, %v188
    %206 = vmatpush.bf16.msra.mxu0 %v197
    %207 = vmatpush.bf16.msra.mxu0 %v196
    %208 = vmatpush.bf16.msra.mxu0 %v195
    %209 = vmatpush.bf16.msra.mxu0 %v194
    %210 = vmatpush.bf16.msra.mxu0 %v193
    %211 = vmatpush.bf16.msra.mxu0 %v192
    %212 = vmatpush.bf16.msra.mxu0 %v191
    %213 = vmatpush.bf16.msra.mxu0 %v190
    %214 = vmatmul.bf16.gmra.mxu0 %v151
    %v215 = vpop.f32.mrf.mxu0
    %v216 = vadd.f32 %v156, %v215
    %v217 = vpop.f32.mrf.mxu0
    %v218 = vadd.f32 %v156, %v217
    %219 = vmatmul.bf16.gmra.mxu0 %v152
    %v220 = vpop.f32.mrf.mxu0
    %v221 = vadd.f32 %v156, %v220
    %v222 = vpop.f32.mrf.mxu0
    %v223 = vadd.f32 %v156, %v222
    %224 = vmatmul.bf16.gmra.mxu0 %v153
    %v225 = vpop.f32.mrf.mxu0
    %v226 = vadd.f32 %v156, %v225
    %v227 = vpop.f32.mrf.mxu0
    %v228 = vadd.f32 %v156, %v227
    %229 = vmatmul.bf16.gmra.mxu0 %v154
    %v230 = vpop.f32.mrf.mxu0
    %v231 = vadd.f32 %v156, %v230
    %v232 = vpop.f32.mrf.mxu0
    %v233 = vadd.f32 %v156, %v232
    %234 = vdwg.mxu0
    %v235 = vmul.f32 %v216, 0.2
    %v236 = vmul.f32 %v218, 0.2
    %v237 = vmul.f32 %v221, 0.2
    %v238 = vmul.f32 %v223, 0.2
    %v239 = vmul.f32 %v226, 0.2
    %v240 = vmul.f32 %v228, 0.2
    %v241 = vmul.f32 %v231, 0.2
    %v242 = vmul.f32 %v233, 0.2
    %v243 = vmax.f32 %v216, %v235
    %v244 = vmax.f32 %v218, %v236
    %v245 = vmax.f32 %v221, %v237
    %v246 = vmax.f32 %v223, %v238
    %v247 = vmax.f32 %v226, %v239
    %v248 = vmax.f32 %v228, %v240
    %v249 = vmax.f32 %v231, %v241
    %v250 = vmax.f32 %v233, %v242
    %v251 = vld [vmem:[#allocation10] sm:$0xff]
    %v252 = vld [vmem:[#allocation10 + $0x8] sm:$0xff]
    %v253 = vld [vmem:[#allocation10 + $0x10] sm:$0xff]
    %v254 = vld [vmem:[#allocation10 + $0x18] sm:$0xff]
    %v255 = vld [vmem:[#allocation10 + $0x20] sm:$0xff]
    %v256 = vld [vmem:[#allocation10 + $0x28] sm:$0xff]
    %v257 = vld [vmem:[#allocation10 + $0x30] sm:$0xff]
    %v258 = vld [vmem:[#allocation10 + $0x38] sm:$0xff]
    %v259 = vld [vmem:[#allocation10 + $0x40] sm:$0xff]
    %v260 = vld [vmem:[#allocation10 + $0x48] sm:$0xff]
    %v261 = vld [vmem:[#allocation10 + $0x50] sm:$0xff]
    %v262 = vld [vmem:[#allocation10 + $0x58] sm:$0xff]
    %v263 = vld [vmem:[#allocation10 + $0x60] sm:$0xff]
    %v264 = vld [vmem:[#allocation10 + $0x68] sm:$0xff]
    %v265 = vld [vmem:[#allocation10 + $0x70] sm:$0xff]
    %v266 = vld [vmem:[#allocation10 + $0x78] sm:$0xff]
    %v267 = vld [vmem:[#allocation13 + $0x1] sm:$0x3]
    %v268 = vpack.c.bf16 %v244, %v243
    %v269 = vpack.c.bf16 %v246, %v245
    %v270 = vpack.c.bf16 %v248, %v247
    %v271 = vpack.c.bf16 %v250, %v249
    %v273 = vperm.slane %v267, 0
    %v274 = vperm.slane %v267, 1
    %v293 = vunpack.c.l.b16 %v251
    %v294 = vunpack.c.h.b16 %v251
    %v295 = vunpack.c.l.b16 %v252
    %v296 = vunpack.c.h.b16 %v252
    %v297 = vunpack.c.l.b16 %v253
    %v298 = vunpack.c.h.b16 %v253
    %v299 = vunpack.c.l.b16 %v254
    %v300 = vunpack.c.h.b16 %v254
    %v301 = vunpack.c.l.b16 %v255
    %v302 = vunpack.c.h.b16 %v255
    %v303 = vunpack.c.l.b16 %v256
    %v304 = vunpack.c.h.b16 %v256
    %v305 = vunpack.c.l.b16 %v257
    %v306 = vunpack.c.h.b16 %v257
    %v307 = vunpack.c.l.b16 %v258
    %v308 = vunpack.c.h.b16 %v258
    %v309 = vunpack.c.l.b16 %v259
    %v310 = vunpack.c.h.b16 %v259
    %v311 = vunpack.c.l.b16 %v260
    %v312 = vunpack.c.h.b16 %v260
    %v313 = vunpack.c.l.b16 %v261
    %v314 = vunpack.c.h.b16 %v261
    %v315 = vunpack.c.l.b16 %v262
    %v316 = vunpack.c.h.b16 %v262
    %v317 = vunpack.c.l.b16 %v263
    %v318 = vunpack.c.h.b16 %v263
    %v319 = vunpack.c.l.b16 %v264
    %v320 = vunpack.c.h.b16 %v264
    %v321 = vunpack.c.l.b16 %v265
    %v322 = vunpack.c.h.b16 %v265
    %v323 = vunpack.c.l.b16 %v266
    %v324 = vunpack.c.h.b16 %v266
    %v325 = vpack.c.b16 %v295, %v293
    %v326 = vpack.c.b16 %v296, %v294
    %v327 = vpack.c.b16 %v299, %v297
    %v328 = vpack.c.b16 %v300, %v298
    %v329 = vpack.c.b16 %v303, %v301
    %v330 = vpack.c.b16 %v304, %v302
    %v331 = vpack.c.b16 %v307, %v305
    %v332 = vpack.c.b16 %v308, %v306
    %v333 = vpack.c.b16 %v311, %v309
    %v334 = vpack.c.b16 %v312, %v310
    %v335 = vpack.c.b16 %v315, %v313
    %v336 = vpack.c.b16 %v316, %v314
    %v337 = vpack.c.b16 %v319, %v317
    %v338 = vpack.c.b16 %v320, %v318
    %v339 = vpack.c.b16 %v323, %v321
    %v340 = vpack.c.b16 %v324, %v322
    %357 = vmatpush.bf16.msra.mxu0 %v339
    %358 = vmatpush.bf16.msra.mxu0 %v337
    %359 = vmatpush.bf16.msra.mxu0 %v335
    %360 = vmatpush.bf16.msra.mxu0 %v333
    %361 = vmatpush.bf16.msra.mxu0 %v331
    %362 = vmatpush.bf16.msra.mxu0 %v329
    %363 = vmatpush.bf16.msra.mxu0 %v327
    %364 = vmatpush.bf16.msra.mxu0 %v325
    %365 = vmatmul.bf16.gmra.mxu0 %v268
    %v366 = vpop.f32.mrf.mxu0
    %v367 = vadd.f32 %v273, %v366
    %v368 = vpop.f32.mrf.mxu0
    %v369 = vadd.f32 %v273, %v368
    %370 = vmatmul.bf16.gmra.mxu0 %v269
    %v371 = vpop.f32.mrf.mxu0
    %v372 = vadd.f32 %v273, %v371
    %v373 = vpop.f32.mrf.mxu0
    %v374 = vadd.f32 %v273, %v373
    %375 = vmatmul.bf16.gmra.mxu0 %v270
    %v376 = vpop.f32.mrf.mxu0
    %v377 = vadd.f32 %v273, %v376
    %v378 = vpop.f32.mrf.mxu0
    %v379 = vadd.f32 %v273, %v378
    %380 = vmatmul.bf16.gmra.mxu0 %v271
    %v381 = vpop.f32.mrf.mxu0
    %v382 = vadd.f32 %v273, %v381
    %v383 = vpop.f32.mrf.mxu0
    %v384 = vadd.f32 %v273, %v383
    %385 = vdwg.mxu0
    %386 = vmatpush.bf16.msra.mxu0 %v340
    %387 = vmatpush.bf16.msra.mxu0 %v338
    %388 = vmatpush.bf16.msra.mxu0 %v336
    %389 = vmatpush.bf16.msra.mxu0 %v334
    %390 = vmatpush.bf16.msra.mxu0 %v332
    %391 = vmatpush.bf16.msra.mxu0 %v330
    %392 = vmatpush.bf16.msra.mxu0 %v328
    %393 = vmatpush.bf16.msra.mxu0 %v326
    %394 = vmatmul.bf16.gmra.mxu0 %v268
    %v395 = vpop.f32.mrf.mxu0
    %v396 = vadd.f32 %v274, %v395
    %v397 = vpop.f32.mrf.mxu0
    %v398 = vadd.f32 %v274, %v397
    %399 = vmatmul.bf16.gmra.mxu0 %v269
    %v400 = vpop.f32.mrf.mxu0
    %v401 = vadd.f32 %v274, %v400
    %v402 = vpop.f32.mrf.mxu0
    %v403 = vadd.f32 %v274, %v402
    %404 = vmatmul.bf16.gmra.mxu0 %v270
    %v405 = vpop.f32.mrf.mxu0
    %v406 = vadd.f32 %v274, %v405
    %v407 = vpop.f32.mrf.mxu0
    %v408 = vadd.f32 %v274, %v407
    %409 = vmatmul.bf16.gmra.mxu0 %v271
    %v410 = vpop.f32.mrf.mxu0
    %v411 = vadd.f32 %v274, %v410
    %v412 = vpop.f32.mrf.mxu0
    %v413 = vadd.f32 %v274, %v412
    %414 = vdwg.mxu0
    %v415 = vld [vmem:[#allocation13 + $0x3] sm:$0x3]
    %v416 = vld [vmem:[#allocation13 + $0x5] sm:$0x3]
    %v417 = vadd.f32 %v367, %v369
    %v418 = vadd.f32 %v417, %v372
    %v419 = vadd.f32 %v418, %v374
    %v420 = vadd.f32 %v419, %v377
    %v421 = vadd.f32 %v420, %v379
    %v422 = vadd.f32 %v421, %v382
    %v423 = vadd.f32 %v422, %v384
    %v424 = vrot.slane %v423, 4
    %v425 = vadd.f32 %v423, %v424
    %v426 = vrot.slane %v425, 2
    %v427 = vadd.f32 %v425, %v426
    %v428 = vrot.slane %v427, 1
    %v429 = vadd.f32 %v427, %v428
    %v430 = vadd.f32 %v396, %v398
    %v431 = vadd.f32 %v430, %v401
    %v432 = vadd.f32 %v431, %v403
    %v433 = vadd.f32 %v432, %v406
    %v434 = vadd.f32 %v433, %v408
    %v435 = vadd.f32 %v434, %v411
    %v436 = vadd.f32 %v435, %v413
    %v437 = vrot.slane %v436, 4
    %v438 = vadd.f32 %v436, %v437
    %v439 = vrot.slane %v438, 2
    %v440 = vadd.f32 %v438, %v439
    %v441 = vrot.slane %v440, 1
    %v442 = vadd.f32 %v440, %v441
    %v443 = vrcp.pop 64.0
    %v444 = vmul.f32 64.0, %v443
    %v445 = vsub.f32 1.0, %v444
    %v446 = vmul.f32 %v443, %v445
    %v447 = vadd.f32 %v443, %v446
    %vm448 = vweird.f32 %v443
    %v449 = vsel %vm448, %v443, %v447
    %v450 = vmul.f32 %v429, %v449
    %v451 = vmul.f32 %v442, %v449
    %v452 = vmul.f32 %v367, %v367
    %v453 = vmul.f32 %v396, %v396
    %v454 = vmul.f32 %v369, %v369
    %v455 = vmul.f32 %v398, %v398
    %v456 = vmul.f32 %v372, %v372
    %v457 = vmul.f32 %v401, %v401
    %v458 = vmul.f32 %v374, %v374
    %v459 = vmul.f32 %v403, %v403
    %v460 = vmul.f32 %v377, %v377
    %v461 = vmul.f32 %v406, %v406
    %v462 = vmul.f32 %v379, %v379
    %v463 = vmul.f32 %v408, %v408
    %v464 = vmul.f32 %v382, %v382
    %v465 = vmul.f32 %v411, %v411
    %v466 = vmul.f32 %v384, %v384
    %v467 = vmul.f32 %v413, %v413
    %v468 = vadd.f32 %v452, %v454
    %v469 = vadd.f32 %v468, %v456
    %v470 = vadd.f32 %v469, %v458
    %v471 = vadd.f32 %v470, %v460
    %v472 = vadd.f32 %v471, %v462
    %v473 = vadd.f32 %v472, %v464
    %v474 = vadd.f32 %v473, %v466
    %v475 = vrot.slane %v474, 4
    %v476 = vadd.f32 %v474, %v475
    %v477 = vrot.slane %v476, 2
    %v478 = vadd.f32 %v476, %v477
    %v479 = vrot.slane %v478, 1
    %v480 = vadd.f32 %v478, %v479
    %v481 = vadd.f32 %v453, %v455
    %v482 = vadd.f32 %v481, %v457
    %v483 = vadd.f32 %v482, %v459
    %v484 = vadd.f32 %v483, %v461
    %v485 = vadd.f32 %v484, %v463
    %v486 = vadd.f32 %v485, %v465
    %v487 = vadd.f32 %v486, %v467
    %v488 = vrot.slane %v487, 4
    %v489 = vadd.f32 %v487, %v488
    %v490 = vrot.slane %v489, 2
    %v491 = vadd.f32 %v489, %v490
    %v492 = vrot.slane %v491, 1
    %v493 = vadd.f32 %v491, %v492
    %v494 = vmul.f32 %v480, %v449
    %v495 = vmul.f32 %v493, %v449
    %v496 = vmul.f32 %v450, %v450
    %v497 = vmul.f32 %v451, %v451
    %v498 = vsub.f32 %v494, %v496
    %v499 = vsub.f32 %v495, %v497
    %v500 = vadd.f32 %v498, 0.8
    %v501 = vadd.f32 %v499, 0.8
    %v502 = vrsqrt.pop %v500
    %v503 = vmul.f32 %v502, %v500
    %v504 = vmul.f32 %v503, %v502
    %v505 = vmul.f32 0.5, %v504
    %v506 = vsub.f32 1.5, %v505
    %v507 = vmul.f32 %v502, %v506
    %vm508 = vweird.f32 %v500
    %vm509 = vweird.f32 %v502
    %vm510 = vmor %vm508, %vm509
    %v511 = vsel %vm510, %v502, %v507
    %v512 = vrsqrt.pop %v501
    %v513 = vmul.f32 %v512, %v501
    %v514 = vmul.f32 %v513, %v512
    %v515 = vmul.f32 0.5, %v514
    %v516 = vsub.f32 1.5, %v515
    %v517 = vmul.f32 %v512, %v516
    %vm518 = vweird.f32 %v501
    %vm519 = vweird.f32 %v512
    %vm520 = vmor %vm518, %vm519
    %v521 = vsel %vm520, %v512, %v517
    %v523 = vperm.slane %v415, 0
    %v524 = vperm.slane %v415, 1
    %v527 = vmul.f32 %v511, %v523
    %v528 = vmul.f32 %v521, %v524
    %v529 = vmul.f32 %v450, %v527
    %v530 = vmul.f32 %v451, %v528
    %v533 = vrot.slane %v530, 7
    %vm534 = vcmask 1040384
    %v535 = vsel %vm534, %v529, %v533
    %v537 = vsub.f32 %v416, %v535
    %v538 = vperm.slane %v527, 0
    %v539 = vperm.slane %v528, 0
    %v540 = vmul.f32 %v367, %v538
    %v541 = vmul.f32 %v396, %v539
    %v542 = vmul.f32 %v369, %v538
    %v543 = vmul.f32 %v398, %v539
    %v544 = vmul.f32 %v372, %v538
    %v545 = vmul.f32 %v401, %v539
    %v546 = vmul.f32 %v374, %v538
    %v547 = vmul.f32 %v403, %v539
    %v548 = vmul.f32 %v377, %v538
    %v549 = vmul.f32 %v406, %v539
    %v550 = vmul.f32 %v379, %v538
    %v551 = vmul.f32 %v408, %v539
    %v552 = vmul.f32 %v382, %v538
    %v553 = vmul.f32 %v411, %v539
    %v554 = vmul.f32 %v384, %v538
    %v555 = vmul.f32 %v413, %v539
    %v557 = vperm.slane %v537, 0
    %v558 = vperm.slane %v537, 1
    %v561 = vadd.f32 %v540, %v557
    %v562 = vadd.f32 %v541, %v558
    %v563 = vadd.f32 %v542, %v557
    %v564 = vadd.f32 %v543, %v558
    %v565 = vadd.f32 %v544, %v557
    %v566 = vadd.f32 %v545, %v558
    %v567 = vadd.f32 %v546, %v557
    %v568 = vadd.f32 %v547, %v558
    %v569 = vadd.f32 %v548, %v557
    %v570 = vadd.f32 %v549, %v558
    %v571 = vadd.f32 %v550, %v557
    %v572 = vadd.f32 %v551, %v558
    %v573 = vadd.f32 %v552, %v557
    %v574 = vadd.f32 %v553, %v558
    %v575 = vadd.f32 %v554, %v557
    %v576 = vadd.f32 %v555, %v558
    %v577 = vmul.f32 %v561, 0.2
    %v578 = vmul.f32 %v562, 0.2
    %v579 = vmul.f32 %v563, 0.2
    %v580 = vmul.f32 %v564, 0.2
    %v581 = vmul.f32 %v565, 0.2
    %v582 = vmul.f32 %v566, 0.2
    %v583 = vmul.f32 %v567, 0.2
    %v584 = vmul.f32 %v568, 0.2
    %v585 = vmul.f32 %v569, 0.2
    %v586 = vmul.f32 %v570, 0.2
    %v587 = vmul.f32 %v571, 0.2
    %v588 = vmul.f32 %v572, 0.2
    %v589 = vmul.f32 %v573, 0.2
    %v590 = vmul.f32 %v574, 0.2
    %v591 = vmul.f32 %v575, 0.2
    %v592 = vmul.f32 %v576, 0.2
    %v593 = vmax.f32 %v561, %v577
    %v594 = vmax.f32 %v562, %v578
    %v595 = vmax.f32 %v563, %v579
    %v596 = vmax.f32 %v564, %v580
    %v597 = vmax.f32 %v565, %v581
    %v598 = vmax.f32 %v566, %v582
    %v599 = vmax.f32 %v567, %v583
    %v600 = vmax.f32 %v568, %v584
    %v601 = vmax.f32 %v569, %v585
    %v602 = vmax.f32 %v570, %v586
    %v603 = vmax.f32 %v571, %v587
    %v604 = vmax.f32 %v572, %v588
    %v605 = vmax.f32 %v573, %v589
    %v606 = vmax.f32 %v574, %v590
    %v607 = vmax.f32 %v575, %v591
    %v608 = vmax.f32 %v576, %v592
    %v609 = vld [vmem:[#allocation11] sm:$0xff]
    %v610 = vld [vmem:[#allocation11 + $0x8] sm:$0xff]
    %v611 = vld [vmem:[#allocation11 + $0x10] sm:$0xff]
    %v612 = vld [vmem:[#allocation11 + $0x18] sm:$0xff]
    %v613 = vld [vmem:[#allocation11 + $0x20] sm:$0xff]
    %v614 = vld [vmem:[#allocation11 + $0x28] sm:$0xff]
    %v615 = vld [vmem:[#allocation11 + $0x30] sm:$0xff]
    %v616 = vld [vmem:[#allocation11 + $0x38] sm:$0xff]
    %v617 = vld [vmem:[#allocation11 + $0x40] sm:$0xff]
    %v618 = vld [vmem:[#allocation11 + $0x48] sm:$0xff]
    %v619 = vld [vmem:[#allocation11 + $0x50] sm:$0xff]
    %v620 = vld [vmem:[#allocation11 + $0x58] sm:$0xff]
    %v621 = vld [vmem:[#allocation11 + $0x60] sm:$0xff]
    %v622 = vld [vmem:[#allocation11 + $0x68] sm:$0xff]
    %v623 = vld [vmem:[#allocation11 + $0x70] sm:$0xff]
    %v624 = vld [vmem:[#allocation11 + $0x78] sm:$0xff]
    %v625 = vld [vmem:[#allocation11 + $0x80] sm:$0xff]
    %v626 = vld [vmem:[#allocation11 + $0x88] sm:$0xff]
    %v627 = vld [vmem:[#allocation11 + $0x90] sm:$0xff]
    %v628 = vld [vmem:[#allocation11 + $0x98] sm:$0xff]
    %v629 = vld [vmem:[#allocation11 + $0xa0] sm:$0xff]
    %v630 = vld [vmem:[#allocation11 + $0xa8] sm:$0xff]
    %v631 = vld [vmem:[#allocation11 + $0xb0] sm:$0xff]
    %v632 = vld [vmem:[#allocation11 + $0xb8] sm:$0xff]
    %v633 = vld [vmem:[#allocation11 + $0xc0] sm:$0xff]
    %v634 = vld [vmem:[#allocation11 + $0xc8] sm:$0xff]
    %v635 = vld [vmem:[#allocation11 + $0xd0] sm:$0xff]
    %v636 = vld [vmem:[#allocation11 + $0xd8] sm:$0xff]
    %v637 = vld [vmem:[#allocation11 + $0xe0] sm:$0xff]
    %v638 = vld [vmem:[#allocation11 + $0xe8] sm:$0xff]
    %v639 = vld [vmem:[#allocation11 + $0xf0] sm:$0xff]
    %v640 = vld [vmem:[#allocation11 + $0xf8] sm:$0xff]
    %v641 = vld [vmem:[#allocation11 + $0x100] sm:$0xff]
    %v642 = vld [vmem:[#allocation11 + $0x108] sm:$0xff]
    %v643 = vld [vmem:[#allocation11 + $0x110] sm:$0xff]
    %v644 = vld [vmem:[#allocation11 + $0x118] sm:$0xff]
    %v645 = vld [vmem:[#allocation11 + $0x120] sm:$0xff]
    %v646 = vld [vmem:[#allocation11 + $0x128] sm:$0xff]
    %v647 = vld [vmem:[#allocation11 + $0x130] sm:$0xff]
    %v648 = vld [vmem:[#allocation11 + $0x138] sm:$0xff]
    %v649 = vld [vmem:[#allocation11 + $0x140] sm:$0xff]
    %v650 = vld [vmem:[#allocation11 + $0x148] sm:$0xff]
    %v651 = vld [vmem:[#allocation11 + $0x150] sm:$0xff]
    %v652 = vld [vmem:[#allocation11 + $0x158] sm:$0xff]
    %v653 = vld [vmem:[#allocation11 + $0x160] sm:$0xff]
    %v654 = vld [vmem:[#allocation11 + $0x168] sm:$0xff]
    %v655 = vld [vmem:[#allocation11 + $0x170] sm:$0xff]
    %v656 = vld [vmem:[#allocation11 + $0x178] sm:$0xff]
    %v657 = vld [vmem:[#allocation11 + $0x180] sm:$0xff]
    %v658 = vld [vmem:[#allocation11 + $0x188] sm:$0xff]
    %v659 = vld [vmem:[#allocation11 + $0x190] sm:$0xff]
    %v660 = vld [vmem:[#allocation11 + $0x198] sm:$0xff]
    %v661 = vld [vmem:[#allocation11 + $0x1a0] sm:$0xff]
    %v662 = vld [vmem:[#allocation11 + $0x1a8] sm:$0xff]
    %v663 = vld [vmem:[#allocation11 + $0x1b0] sm:$0xff]
    %v664 = vld [vmem:[#allocation11 + $0x1b8] sm:$0xff]
    %v665 = vld [vmem:[#allocation11 + $0x1c0] sm:$0xff]
    %v666 = vld [vmem:[#allocation11 + $0x1c8] sm:$0xff]
    %v667 = vld [vmem:[#allocation11 + $0x1d0] sm:$0xff]
    %v668 = vld [vmem:[#allocation11 + $0x1d8] sm:$0xff]
    %v669 = vld [vmem:[#allocation11 + $0x1e0] sm:$0xff]
    %v670 = vld [vmem:[#allocation11 + $0x1e8] sm:$0xff]
    %v671 = vld [vmem:[#allocation11 + $0x1f0] sm:$0xff]
    %v672 = vld [vmem:[#allocation11 + $0x1f8] sm:$0xff]
    %v673 = vld [vmem:[#allocation13 + $0x7] sm:$0xf]
    %v674 = vpack.c.bf16 %v595, %v593
    %v675 = vpack.c.bf16 %v596, %v594
    %v676 = vpack.c.bf16 %v599, %v597
    %v677 = vpack.c.bf16 %v600, %v598
    %v678 = vpack.c.bf16 %v603, %v601
    %v679 = vpack.c.bf16 %v604, %v602
    %v680 = vpack.c.bf16 %v607, %v605
    %v681 = vpack.c.bf16 %v608, %v606
    %v683 = vperm.slane %v673, 0
    %v684 = vperm.slane %v673, 1
    %v685 = vperm.slane %v673, 2
    %v686 = vperm.slane %v673, 3
    %v755 = vunpack.c.l.b16 %v609
    %v756 = vunpack.c.h.b16 %v609
    %v757 = vunpack.c.l.b16 %v610
    %v758 = vunpack.c.h.b16 %v610
    %v759 = vunpack.c.l.b16 %v611
    %v760 = vunpack.c.h.b16 %v611
    %v761 = vunpack.c.l.b16 %v612
    %v762 = vunpack.c.h.b16 %v612
    %v763 = vunpack.c.l.b16 %v613
    %v764 = vunpack.c.h.b16 %v613
    %v765 = vunpack.c.l.b16 %v614
    %v766 = vunpack.c.h.b16 %v614
    %v767 = vunpack.c.l.b16 %v615
    %v768 = vunpack.c.h.b16 %v615
    %v769 = vunpack.c.l.b16 %v616
    %v770 = vunpack.c.h.b16 %v616
    %v771 = vunpack.c.l.b16 %v617
    %v772 = vunpack.c.h.b16 %v617
    %v773 = vunpack.c.l.b16 %v618
    %v774 = vunpack.c.h.b16 %v618
    %v775 = vunpack.c.l.b16 %v619
    %v776 = vunpack.c.h.b16 %v619
    %v777 = vunpack.c.l.b16 %v620
    %v778 = vunpack.c.h.b16 %v620
    %v779 = vunpack.c.l.b16 %v621
    %v780 = vunpack.c.h.b16 %v621
    %v781 = vunpack.c.l.b16 %v622
    %v782 = vunpack.c.h.b16 %v622
    %v783 = vunpack.c.l.b16 %v623
    %v784 = vunpack.c.h.b16 %v623
    %v785 = vunpack.c.l.b16 %v624
    %v786 = vunpack.c.h.b16 %v624
    %v787 = vunpack.c.l.b16 %v625
    %v788 = vunpack.c.h.b16 %v625
    %v789 = vunpack.c.l.b16 %v626
    %v790 = vunpack.c.h.b16 %v626
    %v791 = vunpack.c.l.b16 %v627
    %v792 = vunpack.c.h.b16 %v627
    %v793 = vunpack.c.l.b16 %v628
    %v794 = vunpack.c.h.b16 %v628
    %v795 = vunpack.c.l.b16 %v629
    %v796 = vunpack.c.h.b16 %v629
    %v797 = vunpack.c.l.b16 %v630
    %v798 = vunpack.c.h.b16 %v630
    %v799 = vunpack.c.l.b16 %v631
    %v800 = vunpack.c.h.b16 %v631
    %v801 = vunpack.c.l.b16 %v632
    %v802 = vunpack.c.h.b16 %v632
    %v803 = vunpack.c.l.b16 %v633
    %v804 = vunpack.c.h.b16 %v633
    %v805 = vunpack.c.l.b16 %v634
    %v806 = vunpack.c.h.b16 %v634
    %v807 = vunpack.c.l.b16 %v635
    %v808 = vunpack.c.h.b16 %v635
    %v809 = vunpack.c.l.b16 %v636
    %v810 = vunpack.c.h.b16 %v636
    %v811 = vunpack.c.l.b16 %v637
    %v812 = vunpack.c.h.b16 %v637
    %v813 = vunpack.c.l.b16 %v638
    %v814 = vunpack.c.h.b16 %v638
    %v815 = vunpack.c.l.b16 %v639
    %v816 = vunpack.c.h.b16 %v639
    %v817 = vunpack.c.l.b16 %v640
    %v818 = vunpack.c.h.b16 %v640
    %v819 = vunpack.c.l.b16 %v641
    %v820 = vunpack.c.h.b16 %v641
    %v821 = vunpack.c.l.b16 %v642
    %v822 = vunpack.c.h.b16 %v642
    %v823 = vunpack.c.l.b16 %v643
    %v824 = vunpack.c.h.b16 %v643
    %v825 = vunpack.c.l.b16 %v644
    %v826 = vunpack.c.h.b16 %v644
    %v827 = vunpack.c.l.b16 %v645
    %v828 = vunpack.c.h.b16 %v645
    %v829 = vunpack.c.l.b16 %v646
    %v830 = vunpack.c.h.b16 %v646
    %v831 = vunpack.c.l.b16 %v647
    %v832 = vunpack.c.h.b16 %v647
    %v833 = vunpack.c.l.b16 %v648
    %v834 = vunpack.c.h.b16 %v648
    %v835 = vunpack.c.l.b16 %v649
    %v836 = vunpack.c.h.b16 %v649
    %v837 = vunpack.c.l.b16 %v650
    %v838 = vunpack.c.h.b16 %v650
    %v839 = vunpack.c.l.b16 %v651
    %v840 = vunpack.c.h.b16 %v651
    %v841 = vunpack.c.l.b16 %v652
    %v842 = vunpack.c.h.b16 %v652
    %v843 = vunpack.c.l.b16 %v653
    %v844 = vunpack.c.h.b16 %v653
    %v845 = vunpack.c.l.b16 %v654
    %v846 = vunpack.c.h.b16 %v654
    %v847 = vunpack.c.l.b16 %v655
    %v848 = vunpack.c.h.b16 %v655
    %v849 = vunpack.c.l.b16 %v656
    %v850 = vunpack.c.h.b16 %v656
    %v851 = vunpack.c.l.b16 %v657
    %v852 = vunpack.c.h.b16 %v657
    %v853 = vunpack.c.l.b16 %v658
    %v854 = vunpack.c.h.b16 %v658
    %v855 = vunpack.c.l.b16 %v659
    %v856 = vunpack.c.h.b16 %v659
    %v857 = vunpack.c.l.b16 %v660
    %v858 = vunpack.c.h.b16 %v660
    %v859 = vunpack.c.l.b16 %v661
    %v860 = vunpack.c.h.b16 %v661
    %v861 = vunpack.c.l.b16 %v662
    %v862 = vunpack.c.h.b16 %v662
    %v863 = vunpack.c.l.b16 %v663
    %v864 = vunpack.c.h.b16 %v663
    %v865 = vunpack.c.l.b16 %v664
    %v866 = vunpack.c.h.b16 %v664
    %v867 = vunpack.c.l.b16 %v665
    %v868 = vunpack.c.h.b16 %v665
    %v869 = vunpack.c.l.b16 %v666
    %v870 = vunpack.c.h.b16 %v666
    %v871 = vunpack.c.l.b16 %v667
    %v872 = vunpack.c.h.b16 %v667
    %v873 = vunpack.c.l.b16 %v668
    %v874 = vunpack.c.h.b16 %v668
    %v875 = vunpack.c.l.b16 %v669
    %v876 = vunpack.c.h.b16 %v669
    %v877 = vunpack.c.l.b16 %v670
    %v878 = vunpack.c.h.b16 %v670
    %v879 = vunpack.c.l.b16 %v671
    %v880 = vunpack.c.h.b16 %v671
    %v881 = vunpack.c.l.b16 %v672
    %v882 = vunpack.c.h.b16 %v672
    %v883 = vpack.c.b16 %v759, %v755
    %v884 = vpack.c.b16 %v760, %v756
    %v885 = vpack.c.b16 %v761, %v757
    %v886 = vpack.c.b16 %v762, %v758
    %v887 = vpack.c.b16 %v767, %v763
    %v888 = vpack.c.b16 %v768, %v764
    %v889 = vpack.c.b16 %v769, %v765
    %v890 = vpack.c.b16 %v770, %v766
    %v891 = vpack.c.b16 %v775, %v771
    %v892 = vpack.c.b16 %v776, %v772
    %v893 = vpack.c.b16 %v777, %v773
    %v894 = vpack.c.b16 %v778, %v774
    %v895 = vpack.c.b16 %v783, %v779
    %v896 = vpack.c.b16 %v784, %v780
    %v897 = vpack.c.b16 %v785, %v781
    %v898 = vpack.c.b16 %v786, %v782
    %v899 = vpack.c.b16 %v791, %v787
    %v900 = vpack.c.b16 %v792, %v788
    %v901 = vpack.c.b16 %v793, %v789
    %v902 = vpack.c.b16 %v794, %v790
    %v903 = vpack.c.b16 %v799, %v795
    %v904 = vpack.c.b16 %v800, %v796
    %v905 = vpack.c.b16 %v801, %v797
    %v906 = vpack.c.b16 %v802, %v798
    %v907 = vpack.c.b16 %v807, %v803
    %v908 = vpack.c.b16 %v808, %v804
    %v909 = vpack.c.b16 %v809, %v805
    %v910 = vpack.c.b16 %v810, %v806
    %v911 = vpack.c.b16 %v815, %v811
    %v912 = vpack.c.b16 %v816, %v812
    %v913 = vpack.c.b16 %v817, %v813
    %v914 = vpack.c.b16 %v818, %v814
    %v915 = vpack.c.b16 %v823, %v819
    %v916 = vpack.c.b16 %v824, %v820
    %v917 = vpack.c.b16 %v825, %v821
    %v918 = vpack.c.b16 %v826, %v822
    %v919 = vpack.c.b16 %v831, %v827
    %v920 = vpack.c.b16 %v832, %v828
    %v921 = vpack.c.b16 %v833, %v829
    %v922 = vpack.c.b16 %v834, %v830
    %v923 = vpack.c.b16 %v839, %v835
    %v924 = vpack.c.b16 %v840, %v836
    %v925 = vpack.c.b16 %v841, %v837
    %v926 = vpack.c.b16 %v842, %v838
    %v927 = vpack.c.b16 %v847, %v843
    %v928 = vpack.c.b16 %v848, %v844
    %v929 = vpack.c.b16 %v849, %v845
    %v930 = vpack.c.b16 %v850, %v846
    %v931 = vpack.c.b16 %v855, %v851
    %v932 = vpack.c.b16 %v856, %v852
    %v933 = vpack.c.b16 %v857, %v853
    %v934 = vpack.c.b16 %v858, %v854
    %v935 = vpack.c.b16 %v863, %v859
    %v936 = vpack.c.b16 %v864, %v860
    %v937 = vpack.c.b16 %v865, %v861
    %v938 = vpack.c.b16 %v866, %v862
    %v939 = vpack.c.b16 %v871, %v867
    %v940 = vpack.c.b16 %v872, %v868
    %v941 = vpack.c.b16 %v873, %v869
    %v942 = vpack.c.b16 %v874, %v870
    %v943 = vpack.c.b16 %v879, %v875
    %v944 = vpack.c.b16 %v880, %v876
    %v945 = vpack.c.b16 %v881, %v877
    %v946 = vpack.c.b16 %v882, %v878
    %1011 = vmatpush.bf16.msra.mxu0 %v911
    %1012 = vmatpush.bf16.msra.mxu0 %v907
    %1013 = vmatpush.bf16.msra.mxu0 %v903
    %1014 = vmatpush.bf16.msra.mxu0 %v899
    %1015 = vmatpush.bf16.msra.mxu0 %v895
    %1016 = vmatpush.bf16.msra.mxu0 %v891
    %1017 = vmatpush.bf16.msra.mxu0 %v887
    %1018 = vmatpush.bf16.msra.mxu0 %v883
    %1019 = vmatmul.bf16.gmra.mxu0 %v674
    %v1020 = vpop.f32.mrf.mxu0
    %v1021 = vadd.f32 %v683, %v1020
    %v1022 = vpop.f32.mrf.mxu0
    %v1023 = vadd.f32 %v683, %v1022
    %1024 = vmatmul.bf16.gmra.mxu0 %v676
    %v1025 = vpop.f32.mrf.mxu0
    %v1026 = vadd.f32 %v683, %v1025
    %v1027 = vpop.f32.mrf.mxu0
    %v1028 = vadd.f32 %v683, %v1027
    %1029 = vmatmul.bf16.gmra.mxu0 %v678
    %v1030 = vpop.f32.mrf.mxu0
    %v1031 = vadd.f32 %v683, %v1030
    %v1032 = vpop.f32.mrf.mxu0
    %v1033 = vadd.f32 %v683, %v1032
    %1034 = vmatmul.bf16.gmra.mxu0 %v680
    %v1035 = vpop.f32.mrf.mxu0
    %v1036 = vadd.f32 %v683, %v1035
    %v1037 = vpop.f32.mrf.mxu0
    %v1038 = vadd.f32 %v683, %v1037
    %1039 = vdwg.mxu0
    %1040 = vmatpush.bf16.msra.mxu0 %v943
    %1041 = vmatpush.bf16.msra.mxu0 %v939
    %1042 = vmatpush.bf16.msra.mxu0 %v935
    %1043 = vmatpush.bf16.msra.mxu0 %v931
    %1044 = vmatpush.bf16.msra.mxu0 %v927
    %1045 = vmatpush.bf16.msra.mxu0 %v923
    %1046 = vmatpush.bf16.msra.mxu0 %v919
    %1047 = vmatpush.bf16.msra.mxu0 %v915
    %1048 = vmatmul.bf16.gmra.mxu0 %v675
    %v1049 = vpop.f32.mrf.mxu0
    %v1050 = vadd.f32 %v1021, %v1049
    %v1051 = vpop.f32.mrf.mxu0
    %v1052 = vadd.f32 %v1023, %v1051
    %1053 = vmatmul.bf16.gmra.mxu0 %v677
    %v1054 = vpop.f32.mrf.mxu0
    %v1055 = vadd.f32 %v1026, %v1054
    %v1056 = vpop.f32.mrf.mxu0
    %v1057 = vadd.f32 %v1028, %v1056
    %1058 = vmatmul.bf16.gmra.mxu0 %v679
    %v1059 = vpop.f32.mrf.mxu0
    %v1060 = vadd.f32 %v1031, %v1059
    %v1061 = vpop.f32.mrf.mxu0
    %v1062 = vadd.f32 %v1033, %v1061
    %1063 = vmatmul.bf16.gmra.mxu0 %v681
    %v1064 = vpop.f32.mrf.mxu0
    %v1065 = vadd.f32 %v1036, %v1064
    %v1066 = vpop.f32.mrf.mxu0
    %v1067 = vadd.f32 %v1038, %v1066
    %1068 = vdwg.mxu0
    %1069 = vmatpush.bf16.msra.mxu0 %v912
    %1070 = vmatpush.bf16.msra.mxu0 %v908
    %1071 = vmatpush.bf16.msra.mxu0 %v904
    %1072 = vmatpush.bf16.msra.mxu0 %v900
    %1073 = vmatpush.bf16.msra.mxu0 %v896
    %1074 = vmatpush.bf16.msra.mxu0 %v892
    %1075 = vmatpush.bf16.msra.mxu0 %v888
    %1076 = vmatpush.bf16.msra.mxu0 %v884
    %1077 = vmatmul.bf16.gmra.mxu0 %v674
    %v1078 = vpop.f32.mrf.mxu0
    %v1079 = vadd.f32 %v684, %v1078
    %v1080 = vpop.f32.mrf.mxu0
    %v1081 = vadd.f32 %v684, %v1080
    %1082 = vmatmul.bf16.gmra.mxu0 %v676
    %v1083 = vpop.f32.mrf.mxu0
    %v1084 = vadd.f32 %v684, %v1083
    %v1085 = vpop.f32.mrf.mxu0
    %v1086 = vadd.f32 %v684, %v1085
    %1087 = vmatmul.bf16.gmra.mxu0 %v678
    %v1088 = vpop.f32.mrf.mxu0
    %v1089 = vadd.f32 %v684, %v1088
    %v1090 = vpop.f32.mrf.mxu0
    %v1091 = vadd.f32 %v684, %v1090
    %1092 = vmatmul.bf16.gmra.mxu0 %v680
    %v1093 = vpop.f32.mrf.mxu0
    %v1094 = vadd.f32 %v684, %v1093
    %v1095 = vpop.f32.mrf.mxu0
    %v1096 = vadd.f32 %v684, %v1095
    %1097 = vdwg.mxu0
    %1098 = vmatpush.bf16.msra.mxu0 %v944
    %1099 = vmatpush.bf16.msra.mxu0 %v940
    %1100 = vmatpush.bf16.msra.mxu0 %v936
    %1101 = vmatpush.bf16.msra.mxu0 %v932
    %1102 = vmatpush.bf16.msra.mxu0 %v928
    %1103 = vmatpush.bf16.msra.mxu0 %v924
    %1104 = vmatpush.bf16.msra.mxu0 %v920
    %1105 = vmatpush.bf16.msra.mxu0 %v916
    %1106 = vmatmul.bf16.gmra.mxu0 %v675
    %v1107 = vpop.f32.mrf.mxu0
    %v1108 = vadd.f32 %v1079, %v1107
    %v1109 = vpop.f32.mrf.mxu0
    %v1110 = vadd.f32 %v1081, %v1109
    %1111 = vmatmul.bf16.gmra.mxu0 %v677
    %v1112 = vpop.f32.mrf.mxu0
    %v1113 = vadd.f32 %v1084, %v1112
    %v1114 = vpop.f32.mrf.mxu0
    %v1115 = vadd.f32 %v1086, %v1114
    %1116 = vmatmul.bf16.gmra.mxu0 %v679
    %v1117 = vpop.f32.mrf.mxu0
    %v1118 = vadd.f32 %v1089, %v1117
    %v1119 = vpop.f32.mrf.mxu0
    %v1120 = vadd.f32 %v1091, %v1119
    %1121 = vmatmul.bf16.gmra.mxu0 %v681
    %v1122 = vpop.f32.mrf.mxu0
    %v1123 = vadd.f32 %v1094, %v1122
    %v1124 = vpop.f32.mrf.mxu0
    %v1125 = vadd.f32 %v1096, %v1124
    %1126 = vdwg.mxu0
    %1127 = vmatpush.bf16.msra.mxu0 %v913
    %1128 = vmatpush.bf16.msra.mxu0 %v909
    %1129 = vmatpush.bf16.msra.mxu0 %v905
    %1130 = vmatpush.bf16.msra.mxu0 %v901
    %1131 = vmatpush.bf16.msra.mxu0 %v897
    %1132 = vmatpush.bf16.msra.mxu0 %v893
    %1133 = vmatpush.bf16.msra.mxu0 %v889
    %1134 = vmatpush.bf16.msra.mxu0 %v885
    %1135 = vmatmul.bf16.gmra.mxu0 %v674
    %v1136 = vpop.f32.mrf.mxu0
    %v1137 = vadd.f32 %v685, %v1136
    %v1138 = vpop.f32.mrf.mxu0
    %v1139 = vadd.f32 %v685, %v1138
    %1140 = vmatmul.bf16.gmra.mxu0 %v676
    %v1141 = vpop.f32.mrf.mxu0
    %v1142 = vadd.f32 %v685, %v1141
    %v1143 = vpop.f32.mrf.mxu0
    %v1144 = vadd.f32 %v685, %v1143
    %1145 = vmatmul.bf16.gmra.mxu0 %v678
    %v1146 = vpop.f32.mrf.mxu0
    %v1147 = vadd.f32 %v685, %v1146
    %v1148 = vpop.f32.mrf.mxu0
    %v1149 = vadd.f32 %v685, %v1148
    %1150 = vmatmul.bf16.gmra.mxu0 %v680
    %v1151 = vpop.f32.mrf.mxu0
    %v1152 = vadd.f32 %v685, %v1151
    %v1153 = vpop.f32.mrf.mxu0
    %v1154 = vadd.f32 %v685, %v1153
    %1155 = vdwg.mxu0
    %1156 = vmatpush.bf16.msra.mxu0 %v945
    %1157 = vmatpush.bf16.msra.mxu0 %v941
    %1158 = vmatpush.bf16.msra.mxu0 %v937
    %1159 = vmatpush.bf16.msra.mxu0 %v933
    %1160 = vmatpush.bf16.msra.mxu0 %v929
    %1161 = vmatpush.bf16.msra.mxu0 %v925
    %1162 = vmatpush.bf16.msra.mxu0 %v921
    %1163 = vmatpush.bf16.msra.mxu0 %v917
    %1164 = vmatmul.bf16.gmra.mxu0 %v675
    %v1165 = vpop.f32.mrf.mxu0
    %v1166 = vadd.f32 %v1137, %v1165
    %v1167 = vpop.f32.mrf.mxu0
    %v1168 = vadd.f32 %v1139, %v1167
    %1169 = vmatmul.bf16.gmra.mxu0 %v677
    %v1170 = vpop.f32.mrf.mxu0
    %v1171 = vadd.f32 %v1142, %v1170
    %v1172 = vpop.f32.mrf.mxu0
    %v1173 = vadd.f32 %v1144, %v1172
    %1174 = vmatmul.bf16.gmra.mxu0 %v679
    %v1175 = vpop.f32.mrf.mxu0
    %v1176 = vadd.f32 %v1147, %v1175
    %v1177 = vpop.f32.mrf.mxu0
    %v1178 = vadd.f32 %v1149, %v1177
    %1179 = vmatmul.bf16.gmra.mxu0 %v681
    %v1180 = vpop.f32.mrf.mxu0
    %v1181 = vadd.f32 %v1152, %v1180
    %v1182 = vpop.f32.mrf.mxu0
    %v1183 = vadd.f32 %v1154, %v1182
    %1184 = vdwg.mxu0
    %1185 = vmatpush.bf16.msra.mxu0 %v914
    %1186 = vmatpush.bf16.msra.mxu0 %v910
    %1187 = vmatpush.bf16.msra.mxu0 %v906
    %1188 = vmatpush.bf16.msra.mxu0 %v902
    %1189 = vmatpush.bf16.msra.mxu0 %v898
    %1190 = vmatpush.bf16.msra.mxu0 %v894
    %1191 = vmatpush.bf16.msra.mxu0 %v890
    %1192 = vmatpush.bf16.msra.mxu0 %v886
    %1193 = vmatmul.bf16.gmra.mxu0 %v674
    %v1194 = vpop.f32.mrf.mxu0
    %v1195 = vadd.f32 %v686, %v1194
    %v1196 = vpop.f32.mrf.mxu0
    %v1197 = vadd.f32 %v686, %v1196
    %1198 = vmatmul.bf16.gmra.mxu0 %v676
    %v1199 = vpop.f32.mrf.mxu0
    %v1200 = vadd.f32 %v686, %v1199
    %v1201 = vpop.f32.mrf.mxu0
    %v1202 = vadd.f32 %v686, %v1201
    %1203 = vmatmul.bf16.gmra.mxu0 %v678
    %v1204 = vpop.f32.mrf.mxu0
    %v1205 = vadd.f32 %v686, %v1204
    %v1206 = vpop.f32.mrf.mxu0
    %v1207 = vadd.f32 %v686, %v1206
    %1208 = vmatmul.bf16.gmra.mxu0 %v680
    %v1209 = vpop.f32.mrf.mxu0
    %v1210 = vadd.f32 %v686, %v1209
    %v1211 = vpop.f32.mrf.mxu0
    %v1212 = vadd.f32 %v686, %v1211
    %1213 = vdwg.mxu0
    %1214 = vmatpush.bf16.msra.mxu0 %v946
    %1215 = vmatpush.bf16.msra.mxu0 %v942
    %1216 = vmatpush.bf16.msra.mxu0 %v938
    %1217 = vmatpush.bf16.msra.mxu0 %v934
    %1218 = vmatpush.bf16.msra.mxu0 %v930
    %1219 = vmatpush.bf16.msra.mxu0 %v926
    %1220 = vmatpush.bf16.msra.mxu0 %v922
    %1221 = vmatpush.bf16.msra.mxu0 %v918
    %1222 = vmatmul.bf16.gmra.mxu0 %v675
    %v1223 = vpop.f32.mrf.mxu0
    %v1224 = vadd.f32 %v1195, %v1223
    %v1225 = vpop.f32.mrf.mxu0
    %v1226 = vadd.f32 %v1197, %v1225
    %1227 = vmatmul.bf16.gmra.mxu0 %v677
    %v1228 = vpop.f32.mrf.mxu0
    %v1229 = vadd.f32 %v1200, %v1228
    %v1230 = vpop.f32.mrf.mxu0
    %v1231 = vadd.f32 %v1202, %v1230
    %1232 = vmatmul.bf16.gmra.mxu0 %v679
    %v1233 = vpop.f32.mrf.mxu0
    %v1234 = vadd.f32 %v1205, %v1233
    %v1235 = vpop.f32.mrf.mxu0
    %v1236 = vadd.f32 %v1207, %v1235
    %1237 = vmatmul.bf16.gmra.mxu0 %v681
    %v1238 = vpop.f32.mrf.mxu0
    %v1239 = vadd.f32 %v1210, %v1238
    %v1240 = vpop.f32.mrf.mxu0
    %v1241 = vadd.f32 %v1212, %v1240
    %1242 = vdwg.mxu0
    %v1243 = vld [vmem:[#allocation13 + $0xb] sm:$0xf]
    %v1244 = vld [vmem:[#allocation13 + $0xf] sm:$0xf]
    %v1245 = vadd.f32 %v1050, %v1052
    %v1246 = vadd.f32 %v1245, %v1055
    %v1247 = vadd.f32 %v1246, %v1057
    %v1248 = vadd.f32 %v1247, %v1060
    %v1249 = vadd.f32 %v1248, %v1062
    %v1250 = vadd.f32 %v1249, %v1065
    %v1251 = vadd.f32 %v1250, %v1067
    %v1252 = vrot.slane %v1251, 4
    %v1253 = vadd.f32 %v1251, %v1252
    %v1254 = vrot.slane %v1253, 2
    %v1255 = vadd.f32 %v1253, %v1254
    %v1256 = vrot.slane %v1255, 1
    %v1257 = vadd.f32 %v1255, %v1256
    %v1258 = vadd.f32 %v1108, %v1110
    %v1259 = vadd.f32 %v1258, %v1113
    %v1260 = vadd.f32 %v1259, %v1115
    %v1261 = vadd.f32 %v1260, %v1118
    %v1262 = vadd.f32 %v1261, %v1120
    %v1263 = vadd.f32 %v1262, %v1123
    %v1264 = vadd.f32 %v1263, %v1125
    %v1265 = vrot.slane %v1264, 4
    %v1266 = vadd.f32 %v1264, %v1265
    %v1267 = vrot.slane %v1266, 2
    %v1268 = vadd.f32 %v1266, %v1267
    %v1269 = vrot.slane %v1268, 1
    %v1270 = vadd.f32 %v1268, %v1269
    %v1271 = vadd.f32 %v1166, %v1168
    %v1272 = vadd.f32 %v1271, %v1171
    %v1273 = vadd.f32 %v1272, %v1173
    %v1274 = vadd.f32 %v1273, %v1176
    %v1275 = vadd.f32 %v1274, %v1178
    %v1276 = vadd.f32 %v1275, %v1181
    %v1277 = vadd.f32 %v1276, %v1183
    %v1278 = vrot.slane %v1277, 4
    %v1279 = vadd.f32 %v1277, %v1278
    %v1280 = vrot.slane %v1279, 2
    %v1281 = vadd.f32 %v1279, %v1280
    %v1282 = vrot.slane %v1281, 1
    %v1283 = vadd.f32 %v1281, %v1282
    %v1284 = vadd.f32 %v1224, %v1226
    %v1285 = vadd.f32 %v1284, %v1229
    %v1286 = vadd.f32 %v1285, %v1231
    %v1287 = vadd.f32 %v1286, %v1234
    %v1288 = vadd.f32 %v1287, %v1236
    %v1289 = vadd.f32 %v1288, %v1239
    %v1290 = vadd.f32 %v1289, %v1241
    %v1291 = vrot.slane %v1290, 4
    %v1292 = vadd.f32 %v1290, %v1291
    %v1293 = vrot.slane %v1292, 2
    %v1294 = vadd.f32 %v1292, %v1293
    %v1295 = vrot.slane %v1294, 1
    %v1296 = vadd.f32 %v1294, %v1295
    %v1297 = vmul.f32 %v1257, %v449
    %v1298 = vmul.f32 %v1270, %v449
    %v1299 = vmul.f32 %v1283, %v449
    %v1300 = vmul.f32 %v1296, %v449
    %v1301 = vmul.f32 %v1050, %v1050
    %v1302 = vmul.f32 %v1108, %v1108
    %v1303 = vmul.f32 %v1166, %v1166
    %v1304 = vmul.f32 %v1224, %v1224
    %v1305 = vmul.f32 %v1052, %v1052
    %v1306 = vmul.f32 %v1110, %v1110
    %v1307 = vmul.f32 %v1168, %v1168
    %v1308 = vmul.f32 %v1226, %v1226
    %v1309 = vmul.f32 %v1055, %v1055
    %v1310 = vmul.f32 %v1113, %v1113
    %v1311 = vmul.f32 %v1171, %v1171
    %v1312 = vmul.f32 %v1229, %v1229
    %v1313 = vmul.f32 %v1057, %v1057
    %v1314 = vmul.f32 %v1115, %v1115
    %v1315 = vmul.f32 %v1173, %v1173
    %v1316 = vmul.f32 %v1231, %v1231
    %v1317 = vmul.f32 %v1060, %v1060
    %v1318 = vmul.f32 %v1118, %v1118
    %v1319 = vmul.f32 %v1176, %v1176
    %v1320 = vmul.f32 %v1234, %v1234
    %v1321 = vmul.f32 %v1062, %v1062
    %v1322 = vmul.f32 %v1120, %v1120
    %v1323 = vmul.f32 %v1178, %v1178
    %v1324 = vmul.f32 %v1236, %v1236
    %v1325 = vmul.f32 %v1065, %v1065
    %v1326 = vmul.f32 %v1123, %v1123
    %v1327 = vmul.f32 %v1181, %v1181
    %v1328 = vmul.f32 %v1239, %v1239
    %v1329 = vmul.f32 %v1067, %v1067
    %v1330 = vmul.f32 %v1125, %v1125
    %v1331 = vmul.f32 %v1183, %v1183
    %v1332 = vmul.f32 %v1241, %v1241
    %v1333 = vadd.f32 %v1301, %v1305
    %v1334 = vadd.f32 %v1333, %v1309
    %v1335 = vadd.f32 %v1334, %v1313
    %v1336 = vadd.f32 %v1335, %v1317
    %v1337 = vadd.f32 %v1336, %v1321
    %v1338 = vadd.f32 %v1337, %v1325
    %v1339 = vadd.f32 %v1338, %v1329
    %v1340 = vrot.slane %v1339, 4
    %v1341 = vadd.f32 %v1339, %v1340
    %v1342 = vrot.slane %v1341, 2
    %v1343 = vadd.f32 %v1341, %v1342
    %v1344 = vrot.slane %v1343, 1
    %v1345 = vadd.f32 %v1343, %v1344
    %v1346 = vadd.f32 %v1302, %v1306
    %v1347 = vadd.f32 %v1346, %v1310
    %v1348 = vadd.f32 %v1347, %v1314
    %v1349 = vadd.f32 %v1348, %v1318
    %v1350 = vadd.f32 %v1349, %v1322
    %v1351 = vadd.f32 %v1350, %v1326
    %v1352 = vadd.f32 %v1351, %v1330
    %v1353 = vrot.slane %v1352, 4
    %v1354 = vadd.f32 %v1352, %v1353
    %v1355 = vrot.slane %v1354, 2
    %v1356 = vadd.f32 %v1354, %v1355
    %v1357 = vrot.slane %v1356, 1
    %v1358 = vadd.f32 %v1356, %v1357
    %v1359 = vadd.f32 %v1303, %v1307
    %v1360 = vadd.f32 %v1359, %v1311
    %v1361 = vadd.f32 %v1360, %v1315
    %v1362 = vadd.f32 %v1361, %v1319
    %v1363 = vadd.f32 %v1362, %v1323
    %v1364 = vadd.f32 %v1363, %v1327
    %v1365 = vadd.f32 %v1364, %v1331
    %v1366 = vrot.slane %v1365, 4
    %v1367 = vadd.f32 %v1365, %v1366
    %v1368 = vrot.slane %v1367, 2
    %v1369 = vadd.f32 %v1367, %v1368
    %v1370 = vrot.slane %v1369, 1
    %v1371 = vadd.f32 %v1369, %v1370
    %v1372 = vadd.f32 %v1304, %v1308
    %v1373 = vadd.f32 %v1372, %v1312
    %v1374 = vadd.f32 %v1373, %v1316
    %v1375 = vadd.f32 %v1374, %v1320
    %v1376 = vadd.f32 %v1375, %v1324
    %v1377 = vadd.f32 %v1376, %v1328
    %v1378 = vadd.f32 %v1377, %v1332
    %v1379 = vrot.slane %v1378, 4
    %v1380 = vadd.f32 %v1378, %v1379
    %v1381 = vrot.slane %v1380, 2
    %v1382 = vadd.f32 %v1380, %v1381
    %v1383 = vrot.slane %v1382, 1
    %v1384 = vadd.f32 %v1382, %v1383
    %v1385 = vmul.f32 %v1345, %v449
    %v1386 = vmul.f32 %v1358, %v449
    %v1387 = vmul.f32 %v1371, %v449
    %v1388 = vmul.f32 %v1384, %v449
    %v1389 = vmul.f32 %v1297, %v1297
    %v1390 = vmul.f32 %v1298, %v1298
    %v1391 = vmul.f32 %v1299, %v1299
    %v1392 = vmul.f32 %v1300, %v1300
    %v1393 = vsub.f32 %v1385, %v1389
    %v1394 = vsub.f32 %v1386, %v1390
    %v1395 = vsub.f32 %v1387, %v1391
    %v1396 = vsub.f32 %v1388, %v1392
    %v1397 = vadd.f32 %v1393, 0.8
    %v1398 = vadd.f32 %v1394, 0.8
    %v1399 = vadd.f32 %v1395, 0.8
    %v1400 = vadd.f32 %v1396, 0.8
    %v1401 = vrsqrt.pop %v1397
    %v1402 = vmul.f32 %v1401, %v1397
    %v1403 = vmul.f32 %v1402, %v1401
    %v1404 = vmul.f32 0.5, %v1403
    %v1405 = vsub.f32 1.5, %v1404
    %v1406 = vmul.f32 %v1401, %v1405
    %vm1407 = vweird.f32 %v1397
    %vm1408 = vweird.f32 %v1401
    %vm1409 = vmor %vm1407, %vm1408
    %v1410 = vsel %vm1409, %v1401, %v1406
    %v1411 = vrsqrt.pop %v1398
    %v1412 = vmul.f32 %v1411, %v1398
    %v1413 = vmul.f32 %v1412, %v1411
    %v1414 = vmul.f32 0.5, %v1413
    %v1415 = vsub.f32 1.5, %v1414
    %v1416 = vmul.f32 %v1411, %v1415
    %vm1417 = vweird.f32 %v1398
    %vm1418 = vweird.f32 %v1411
    %vm1419 = vmor %vm1417, %vm1418
    %v1420 = vsel %vm1419, %v1411, %v1416
    %v1421 = vrsqrt.pop %v1399
    %v1422 = vmul.f32 %v1421, %v1399
    %v1423 = vmul.f32 %v1422, %v1421
    %v1424 = vmul.f32 0.5, %v1423
    %v1425 = vsub.f32 1.5, %v1424
    %v1426 = vmul.f32 %v1421, %v1425
    %vm1427 = vweird.f32 %v1399
    %vm1428 = vweird.f32 %v1421
    %vm1429 = vmor %vm1427, %vm1428
    %v1430 = vsel %vm1429, %v1421, %v1426
    %v1431 = vrsqrt.pop %v1400
    %v1432 = vmul.f32 %v1431, %v1400
    %v1433 = vmul.f32 %v1432, %v1431
    %v1434 = vmul.f32 0.5, %v1433
    %v1435 = vsub.f32 1.5, %v1434
    %v1436 = vmul.f32 %v1431, %v1435
    %vm1437 = vweird.f32 %v1400
    %vm1438 = vweird.f32 %v1431
    %vm1439 = vmor %vm1437, %vm1438
    %v1440 = vsel %vm1439, %v1431, %v1436
    %v1442 = vperm.slane %v1243, 0
    %v1443 = vperm.slane %v1243, 1
    %v1444 = vperm.slane %v1243, 2
    %v1445 = vperm.slane %v1243, 3
    %v1450 = vmul.f32 %v1410, %v1442
    %v1451 = vmul.f32 %v1420, %v1443
    %v1452 = vmul.f32 %v1430, %v1444
    %v1453 = vmul.f32 %v1440, %v1445
    %v1454 = vmul.f32 %v1297, %v1450
    %v1455 = vmul.f32 %v1298, %v1451
    %v1456 = vmul.f32 %v1299, %v1452
    %v1457 = vmul.f32 %v1300, %v1453
    %v1462 = vrot.slane %v1455, 7
    %v1463 = vrot.slane %v1456, 6
    %v1464 = vrot.slane %v1457, 5
    %v1465 = vsel %vm534, %v1454, %v1462
    %vm1466 = vcmask 1042434
    %v1467 = vsel %vm1466, %v1463, %v1464
    %vm1468 = vcmask 1041408
    %v1469 = vsel %vm1468, %v1465, %v1467
    %v1471 = vsub.f32 %v1244, %v1469
    %v1472 = vperm.slane %v1450, 0
    %v1473 = vperm.slane %v1451, 0
    %v1474 = vperm.slane %v1452, 0
    %v1475 = vperm.slane %v1453, 0
    %v1476 = vmul.f32 %v1050, %v1472
    %v1477 = vmul.f32 %v1108, %v1473
    %v1478 = vmul.f32 %v1166, %v1474
    %v1479 = vmul.f32 %v1224, %v1475
    %v1480 = vmul.f32 %v1052, %v1472
    %v1481 = vmul.f32 %v1110, %v1473
    %v1482 = vmul.f32 %v1168, %v1474
    %v1483 = vmul.f32 %v1226, %v1475
    %v1484 = vmul.f32 %v1055, %v1472
    %v1485 = vmul.f32 %v1113, %v1473
    %v1486 = vmul.f32 %v1171, %v1474
    %v1487 = vmul.f32 %v1229, %v1475
    %v1488 = vmul.f32 %v1057, %v1472
    %v1489 = vmul.f32 %v1115, %v1473
    %v1490 = vmul.f32 %v1173, %v1474
    %v1491 = vmul.f32 %v1231, %v1475
    %v1492 = vmul.f32 %v1060, %v1472
    %v1493 = vmul.f32 %v1118, %v1473
    %v1494 = vmul.f32 %v1176, %v1474
    %v1495 = vmul.f32 %v1234, %v1475
    %v1496 = vmul.f32 %v1062, %v1472
    %v1497 = vmul.f32 %v1120, %v1473
    %v1498 = vmul.f32 %v1178, %v1474
    %v1499 = vmul.f32 %v1236, %v1475
    %v1500 = vmul.f32 %v1065, %v1472
    %v1501 = vmul.f32 %v1123, %v1473
    %v1502 = vmul.f32 %v1181, %v1474
    %v1503 = vmul.f32 %v1239, %v1475
    %v1504 = vmul.f32 %v1067, %v1472
    %v1505 = vmul.f32 %v1125, %v1473
    %v1506 = vmul.f32 %v1183, %v1474
    %v1507 = vmul.f32 %v1241, %v1475
    %v1509 = vperm.slane %v1471, 0
    %v1510 = vperm.slane %v1471, 1
    %v1511 = vperm.slane %v1471, 2
    %v1512 = vperm.slane %v1471, 3
    %v1517 = vadd.f32 %v1476, %v1509
    %v1518 = vadd.f32 %v1477, %v1510
    %v1519 = vadd.f32 %v1478, %v1511
    %v1520 = vadd.f32 %v1479, %v1512
    %v1521 = vadd.f32 %v1480, %v1509
    %v1522 = vadd.f32 %v1481, %v1510
    %v1523 = vadd.f32 %v1482, %v1511
    %v1524 = vadd.f32 %v1483, %v1512
    %v1525 = vadd.f32 %v1484, %v1509
    %v1526 = vadd.f32 %v1485, %v1510
    %v1527 = vadd.f32 %v1486, %v1511
    %v1528 = vadd.f32 %v1487, %v1512
    %v1529 = vadd.f32 %v1488, %v1509
    %v1530 = vadd.f32 %v1489, %v1510
    %v1531 = vadd.f32 %v1490, %v1511
    %v1532 = vadd.f32 %v1491, %v1512
    %v1533 = vadd.f32 %v1492, %v1509
    %v1534 = vadd.f32 %v1493, %v1510
    %v1535 = vadd.f32 %v1494, %v1511
    %v1536 = vadd.f32 %v1495, %v1512
    %v1537 = vadd.f32 %v1496, %v1509
    %v1538 = vadd.f32 %v1497, %v1510
    %v1539 = vadd.f32 %v1498, %v1511
    %v1540 = vadd.f32 %v1499, %v1512
    %v1541 = vadd.f32 %v1500, %v1509
    %v1542 = vadd.f32 %v1501, %v1510
    %v1543 = vadd.f32 %v1502, %v1511
    %v1544 = vadd.f32 %v1503, %v1512
    %v1545 = vadd.f32 %v1504, %v1509
    %v1546 = vadd.f32 %v1505, %v1510
    %v1547 = vadd.f32 %v1506, %v1511
    %v1548 = vadd.f32 %v1507, %v1512
    %v1549 = vmul.f32 %v1517, 0.2
    %v1550 = vmul.f32 %v1518, 0.2
    %v1551 = vmul.f32 %v1519, 0.2
    %v1552 = vmul.f32 %v1520, 0.2
    %v1553 = vmul.f32 %v1521, 0.2
    %v1554 = vmul.f32 %v1522, 0.2
    %v1555 = vmul.f32 %v1523, 0.2
    %v1556 = vmul.f32 %v1524, 0.2
    %v1557 = vmul.f32 %v1525, 0.2
    %v1558 = vmul.f32 %v1526, 0.2
    %v1559 = vmul.f32 %v1527, 0.2
    %v1560 = vmul.f32 %v1528, 0.2
    %v1561 = vmul.f32 %v1529, 0.2
    %v1562 = vmul.f32 %v1530, 0.2
    %v1563 = vmul.f32 %v1531, 0.2
    %v1564 = vmul.f32 %v1532, 0.2
    %v1565 = vmul.f32 %v1533, 0.2
    %v1566 = vmul.f32 %v1534, 0.2
    %v1567 = vmul.f32 %v1535, 0.2
    %v1568 = vmul.f32 %v1536, 0.2
    %v1569 = vmul.f32 %v1537, 0.2
    %v1570 = vmul.f32 %v1538, 0.2
    %v1571 = vmul.f32 %v1539, 0.2
    %v1572 = vmul.f32 %v1540, 0.2
    %v1573 = vmul.f32 %v1541, 0.2
    %v1574 = vmul.f32 %v1542, 0.2
    %v1575 = vmul.f32 %v1543, 0.2
    %v1576 = vmul.f32 %v1544, 0.2
    %v1577 = vmul.f32 %v1545, 0.2
    %v1578 = vmul.f32 %v1546, 0.2
    %v1579 = vmul.f32 %v1547, 0.2
    %v1580 = vmul.f32 %v1548, 0.2
    %v1581 = vmax.f32 %v1517, %v1549
    %v1582 = vmax.f32 %v1518, %v1550
    %v1583 = vmax.f32 %v1519, %v1551
    %v1584 = vmax.f32 %v1520, %v1552
    %v1585 = vmax.f32 %v1521, %v1553
    %v1586 = vmax.f32 %v1522, %v1554
    %v1587 = vmax.f32 %v1523, %v1555
    %v1588 = vmax.f32 %v1524, %v1556
    %v1589 = vmax.f32 %v1525, %v1557
    %v1590 = vmax.f32 %v1526, %v1558
    %v1591 = vmax.f32 %v1527, %v1559
    %v1592 = vmax.f32 %v1528, %v1560
    %v1593 = vmax.f32 %v1529, %v1561
    %v1594 = vmax.f32 %v1530, %v1562
    %v1595 = vmax.f32 %v1531, %v1563
    %v1596 = vmax.f32 %v1532, %v1564
    %v1597 = vmax.f32 %v1533, %v1565
    %v1598 = vmax.f32 %v1534, %v1566
    %v1599 = vmax.f32 %v1535, %v1567
    %v1600 = vmax.f32 %v1536, %v1568
    %v1601 = vmax.f32 %v1537, %v1569
    %v1602 = vmax.f32 %v1538, %v1570
    %v1603 = vmax.f32 %v1539, %v1571
    %v1604 = vmax.f32 %v1540, %v1572
    %v1605 = vmax.f32 %v1541, %v1573
    %v1606 = vmax.f32 %v1542, %v1574
    %v1607 = vmax.f32 %v1543, %v1575
    %v1608 = vmax.f32 %v1544, %v1576
    %v1609 = vmax.f32 %v1545, %v1577
    %v1610 = vmax.f32 %v1546, %v1578
    %v1611 = vmax.f32 %v1547, %v1579
    %v1612 = vmax.f32 %v1548, %v1580
    %s1613 = smul.u32 4, 64
    %s1614 = smul.u32 %s1613, 8
    %s1615 = sshll.u32 %s1614, 4
    %1616 = dma.done [#allocation4], %s1615
    %v1617 = vld [vmem:[#allocation2] sm:$0xff]
    %v1618 = vld [vmem:[#allocation2 + $0x8] sm:$0xff]
    %v1619 = vld [vmem:[#allocation2 + $0x10] sm:$0xff]
    %v1620 = vld [vmem:[#allocation2 + $0x18] sm:$0xff]
    %v1621 = vld [vmem:[#allocation2 + $0x20] sm:$0xff]
    %v1622 = vld [vmem:[#allocation2 + $0x28] sm:$0xff]
    %v1623 = vld [vmem:[#allocation2 + $0x30] sm:$0xff]
    %v1624 = vld [vmem:[#allocation2 + $0x38] sm:$0xff]
    %v1625 = vld [vmem:[#allocation2 + $0x40] sm:$0xff]
    %v1626 = vld [vmem:[#allocation2 + $0x48] sm:$0xff]
    %v1627 = vld [vmem:[#allocation2 + $0x50] sm:$0xff]
    %v1628 = vld [vmem:[#allocation2 + $0x58] sm:$0xff]
    %v1629 = vld [vmem:[#allocation2 + $0x60] sm:$0xff]
    %v1630 = vld [vmem:[#allocation2 + $0x68] sm:$0xff]
    %v1631 = vld [vmem:[#allocation2 + $0x70] sm:$0xff]
    %v1632 = vld [vmem:[#allocation2 + $0x78] sm:$0xff]
    %v1633 = vld [vmem:[#allocation2 + $0x80] sm:$0xff]
    %v1634 = vld [vmem:[#allocation2 + $0x88] sm:$0xff]
    %v1635 = vld [vmem:[#allocation2 + $0x90] sm:$0xff]
    %v1636 = vld [vmem:[#allocation2 + $0x98] sm:$0xff]
    %v1637 = vld [vmem:[#allocation2 + $0xa0] sm:$0xff]
    %v1638 = vld [vmem:[#allocation2 + $0xa8] sm:$0xff]
    %v1639 = vld [vmem:[#allocation2 + $0xb0] sm:$0xff]
    %v1640 = vld [vmem:[#allocation2 + $0xb8] sm:$0xff]
    %v1641 = vld [vmem:[#allocation2 + $0xc0] sm:$0xff]
    %v1642 = vld [vmem:[#allocation2 + $0xc8] sm:$0xff]
    %v1643 = vld [vmem:[#allocation2 + $0xd0] sm:$0xff]
    %v1644 = vld [vmem:[#allocation2 + $0xd8] sm:$0xff]
    %v1645 = vld [vmem:[#allocation2 + $0xe0] sm:$0xff]
    %v1646 = vld [vmem:[#allocation2 + $0xe8] sm:$0xff]
    %v1647 = vld [vmem:[#allocation2 + $0xf0] sm:$0xff]
    %v1648 = vld [vmem:[#allocation2 + $0xf8] sm:$0xff]
    %v1649 = vld [vmem:[#allocation2 + $0x100] sm:$0xff]
    %v1650 = vld [vmem:[#allocation2 + $0x108] sm:$0xff]
    %v1651 = vld [vmem:[#allocation2 + $0x110] sm:$0xff]
    %v1652 = vld [vmem:[#allocation2 + $0x118] sm:$0xff]
    %v1653 = vld [vmem:[#allocation2 + $0x120] sm:$0xff]
    %v1654 = vld [vmem:[#allocation2 + $0x128] sm:$0xff]
    %v1655 = vld [vmem:[#allocation2 + $0x130] sm:$0xff]
    %v1656 = vld [vmem:[#allocation2 + $0x138] sm:$0xff]
    %v1657 = vld [vmem:[#allocation2 + $0x140] sm:$0xff]
    %v1658 = vld [vmem:[#allocation2 + $0x148] sm:$0xff]
    %v1659 = vld [vmem:[#allocation2 + $0x150] sm:$0xff]
    %v1660 = vld [vmem:[#allocation2 + $0x158] sm:$0xff]
    %v1661 = vld [vmem:[#allocation2 + $0x160] sm:$0xff]
    %v1662 = vld [vmem:[#allocation2 + $0x168] sm:$0xff]
    %v1663 = vld [vmem:[#allocation2 + $0x170] sm:$0xff]
    %v1664 = vld [vmem:[#allocation2 + $0x178] sm:$0xff]
    %v1665 = vld [vmem:[#allocation2 + $0x180] sm:$0xff]
    %v1666 = vld [vmem:[#allocation2 + $0x188] sm:$0xff]
    %v1667 = vld [vmem:[#allocation2 + $0x190] sm:$0xff]
    %v1668 = vld [vmem:[#allocation2 + $0x198] sm:$0xff]
    %v1669 = vld [vmem:[#allocation2 + $0x1a0] sm:$0xff]
    %v1670 = vld [vmem:[#allocation2 + $0x1a8] sm:$0xff]
    %v1671 = vld [vmem:[#allocation2 + $0x1b0] sm:$0xff]
    %v1672 = vld [vmem:[#allocation2 + $0x1b8] sm:$0xff]
    %v1673 = vld [vmem:[#allocation2 + $0x1c0] sm:$0xff]
    %v1674 = vld [vmem:[#allocation2 + $0x1c8] sm:$0xff]
    %v1675 = vld [vmem:[#allocation2 + $0x1d0] sm:$0xff]
    %v1676 = vld [vmem:[#allocation2 + $0x1d8] sm:$0xff]
    %v1677 = vld [vmem:[#allocation2 + $0x1e0] sm:$0xff]
    %v1678 = vld [vmem:[#allocation2 + $0x1e8] sm:$0xff]
    %v1679 = vld [vmem:[#allocation2 + $0x1f0] sm:$0xff]
    %v1680 = vld [vmem:[#allocation2 + $0x1f8] sm:$0xff]
    %v1681 = vld [vmem:[#allocation2 + $0x200] sm:$0xff]
    %v1682 = vld [vmem:[#allocation2 + $0x208] sm:$0xff]
    %v1683 = vld [vmem:[#allocation2 + $0x210] sm:$0xff]
    %v1684 = vld [vmem:[#allocation2 + $0x218] sm:$0xff]
    %v1685 = vld [vmem:[#allocation2 + $0x220] sm:$0xff]
    %v1686 = vld [vmem:[#allocation2 + $0x228] sm:$0xff]
    %v1687 = vld [vmem:[#allocation2 + $0x230] sm:$0xff]
    %v1688 = vld [vmem:[#allocation2 + $0x238] sm:$0xff]
    %v1689 = vld [vmem:[#allocation2 + $0x240] sm:$0xff]
    %v1690 = vld [vmem:[#allocation2 + $0x248] sm:$0xff]
    %v1691 = vld [vmem:[#allocation2 + $0x250] sm:$0xff]
    %v1692 = vld [vmem:[#allocation2 + $0x258] sm:$0xff]
    %v1693 = vld [vmem:[#allocation2 + $0x260] sm:$0xff]
    %v1694 = vld [vmem:[#allocation2 + $0x268] sm:$0xff]
    %v1695 = vld [vmem:[#allocation2 + $0x270] sm:$0xff]
    %v1696 = vld [vmem:[#allocation2 + $0x278] sm:$0xff]
    %v1697 = vld [vmem:[#allocation2 + $0x280] sm:$0xff]
    %v1698 = vld [vmem:[#allocation2 + $0x288] sm:$0xff]
    %v1699 = vld [vmem:[#allocation2 + $0x290] sm:$0xff]
    %v1700 = vld [vmem:[#allocation2 + $0x298] sm:$0xff]
    %v1701 = vld [vmem:[#allocation2 + $0x2a0] sm:$0xff]
    %v1702 = vld [vmem:[#allocation2 + $0x2a8] sm:$0xff]
    %v1703 = vld [vmem:[#allocation2 + $0x2b0] sm:$0xff]
    %v1704 = vld [vmem:[#allocation2 + $0x2b8] sm:$0xff]
    %v1705 = vld [vmem:[#allocation2 + $0x2c0] sm:$0xff]
    %v1706 = vld [vmem:[#allocation2 + $0x2c8] sm:$0xff]
    %v1707 = vld [vmem:[#allocation2 + $0x2d0] sm:$0xff]
    %v1708 = vld [vmem:[#allocation2 + $0x2d8] sm:$0xff]
    %v1709 = vld [vmem:[#allocation2 + $0x2e0] sm:$0xff]
    %v1710 = vld [vmem:[#allocation2 + $0x2e8] sm:$0xff]
    %v1711 = vld [vmem:[#allocation2 + $0x2f0] sm:$0xff]
    %v1712 = vld [vmem:[#allocation2 + $0x2f8] sm:$0xff]
    %v1713 = vld [vmem:[#allocation2 + $0x300] sm:$0xff]
    %v1714 = vld [vmem:[#allocation2 + $0x308] sm:$0xff]
    %v1715 = vld [vmem:[#allocation2 + $0x310] sm:$0xff]
    %v1716 = vld [vmem:[#allocation2 + $0x318] sm:$0xff]
    %v1717 = vld [vmem:[#allocation2 + $0x320] sm:$0xff]
    %v1718 = vld [vmem:[#allocation2 + $0x328] sm:$0xff]
    %v1719 = vld [vmem:[#allocation2 + $0x330] sm:$0xff]
    %v1720 = vld [vmem:[#allocation2 + $0x338] sm:$0xff]
    %v1721 = vld [vmem:[#allocation2 + $0x340] sm:$0xff]
    %v1722 = vld [vmem:[#allocation2 + $0x348] sm:$0xff]
    %v1723 = vld [vmem:[#allocation2 + $0x350] sm:$0xff]
    %v1724 = vld [vmem:[#allocation2 + $0x358] sm:$0xff]
    %v1725 = vld [vmem:[#allocation2 + $0x360] sm:$0xff]
    %v1726 = vld [vmem:[#allocation2 + $0x368] sm:$0xff]
    %v1727 = vld [vmem:[#allocation2 + $0x370] sm:$0xff]
    %v1728 = vld [vmem:[#allocation2 + $0x378] sm:$0xff]
    %v1729 = vld [vmem:[#allocation2 + $0x380] sm:$0xff]
    %v1730 = vld [vmem:[#allocation2 + $0x388] sm:$0xff]
    %v1731 = vld [vmem:[#allocation2 + $0x390] sm:$0xff]
    %v1732 = vld [vmem:[#allocation2 + $0x398] sm:$0xff]
    %v1733 = vld [vmem:[#allocation2 + $0x3a0] sm:$0xff]
    %v1734 = vld [vmem:[#allocation2 + $0x3a8] sm:$0xff]
    %v1735 = vld [vmem:[#allocation2 + $0x3b0] sm:$0xff]
    %v1736 = vld [vmem:[#allocation2 + $0x3b8] sm:$0xff]
    %v1737 = vld [vmem:[#allocation2 + $0x3c0] sm:$0xff]
    %v1738 = vld [vmem:[#allocation2 + $0x3c8] sm:$0xff]
    %v1739 = vld [vmem:[#allocation2 + $0x3d0] sm:$0xff]
    %v1740 = vld [vmem:[#allocation2 + $0x3d8] sm:$0xff]
    %v1741 = vld [vmem:[#allocation2 + $0x3e0] sm:$0xff]
    %v1742 = vld [vmem:[#allocation2 + $0x3e8] sm:$0xff]
    %v1743 = vld [vmem:[#allocation2 + $0x3f0] sm:$0xff]
    %v1744 = vld [vmem:[#allocation2 + $0x3f8] sm:$0xff]
    %v1745 = vld [vmem:[#allocation2 + $0x400] sm:$0xff]
    %v1746 = vld [vmem:[#allocation2 + $0x408] sm:$0xff]
    %v1747 = vld [vmem:[#allocation2 + $0x410] sm:$0xff]
    %v1748 = vld [vmem:[#allocation2 + $0x418] sm:$0xff]
    %v1749 = vld [vmem:[#allocation2 + $0x420] sm:$0xff]
    %v1750 = vld [vmem:[#allocation2 + $0x428] sm:$0xff]
    %v1751 = vld [vmem:[#allocation2 + $0x430] sm:$0xff]
    %v1752 = vld [vmem:[#allocation2 + $0x438] sm:$0xff]
    %v1753 = vld [vmem:[#allocation2 + $0x440] sm:$0xff]
    %v1754 = vld [vmem:[#allocation2 + $0x448] sm:$0xff]
    %v1755 = vld [vmem:[#allocation2 + $0x450] sm:$0xff]
    %v1756 = vld [vmem:[#allocation2 + $0x458] sm:$0xff]
    %v1757 = vld [vmem:[#allocation2 + $0x460] sm:$0xff]
    %v1758 = vld [vmem:[#allocation2 + $0x468] sm:$0xff]
    %v1759 = vld [vmem:[#allocation2 + $0x470] sm:$0xff]
    %v1760 = vld [vmem:[#allocation2 + $0x478] sm:$0xff]
    %v1761 = vld [vmem:[#allocation2 + $0x480] sm:$0xff]
    %v1762 = vld [vmem:[#allocation2 + $0x488] sm:$0xff]
    %v1763 = vld [vmem:[#allocation2 + $0x490] sm:$0xff]
    %v1764 = vld [vmem:[#allocation2 + $0x498] sm:$0xff]
    %v1765 = vld [vmem:[#allocation2 + $0x4a0] sm:$0xff]
    %v1766 = vld [vmem:[#allocation2 + $0x4a8] sm:$0xff]
    %v1767 = vld [vmem:[#allocation2 + $0x4b0] sm:$0xff]
    %v1768 = vld [vmem:[#allocation2 + $0x4b8] sm:$0xff]
    %v1769 = vld [vmem:[#allocation2 + $0x4c0] sm:$0xff]
    %v1770 = vld [vmem:[#allocation2 + $0x4c8] sm:$0xff]
    %v1771 = vld [vmem:[#allocation2 + $0x4d0] sm:$0xff]
    %v1772 = vld [vmem:[#allocation2 + $0x4d8] sm:$0xff]
    %v1773 = vld [vmem:[#allocation2 + $0x4e0] sm:$0xff]
    %v1774 = vld [vmem:[#allocation2 + $0x4e8] sm:$0xff]
    %v1775 = vld [vmem:[#allocation2 + $0x4f0] sm:$0xff]
    %v1776 = vld [vmem:[#allocation2 + $0x4f8] sm:$0xff]
    %v1777 = vld [vmem:[#allocation2 + $0x500] sm:$0xff]
    %v1778 = vld [vmem:[#allocation2 + $0x508] sm:$0xff]
    %v1779 = vld [vmem:[#allocation2 + $0x510] sm:$0xff]
    %v1780 = vld [vmem:[#allocation2 + $0x518] sm:$0xff]
    %v1781 = vld [vmem:[#allocation2 + $0x520] sm:$0xff]
    %v1782 = vld [vmem:[#allocation2 + $0x528] sm:$0xff]
    %v1783 = vld [vmem:[#allocation2 + $0x530] sm:$0xff]
    %v1784 = vld [vmem:[#allocation2 + $0x538] sm:$0xff]
    %v1785 = vld [vmem:[#allocation2 + $0x540] sm:$0xff]
    %v1786 = vld [vmem:[#allocation2 + $0x548] sm:$0xff]
    %v1787 = vld [vmem:[#allocation2 + $0x550] sm:$0xff]
    %v1788 = vld [vmem:[#allocation2 + $0x558] sm:$0xff]
    %v1789 = vld [vmem:[#allocation2 + $0x560] sm:$0xff]
    %v1790 = vld [vmem:[#allocation2 + $0x568] sm:$0xff]
    %v1791 = vld [vmem:[#allocation2 + $0x570] sm:$0xff]
    %v1792 = vld [vmem:[#allocation2 + $0x578] sm:$0xff]
    %v1793 = vld [vmem:[#allocation2 + $0x580] sm:$0xff]
    %v1794 = vld [vmem:[#allocation2 + $0x588] sm:$0xff]
    %v1795 = vld [vmem:[#allocation2 + $0x590] sm:$0xff]
    %v1796 = vld [vmem:[#allocation2 + $0x598] sm:$0xff]
    %v1797 = vld [vmem:[#allocation2 + $0x5a0] sm:$0xff]
    %v1798 = vld [vmem:[#allocation2 + $0x5a8] sm:$0xff]
    %v1799 = vld [vmem:[#allocation2 + $0x5b0] sm:$0xff]
    %v1800 = vld [vmem:[#allocation2 + $0x5b8] sm:$0xff]
    %v1801 = vld [vmem:[#allocation2 + $0x5c0] sm:$0xff]
    %v1802 = vld [vmem:[#allocation2 + $0x5c8] sm:$0xff]
    %v1803 = vld [vmem:[#allocation2 + $0x5d0] sm:$0xff]
    %v1804 = vld [vmem:[#allocation2 + $0x5d8] sm:$0xff]
    %v1805 = vld [vmem:[#allocation2 + $0x5e0] sm:$0xff]
    %v1806 = vld [vmem:[#allocation2 + $0x5e8] sm:$0xff]
    %v1807 = vld [vmem:[#allocation2 + $0x5f0] sm:$0xff]
    %v1808 = vld [vmem:[#allocation2 + $0x5f8] sm:$0xff]
    %v1809 = vld [vmem:[#allocation2 + $0x600] sm:$0xff]
    %v1810 = vld [vmem:[#allocation2 + $0x608] sm:$0xff]
    %v1811 = vld [vmem:[#allocation2 + $0x610] sm:$0xff]
    %v1812 = vld [vmem:[#allocation2 + $0x618] sm:$0xff]
    %v1813 = vld [vmem:[#allocation2 + $0x620] sm:$0xff]
    %v1814 = vld [vmem:[#allocation2 + $0x628] sm:$0xff]
    %v1815 = vld [vmem:[#allocation2 + $0x630] sm:$0xff]
    %v1816 = vld [vmem:[#allocation2 + $0x638] sm:$0xff]
    %v1817 = vld [vmem:[#allocation2 + $0x640] sm:$0xff]
    %v1818 = vld [vmem:[#allocation2 + $0x648] sm:$0xff]
    %v1819 = vld [vmem:[#allocation2 + $0x650] sm:$0xff]
    %v1820 = vld [vmem:[#allocation2 + $0x658] sm:$0xff]
    %v1821 = vld [vmem:[#allocation2 + $0x660] sm:$0xff]
    %v1822 = vld [vmem:[#allocation2 + $0x668] sm:$0xff]
    %v1823 = vld [vmem:[#allocation2 + $0x670] sm:$0xff]
    %v1824 = vld [vmem:[#allocation2 + $0x678] sm:$0xff]
    %v1825 = vld [vmem:[#allocation2 + $0x680] sm:$0xff]
    %v1826 = vld [vmem:[#allocation2 + $0x688] sm:$0xff]
    %v1827 = vld [vmem:[#allocation2 + $0x690] sm:$0xff]
    %v1828 = vld [vmem:[#allocation2 + $0x698] sm:$0xff]
    %v1829 = vld [vmem:[#allocation2 + $0x6a0] sm:$0xff]
    %v1830 = vld [vmem:[#allocation2 + $0x6a8] sm:$0xff]
    %v1831 = vld [vmem:[#allocation2 + $0x6b0] sm:$0xff]
    %v1832 = vld [vmem:[#allocation2 + $0x6b8] sm:$0xff]
    %v1833 = vld [vmem:[#allocation2 + $0x6c0] sm:$0xff]
    %v1834 = vld [vmem:[#allocation2 + $0x6c8] sm:$0xff]
    %v1835 = vld [vmem:[#allocation2 + $0x6d0] sm:$0xff]
    %v1836 = vld [vmem:[#allocation2 + $0x6d8] sm:$0xff]
    %v1837 = vld [vmem:[#allocation2 + $0x6e0] sm:$0xff]
    %v1838 = vld [vmem:[#allocation2 + $0x6e8] sm:$0xff]
    %v1839 = vld [vmem:[#allocation2 + $0x6f0] sm:$0xff]
    %v1840 = vld [vmem:[#allocation2 + $0x6f8] sm:$0xff]
    %v1841 = vld [vmem:[#allocation2 + $0x700] sm:$0xff]
    %v1842 = vld [vmem:[#allocation2 + $0x708] sm:$0xff]
    %v1843 = vld [vmem:[#allocation2 + $0x710] sm:$0xff]
    %v1844 = vld [vmem:[#allocation2 + $0x718] sm:$0xff]
    %v1845 = vld [vmem:[#allocation2 + $0x720] sm:$0xff]
    %v1846 = vld [vmem:[#allocation2 + $0x728] sm:$0xff]
    %v1847 = vld [vmem:[#allocation2 + $0x730] sm:$0xff]
    %v1848 = vld [vmem:[#allocation2 + $0x738] sm:$0xff]
    %v1849 = vld [vmem:[#allocation2 + $0x740] sm:$0xff]
    %v1850 = vld [vmem:[#allocation2 + $0x748] sm:$0xff]
    %v1851 = vld [vmem:[#allocation2 + $0x750] sm:$0xff]
    %v1852 = vld [vmem:[#allocation2 + $0x758] sm:$0xff]
    %v1853 = vld [vmem:[#allocation2 + $0x760] sm:$0xff]
    %v1854 = vld [vmem:[#allocation2 + $0x768] sm:$0xff]
    %v1855 = vld [vmem:[#allocation2 + $0x770] sm:$0xff]
    %v1856 = vld [vmem:[#allocation2 + $0x778] sm:$0xff]
    %v1857 = vld [vmem:[#allocation2 + $0x780] sm:$0xff]
    %v1858 = vld [vmem:[#allocation2 + $0x788] sm:$0xff]
    %v1859 = vld [vmem:[#allocation2 + $0x790] sm:$0xff]
    %v1860 = vld [vmem:[#allocation2 + $0x798] sm:$0xff]
    %v1861 = vld [vmem:[#allocation2 + $0x7a0] sm:$0xff]
    %v1862 = vld [vmem:[#allocation2 + $0x7a8] sm:$0xff]
    %v1863 = vld [vmem:[#allocation2 + $0x7b0] sm:$0xff]
    %v1864 = vld [vmem:[#allocation2 + $0x7b8] sm:$0xff]
    %v1865 = vld [vmem:[#allocation2 + $0x7c0] sm:$0xff]
    %v1866 = vld [vmem:[#allocation2 + $0x7c8] sm:$0xff]
    %v1867 = vld [vmem:[#allocation2 + $0x7d0] sm:$0xff]
    %v1868 = vld [vmem:[#allocation2 + $0x7d8] sm:$0xff]
    %v1869 = vld [vmem:[#allocation2 + $0x7e0] sm:$0xff]
    %v1870 = vld [vmem:[#allocation2 + $0x7e8] sm:$0xff]
    %v1871 = vld [vmem:[#allocation2 + $0x7f0] sm:$0xff]
    %v1872 = vld [vmem:[#allocation2 + $0x7f8] sm:$0xff]
    %v1873 = vld [vmem:[#allocation13 + $0x13] sm:$0xff]
    %v1874 = vpack.c.bf16 %v1585, %v1581
    %v1875 = vpack.c.bf16 %v1586, %v1582
    %v1876 = vpack.c.bf16 %v1587, %v1583
    %v1877 = vpack.c.bf16 %v1588, %v1584
    %v1878 = vpack.c.bf16 %v1593, %v1589
    %v1879 = vpack.c.bf16 %v1594, %v1590
    %v1880 = vpack.c.bf16 %v1595, %v1591
    %v1881 = vpack.c.bf16 %v1596, %v1592
    %v1882 = vpack.c.bf16 %v1601, %v1597
    %v1883 = vpack.c.bf16 %v1602, %v1598
    %v1884 = vpack.c.bf16 %v1603, %v1599
    %v1885 = vpack.c.bf16 %v1604, %v1600
    %v1886 = vpack.c.bf16 %v1609, %v1605
    %v1887 = vpack.c.bf16 %v1610, %v1606
    %v1888 = vpack.c.bf16 %v1611, %v1607
    %v1889 = vpack.c.bf16 %v1612, %v1608
    %v1891 = vperm.slane %v1873, 0
    %v1892 = vperm.slane %v1873, 1
    %v1893 = vperm.slane %v1873, 2
    %v1894 = vperm.slane %v1873, 3
    %v1895 = vperm.slane %v1873, 4
    %v1896 = vperm.slane %v1873, 5
    %v1897 = vperm.slane %v1873, 6
    %v1898 = vperm.slane %v1873, 7
    %v2163 = vunpack.c.l.b16 %v1617
    %v2164 = vunpack.c.h.b16 %v1617
    %v2165 = vunpack.c.l.b16 %v1618
    %v2166 = vunpack.c.h.b16 %v1618
    %v2167 = vunpack.c.l.b16 %v1619
    %v2168 = vunpack.c.h.b16 %v1619
    %v2169 = vunpack.c.l.b16 %v1620
    %v2170 = vunpack.c.h.b16 %v1620
    %v2171 = vunpack.c.l.b16 %v1621
    %v2172 = vunpack.c.h.b16 %v1621
    %v2173 = vunpack.c.l.b16 %v1622
    %v2174 = vunpack.c.h.b16 %v1622
    %v2175 = vunpack.c.l.b16 %v1623
    %v2176 = vunpack.c.h.b16 %v1623
    %v2177 = vunpack.c.l.b16 %v1624
    %v2178 = vunpack.c.h.b16 %v1624
    %v2179 = vunpack.c.l.b16 %v1625
    %v2180 = vunpack.c.h.b16 %v1625
    %v2181 = vunpack.c.l.b16 %v1626
    %v2182 = vunpack.c.h.b16 %v1626
    %v2183 = vunpack.c.l.b16 %v1627
    %v2184 = vunpack.c.h.b16 %v1627
    %v2185 = vunpack.c.l.b16 %v1628
    %v2186 = vunpack.c.h.b16 %v1628
    %v2187 = vunpack.c.l.b16 %v1629
    %v2188 = vunpack.c.h.b16 %v1629
    %v2189 = vunpack.c.l.b16 %v1630
    %v2190 = vunpack.c.h.b16 %v1630
    %v2191 = vunpack.c.l.b16 %v1631
    %v2192 = vunpack.c.h.b16 %v1631
    %v2193 = vunpack.c.l.b16 %v1632
    %v2194 = vunpack.c.h.b16 %v1632
    %v2195 = vunpack.c.l.b16 %v1633
    %v2196 = vunpack.c.h.b16 %v1633
    %v2197 = vunpack.c.l.b16 %v1634
    %v2198 = vunpack.c.h.b16 %v1634
    %v2199 = vunpack.c.l.b16 %v1635
    %v2200 = vunpack.c.h.b16 %v1635
    %v2201 = vunpack.c.l.b16 %v1636
    %v2202 = vunpack.c.h.b16 %v1636
    %v2203 = vunpack.c.l.b16 %v1637
    %v2204 = vunpack.c.h.b16 %v1637
    %v2205 = vunpack.c.l.b16 %v1638
    %v2206 = vunpack.c.h.b16 %v1638
    %v2207 = vunpack.c.l.b16 %v1639
    %v2208 = vunpack.c.h.b16 %v1639
    %v2209 = vunpack.c.l.b16 %v1640
    %v2210 = vunpack.c.h.b16 %v1640
    %v2211 = vunpack.c.l.b16 %v1641
    %v2212 = vunpack.c.h.b16 %v1641
    %v2213 = vunpack.c.l.b16 %v1642
    %v2214 = vunpack.c.h.b16 %v1642
    %v2215 = vunpack.c.l.b16 %v1643
    %v2216 = vunpack.c.h.b16 %v1643
    %v2217 = vunpack.c.l.b16 %v1644
    %v2218 = vunpack.c.h.b16 %v1644
    %v2219 = vunpack.c.l.b16 %v1645
    %v2220 = vunpack.c.h.b16 %v1645
    %v2221 = vunpack.c.l.b16 %v1646
    %v2222 = vunpack.c.h.b16 %v1646
    %v2223 = vunpack.c.l.b16 %v1647
    %v2224 = vunpack.c.h.b16 %v1647
    %v2225 = vunpack.c.l.b16 %v1648
    %v2226 = vunpack.c.h.b16 %v1648
    %v2227 = vunpack.c.l.b16 %v1649
    %v2228 = vunpack.c.h.b16 %v1649
    %v2229 = vunpack.c.l.b16 %v1650
    %v2230 = vunpack.c.h.b16 %v1650
    %v2231 = vunpack.c.l.b16 %v1651
    %v2232 = vunpack.c.h.b16 %v1651
    %v2233 = vunpack.c.l.b16 %v1652
    %v2234 = vunpack.c.h.b16 %v1652
    %v2235 = vunpack.c.l.b16 %v1653
    %v2236 = vunpack.c.h.b16 %v1653
    %v2237 = vunpack.c.l.b16 %v1654
    %v2238 = vunpack.c.h.b16 %v1654
    %v2239 = vunpack.c.l.b16 %v1655
    %v2240 = vunpack.c.h.b16 %v1655
    %v2241 = vunpack.c.l.b16 %v1656
    %v2242 = vunpack.c.h.b16 %v1656
    %v2243 = vunpack.c.l.b16 %v1657
    %v2244 = vunpack.c.h.b16 %v1657
    %v2245 = vunpack.c.l.b16 %v1658
    %v2246 = vunpack.c.h.b16 %v1658
    %v2247 = vunpack.c.l.b16 %v1659
    %v2248 = vunpack.c.h.b16 %v1659
    %v2249 = vunpack.c.l.b16 %v1660
    %v2250 = vunpack.c.h.b16 %v1660
    %v2251 = vunpack.c.l.b16 %v1661
    %v2252 = vunpack.c.h.b16 %v1661
    %v2253 = vunpack.c.l.b16 %v1662
    %v2254 = vunpack.c.h.b16 %v1662
    %v2255 = vunpack.c.l.b16 %v1663
    %v2256 = vunpack.c.h.b16 %v1663
    %v2257 = vunpack.c.l.b16 %v1664
    %v2258 = vunpack.c.h.b16 %v1664
    %v2259 = vunpack.c.l.b16 %v1665
    %v2260 = vunpack.c.h.b16 %v1665
    %v2261 = vunpack.c.l.b16 %v1666
    %v2262 = vunpack.c.h.b16 %v1666
    %v2263 = vunpack.c.l.b16 %v1667
    %v2264 = vunpack.c.h.b16 %v1667
    %v2265 = vunpack.c.l.b16 %v1668
    %v2266 = vunpack.c.h.b16 %v1668
    %v2267 = vunpack.c.l.b16 %v1669
    %v2268 = vunpack.c.h.b16 %v1669
    %v2269 = vunpack.c.l.b16 %v1670
    %v2270 = vunpack.c.h.b16 %v1670
    %v2271 = vunpack.c.l.b16 %v1671
    %v2272 = vunpack.c.h.b16 %v1671
    %v2273 = vunpack.c.l.b16 %v1672
    %v2274 = vunpack.c.h.b16 %v1672
    %v2275 = vunpack.c.l.b16 %v1673
    %v2276 = vunpack.c.h.b16 %v1673
    %v2277 = vunpack.c.l.b16 %v1674
    %v2278 = vunpack.c.h.b16 %v1674
    %v2279 = vunpack.c.l.b16 %v1675
    %v2280 = vunpack.c.h.b16 %v1675
    %v2281 = vunpack.c.l.b16 %v1676
    %v2282 = vunpack.c.h.b16 %v1676
    %v2283 = vunpack.c.l.b16 %v1677
    %v2284 = vunpack.c.h.b16 %v1677
    %v2285 = vunpack.c.l.b16 %v1678
    %v2286 = vunpack.c.h.b16 %v1678
    %v2287 = vunpack.c.l.b16 %v1679
    %v2288 = vunpack.c.h.b16 %v1679
    %v2289 = vunpack.c.l.b16 %v1680
    %v2290 = vunpack.c.h.b16 %v1680
    %v2291 = vunpack.c.l.b16 %v1681
    %v2292 = vunpack.c.h.b16 %v1681
    %v2293 = vunpack.c.l.b16 %v1682
    %v2294 = vunpack.c.h.b16 %v1682
    %v2295 = vunpack.c.l.b16 %v1683
    %v2296 = vunpack.c.h.b16 %v1683
    %v2297 = vunpack.c.l.b16 %v1684
    %v2298 = vunpack.c.h.b16 %v1684
    %v2299 = vunpack.c.l.b16 %v1685
    %v2300 = vunpack.c.h.b16 %v1685
    %v2301 = vunpack.c.l.b16 %v1686
    %v2302 = vunpack.c.h.b16 %v1686
    %v2303 = vunpack.c.l.b16 %v1687
    %v2304 = vunpack.c.h.b16 %v1687
    %v2305 = vunpack.c.l.b16 %v1688
    %v2306 = vunpack.c.h.b16 %v1688
    %v2307 = vunpack.c.l.b16 %v1689
    %v2308 = vunpack.c.h.b16 %v1689
    %v2309 = vunpack.c.l.b16 %v1690
    %v2310 = vunpack.c.h.b16 %v1690
    %v2311 = vunpack.c.l.b16 %v1691
    %v2312 = vunpack.c.h.b16 %v1691
    %v2313 = vunpack.c.l.b16 %v1692
    %v2314 = vunpack.c.h.b16 %v1692
    %v2315 = vunpack.c.l.b16 %v1693
    %v2316 = vunpack.c.h.b16 %v1693
    %v2317 = vunpack.c.l.b16 %v1694
    %v2318 = vunpack.c.h.b16 %v1694
    %v2319 = vunpack.c.l.b16 %v1695
    %v2320 = vunpack.c.h.b16 %v1695
    %v2321 = vunpack.c.l.b16 %v1696
    %v2322 = vunpack.c.h.b16 %v1696
    %v2323 = vunpack.c.l.b16 %v1697
    %v2324 = vunpack.c.h.b16 %v1697
    %v2325 = vunpack.c.l.b16 %v1698
    %v2326 = vunpack.c.h.b16 %v1698
    %v2327 = vunpack.c.l.b16 %v1699
    %v2328 = vunpack.c.h.b16 %v1699
    %v2329 = vunpack.c.l.b16 %v1700
    %v2330 = vunpack.c.h.b16 %v1700
    %v2331 = vunpack.c.l.b16 %v1701
    %v2332 = vunpack.c.h.b16 %v1701
    %v2333 = vunpack.c.l.b16 %v1702
    %v2334 = vunpack.c.h.b16 %v1702
    %v2335 = vunpack.c.l.b16 %v1703
    %v2336 = vunpack.c.h.b16 %v1703
    %v2337 = vunpack.c.l.b16 %v1704
    %v2338 = vunpack.c.h.b16 %v1704
    %v2339 = vunpack.c.l.b16 %v1705
    %v2340 = vunpack.c.h.b16 %v1705
    %v2341 = vunpack.c.l.b16 %v1706
    %v2342 = vunpack.c.h.b16 %v1706
    %v2343 = vunpack.c.l.b16 %v1707
    %v2344 = vunpack.c.h.b16 %v1707
    %v2345 = vunpack.c.l.b16 %v1708
    %v2346 = vunpack.c.h.b16 %v1708
    %v2347 = vunpack.c.l.b16 %v1709
    %v2348 = vunpack.c.h.b16 %v1709
    %v2349 = vunpack.c.l.b16 %v1710
    %v2350 = vunpack.c.h.b16 %v1710
    %v2351 = vunpack.c.l.b16 %v1711
    %v2352 = vunpack.c.h.b16 %v1711
    %v2353 = vunpack.c.l.b16 %v1712
    %v2354 = vunpack.c.h.b16 %v1712
    %v2355 = vunpack.c.l.b16 %v1713
    %v2356 = vunpack.c.h.b16 %v1713
    %v2357 = vunpack.c.l.b16 %v1714
    %v2358 = vunpack.c.h.b16 %v1714
    %v2359 = vunpack.c.l.b16 %v1715
    %v2360 = vunpack.c.h.b16 %v1715
    %v2361 = vunpack.c.l.b16 %v1716
    %v2362 = vunpack.c.h.b16 %v1716
    %v2363 = vunpack.c.l.b16 %v1717
    %v2364 = vunpack.c.h.b16 %v1717
    %v2365 = vunpack.c.l.b16 %v1718
    %v2366 = vunpack.c.h.b16 %v1718
    %v2367 = vunpack.c.l.b16 %v1719
    %v2368 = vunpack.c.h.b16 %v1719
    %v2369 = vunpack.c.l.b16 %v1720
    %v2370 = vunpack.c.h.b16 %v1720
    %v2371 = vunpack.c.l.b16 %v1721
    %v2372 = vunpack.c.h.b16 %v1721
    %v2373 = vunpack.c.l.b16 %v1722
    %v2374 = vunpack.c.h.b16 %v1722
    %v2375 = vunpack.c.l.b16 %v1723
    %v2376 = vunpack.c.h.b16 %v1723
    %v2377 = vunpack.c.l.b16 %v1724
    %v2378 = vunpack.c.h.b16 %v1724
    %v2379 = vunpack.c.l.b16 %v1725
    %v2380 = vunpack.c.h.b16 %v1725
    %v2381 = vunpack.c.l.b16 %v1726
    %v2382 = vunpack.c.h.b16 %v1726
    %v2383 = vunpack.c.l.b16 %v1727
    %v2384 = vunpack.c.h.b16 %v1727
    %v2385 = vunpack.c.l.b16 %v1728
    %v2386 = vunpack.c.h.b16 %v1728
    %v2387 = vunpack.c.l.b16 %v1729
    %v2388 = vunpack.c.h.b16 %v1729
    %v2389 = vunpack.c.l.b16 %v1730
    %v2390 = vunpack.c.h.b16 %v1730
    %v2391 = vunpack.c.l.b16 %v1731
    %v2392 = vunpack.c.h.b16 %v1731
    %v2393 = vunpack.c.l.b16 %v1732
    %v2394 = vunpack.c.h.b16 %v1732
    %v2395 = vunpack.c.l.b16 %v1733
    %v2396 = vunpack.c.h.b16 %v1733
    %v2397 = vunpack.c.l.b16 %v1734
    %v2398 = vunpack.c.h.b16 %v1734
    %v2399 = vunpack.c.l.b16 %v1735
    %v2400 = vunpack.c.h.b16 %v1735
    %v2401 = vunpack.c.l.b16 %v1736
    %v2402 = vunpack.c.h.b16 %v1736
    %v2403 = vunpack.c.l.b16 %v1737
    %v2404 = vunpack.c.h.b16 %v1737
    %v2405 = vunpack.c.l.b16 %v1738
    %v2406 = vunpack.c.h.b16 %v1738
    %v2407 = vunpack.c.l.b16 %v1739
    %v2408 = vunpack.c.h.b16 %v1739
    %v2409 = vunpack.c.l.b16 %v1740
    %v2410 = vunpack.c.h.b16 %v1740
    %v2411 = vunpack.c.l.b16 %v1741
    %v2412 = vunpack.c.h.b16 %v1741
    %v2413 = vunpack.c.l.b16 %v1742
    %v2414 = vunpack.c.h.b16 %v1742
    %v2415 = vunpack.c.l.b16 %v1743
    %v2416 = vunpack.c.h.b16 %v1743
    %v2417 = vunpack.c.l.b16 %v1744
    %v2418 = vunpack.c.h.b16 %v1744
    %v2419 = vunpack.c.l.b16 %v1745
    %v2420 = vunpack.c.h.b16 %v1745
    %v2421 = vunpack.c.l.b16 %v1746
    %v2422 = vunpack.c.h.b16 %v1746
    %v2423 = vunpack.c.l.b16 %v1747
    %v2424 = vunpack.c.h.b16 %v1747
    %v2425 = vunpack.c.l.b16 %v1748
    %v2426 = vunpack.c.h.b16 %v1748
    %v2427 = vunpack.c.l.b16 %v1749
    %v2428 = vunpack.c.h.b16 %v1749
    %v2429 = vunpack.c.l.b16 %v1750
    %v2430 = vunpack.c.h.b16 %v1750
    %v2431 = vunpack.c.l.b16 %v1751
    %v2432 = vunpack.c.h.b16 %v1751
    %v2433 = vunpack.c.l.b16 %v1752
    %v2434 = vunpack.c.h.b16 %v1752
    %v2435 = vunpack.c.l.b16 %v1753
    %v2436 = vunpack.c.h.b16 %v1753
    %v2437 = vunpack.c.l.b16 %v1754
    %v2438 = vunpack.c.h.b16 %v1754
    %v2439 = vunpack.c.l.b16 %v1755
    %v2440 = vunpack.c.h.b16 %v1755
    %v2441 = vunpack.c.l.b16 %v1756
    %v2442 = vunpack.c.h.b16 %v1756
    %v2443 = vunpack.c.l.b16 %v1757
    %v2444 = vunpack.c.h.b16 %v1757
    %v2445 = vunpack.c.l.b16 %v1758
    %v2446 = vunpack.c.h.b16 %v1758
    %v2447 = vunpack.c.l.b16 %v1759
    %v2448 = vunpack.c.h.b16 %v1759
    %v2449 = vunpack.c.l.b16 %v1760
    %v2450 = vunpack.c.h.b16 %v1760
    %v2451 = vunpack.c.l.b16 %v1761
    %v2452 = vunpack.c.h.b16 %v1761
    %v2453 = vunpack.c.l.b16 %v1762
    %v2454 = vunpack.c.h.b16 %v1762
    %v2455 = vunpack.c.l.b16 %v1763
    %v2456 = vunpack.c.h.b16 %v1763
    %v2457 = vunpack.c.l.b16 %v1764
    %v2458 = vunpack.c.h.b16 %v1764
    %v2459 = vunpack.c.l.b16 %v1765
    %v2460 = vunpack.c.h.b16 %v1765
    %v2461 = vunpack.c.l.b16 %v1766
    %v2462 = vunpack.c.h.b16 %v1766
    %v2463 = vunpack.c.l.b16 %v1767
    %v2464 = vunpack.c.h.b16 %v1767
    %v2465 = vunpack.c.l.b16 %v1768
    %v2466 = vunpack.c.h.b16 %v1768
    %v2467 = vunpack.c.l.b16 %v1769
    %v2468 = vunpack.c.h.b16 %v1769
    %v2469 = vunpack.c.l.b16 %v1770
    %v2470 = vunpack.c.h.b16 %v1770
    %v2471 = vunpack.c.l.b16 %v1771
    %v2472 = vunpack.c.h.b16 %v1771
    %v2473 = vunpack.c.l.b16 %v1772
    %v2474 = vunpack.c.h.b16 %v1772
    %v2475 = vunpack.c.l.b16 %v1773
    %v2476 = vunpack.c.h.b16 %v1773
    %v2477 = vunpack.c.l.b16 %v1774
    %v2478 = vunpack.c.h.b16 %v1774
    %v2479 = vunpack.c.l.b16 %v1775
    %v2480 = vunpack.c.h.b16 %v1775
    %v2481 = vunpack.c.l.b16 %v1776
    %v2482 = vunpack.c.h.b16 %v1776
    %v2483 = vunpack.c.l.b16 %v1777
    %v2484 = vunpack.c.h.b16 %v1777
    %v2485 = vunpack.c.l.b16 %v1778
    %v2486 = vunpack.c.h.b16 %v1778
    %v2487 = vunpack.c.l.b16 %v1779
    %v2488 = vunpack.c.h.b16 %v1779
    %v2489 = vunpack.c.l.b16 %v1780
    %v2490 = vunpack.c.h.b16 %v1780
    %v2491 = vunpack.c.l.b16 %v1781
    %v2492 = vunpack.c.h.b16 %v1781
    %v2493 = vunpack.c.l.b16 %v1782
    %v2494 = vunpack.c.h.b16 %v1782
    %v2495 = vunpack.c.l.b16 %v1783
    %v2496 = vunpack.c.h.b16 %v1783
    %v2497 = vunpack.c.l.b16 %v1784
    %v2498 = vunpack.c.h.b16 %v1784
    %v2499 = vunpack.c.l.b16 %v1785
    %v2500 = vunpack.c.h.b16 %v1785
    %v2501 = vunpack.c.l.b16 %v1786
    %v2502 = vunpack.c.h.b16 %v1786
    %v2503 = vunpack.c.l.b16 %v1787
    %v2504 = vunpack.c.h.b16 %v1787
    %v2505 = vunpack.c.l.b16 %v1788
    %v2506 = vunpack.c.h.b16 %v1788
    %v2507 = vunpack.c.l.b16 %v1789
    %v2508 = vunpack.c.h.b16 %v1789
    %v2509 = vunpack.c.l.b16 %v1790
    %v2510 = vunpack.c.h.b16 %v1790
    %v2511 = vunpack.c.l.b16 %v1791
    %v2512 = vunpack.c.h.b16 %v1791
    %v2513 = vunpack.c.l.b16 %v1792
    %v2514 = vunpack.c.h.b16 %v1792
    %v2515 = vunpack.c.l.b16 %v1793
    %v2516 = vunpack.c.h.b16 %v1793
    %v2517 = vunpack.c.l.b16 %v1794
    %v2518 = vunpack.c.h.b16 %v1794
    %v2519 = vunpack.c.l.b16 %v1795
    %v2520 = vunpack.c.h.b16 %v1795
    %v2521 = vunpack.c.l.b16 %v1796
    %v2522 = vunpack.c.h.b16 %v1796
    %v2523 = vunpack.c.l.b16 %v1797
    %v2524 = vunpack.c.h.b16 %v1797
    %v2525 = vunpack.c.l.b16 %v1798
    %v2526 = vunpack.c.h.b16 %v1798
    %v2527 = vunpack.c.l.b16 %v1799
    %v2528 = vunpack.c.h.b16 %v1799
    %v2529 = vunpack.c.l.b16 %v1800
    %v2530 = vunpack.c.h.b16 %v1800
    %v2531 = vunpack.c.l.b16 %v1801
    %v2532 = vunpack.c.h.b16 %v1801
    %v2533 = vunpack.c.l.b16 %v1802
    %v2534 = vunpack.c.h.b16 %v1802
    %v2535 = vunpack.c.l.b16 %v1803
    %v2536 = vunpack.c.h.b16 %v1803
    %v2537 = vunpack.c.l.b16 %v1804
    %v2538 = vunpack.c.h.b16 %v1804
    %v2539 = vunpack.c.l.b16 %v1805
    %v2540 = vunpack.c.h.b16 %v1805
    %v2541 = vunpack.c.l.b16 %v1806
    %v2542 = vunpack.c.h.b16 %v1806
    %v2543 = vunpack.c.l.b16 %v1807
    %v2544 = vunpack.c.h.b16 %v1807
    %v2545 = vunpack.c.l.b16 %v1808
    %v2546 = vunpack.c.h.b16 %v1808
    %v2547 = vunpack.c.l.b16 %v1809
    %v2548 = vunpack.c.h.b16 %v1809
    %v2549 = vunpack.c.l.b16 %v1810
    %v2550 = vunpack.c.h.b16 %v1810
    %v2551 = vunpack.c.l.b16 %v1811
    %v2552 = vunpack.c.h.b16 %v1811
    %v2553 = vunpack.c.l.b16 %v1812
    %v2554 = vunpack.c.h.b16 %v1812
    %v2555 = vunpack.c.l.b16 %v1813
    %v2556 = vunpack.c.h.b16 %v1813
    %v2557 = vunpack.c.l.b16 %v1814
    %v2558 = vunpack.c.h.b16 %v1814
    %v2559 = vunpack.c.l.b16 %v1815
    %v2560 = vunpack.c.h.b16 %v1815
    %v2561 = vunpack.c.l.b16 %v1816
    %v2562 = vunpack.c.h.b16 %v1816
    %v2563 = vunpack.c.l.b16 %v1817
    %v2564 = vunpack.c.h.b16 %v1817
    %v2565 = vunpack.c.l.b16 %v1818
    %v2566 = vunpack.c.h.b16 %v1818
    %v2567 = vunpack.c.l.b16 %v1819
    %v2568 = vunpack.c.h.b16 %v1819
    %v2569 = vunpack.c.l.b16 %v1820
    %v2570 = vunpack.c.h.b16 %v1820
    %v2571 = vunpack.c.l.b16 %v1821
    %v2572 = vunpack.c.h.b16 %v1821
    %v2573 = vunpack.c.l.b16 %v1822
    %v2574 = vunpack.c.h.b16 %v1822
    %v2575 = vunpack.c.l.b16 %v1823
    %v2576 = vunpack.c.h.b16 %v1823
    %v2577 = vunpack.c.l.b16 %v1824
    %v2578 = vunpack.c.h.b16 %v1824
    %v2579 = vunpack.c.l.b16 %v1825
    %v2580 = vunpack.c.h.b16 %v1825
    %v2581 = vunpack.c.l.b16 %v1826
    %v2582 = vunpack.c.h.b16 %v1826
    %v2583 = vunpack.c.l.b16 %v1827
    %v2584 = vunpack.c.h.b16 %v1827
    %v2585 = vunpack.c.l.b16 %v1828
    %v2586 = vunpack.c.h.b16 %v1828
    %v2587 = vunpack.c.l.b16 %v1829
    %v2588 = vunpack.c.h.b16 %v1829
    %v2589 = vunpack.c.l.b16 %v1830
    %v2590 = vunpack.c.h.b16 %v1830
    %v2591 = vunpack.c.l.b16 %v1831
    %v2592 = vunpack.c.h.b16 %v1831
    %v2593 = vunpack.c.l.b16 %v1832
    %v2594 = vunpack.c.h.b16 %v1832
    %v2595 = vunpack.c.l.b16 %v1833
    %v2596 = vunpack.c.h.b16 %v1833
    %v2597 = vunpack.c.l.b16 %v1834
    %v2598 = vunpack.c.h.b16 %v1834
    %v2599 = vunpack.c.l.b16 %v1835
    %v2600 = vunpack.c.h.b16 %v1835
    %v2601 = vunpack.c.l.b16 %v1836
    %v2602 = vunpack.c.h.b16 %v1836
    %v2603 = vunpack.c.l.b16 %v1837
    %v2604 = vunpack.c.h.b16 %v1837
    %v2605 = vunpack.c.l.b16 %v1838
    %v2606 = vunpack.c.h.b16 %v1838
    %v2607 = vunpack.c.l.b16 %v1839
    %v2608 = vunpack.c.h.b16 %v1839
    %v2609 = vunpack.c.l.b16 %v1840
    %v2610 = vunpack.c.h.b16 %v1840
    %v2611 = vunpack.c.l.b16 %v1841
    %v2612 = vunpack.c.h.b16 %v1841
    %v2613 = vunpack.c.l.b16 %v1842
    %v2614 = vunpack.c.h.b16 %v1842
    %v2615 = vunpack.c.l.b16 %v1843
    %v2616 = vunpack.c.h.b16 %v1843
    %v2617 = vunpack.c.l.b16 %v1844
    %v2618 = vunpack.c.h.b16 %v1844
    %v2619 = vunpack.c.l.b16 %v1845
    %v2620 = vunpack.c.h.b16 %v1845
    %v2621 = vunpack.c.l.b16 %v1846
    %v2622 = vunpack.c.h.b16 %v1846
    %v2623 = vunpack.c.l.b16 %v1847
    %v2624 = vunpack.c.h.b16 %v1847
    %v2625 = vunpack.c.l.b16 %v1848
    %v2626 = vunpack.c.h.b16 %v1848
    %v2627 = vunpack.c.l.b16 %v1849
    %v2628 = vunpack.c.h.b16 %v1849
    %v2629 = vunpack.c.l.b16 %v1850
    %v2630 = vunpack.c.h.b16 %v1850
    %v2631 = vunpack.c.l.b16 %v1851
    %v2632 = vunpack.c.h.b16 %v1851
    %v2633 = vunpack.c.l.b16 %v1852
    %v2634 = vunpack.c.h.b16 %v1852
    %v2635 = vunpack.c.l.b16 %v1853
    %v2636 = vunpack.c.h.b16 %v1853
    %v2637 = vunpack.c.l.b16 %v1854
    %v2638 = vunpack.c.h.b16 %v1854
    %v2639 = vunpack.c.l.b16 %v1855
    %v2640 = vunpack.c.h.b16 %v1855
    %v2641 = vunpack.c.l.b16 %v1856
    %v2642 = vunpack.c.h.b16 %v1856
    %v2643 = vunpack.c.l.b16 %v1857
    %v2644 = vunpack.c.h.b16 %v1857
    %v2645 = vunpack.c.l.b16 %v1858
    %v2646 = vunpack.c.h.b16 %v1858
    %v2647 = vunpack.c.l.b16 %v1859
    %v2648 = vunpack.c.h.b16 %v1859
    %v2649 = vunpack.c.l.b16 %v1860
    %v2650 = vunpack.c.h.b16 %v1860
    %v2651 = vunpack.c.l.b16 %v1861
    %v2652 = vunpack.c.h.b16 %v1861
    %v2653 = vunpack.c.l.b16 %v1862
    %v2654 = vunpack.c.h.b16 %v1862
    %v2655 = vunpack.c.l.b16 %v1863
    %v2656 = vunpack.c.h.b16 %v1863
    %v2657 = vunpack.c.l.b16 %v1864
    %v2658 = vunpack.c.h.b16 %v1864
    %v2659 = vunpack.c.l.b16 %v1865
    %v2660 = vunpack.c.h.b16 %v1865
    %v2661 = vunpack.c.l.b16 %v1866
    %v2662 = vunpack.c.h.b16 %v1866
    %v2663 = vunpack.c.l.b16 %v1867
    %v2664 = vunpack.c.h.b16 %v1867
    %v2665 = vunpack.c.l.b16 %v1868
    %v2666 = vunpack.c.h.b16 %v1868
    %v2667 = vunpack.c.l.b16 %v1869
    %v2668 = vunpack.c.h.b16 %v1869
    %v2669 = vunpack.c.l.b16 %v1870
    %v2670 = vunpack.c.h.b16 %v1870
    %v2671 = vunpack.c.l.b16 %v1871
    %v2672 = vunpack.c.h.b16 %v1871
    %v2673 = vunpack.c.l.b16 %v1872
    %v2674 = vunpack.c.h.b16 %v1872
    %v2675 = vpack.c.b16 %v2171, %v2163
    %v2676 = vpack.c.b16 %v2172, %v2164
    %v2677 = vpack.c.b16 %v2173, %v2165
    %v2678 = vpack.c.b16 %v2174, %v2166
    %v2679 = vpack.c.b16 %v2175, %v2167
    %v2680 = vpack.c.b16 %v2176, %v2168
    %v2681 = vpack.c.b16 %v2177, %v2169
    %v2682 = vpack.c.b16 %v2178, %v2170
    %v2683 = vpack.c.b16 %v2187, %v2179
    %v2684 = vpack.c.b16 %v2188, %v2180
    %v2685 = vpack.c.b16 %v2189, %v2181
    %v2686 = vpack.c.b16 %v2190, %v2182
    %v2687 = vpack.c.b16 %v2191, %v2183
    %v2688 = vpack.c.b16 %v2192, %v2184
    %v2689 = vpack.c.b16 %v2193, %v2185
    %v2690 = vpack.c.b16 %v2194, %v2186
    %v2691 = vpack.c.b16 %v2203, %v2195
    %v2692 = vpack.c.b16 %v2204, %v2196
    %v2693 = vpack.c.b16 %v2205, %v2197
    %v2694 = vpack.c.b16 %v2206, %v2198
    %v2695 = vpack.c.b16 %v2207, %v2199
    %v2696 = vpack.c.b16 %v2208, %v2200
    %v2697 = vpack.c.b16 %v2209, %v2201
    %v2698 = vpack.c.b16 %v2210, %v2202
    %v2699 = vpack.c.b16 %v2219, %v2211
    %v2700 = vpack.c.b16 %v2220, %v2212
    %v2701 = vpack.c.b16 %v2221, %v2213
    %v2702 = vpack.c.b16 %v2222, %v2214
    %v2703 = vpack.c.b16 %v2223, %v2215
    %v2704 = vpack.c.b16 %v2224, %v2216
    %v2705 = vpack.c.b16 %v2225, %v2217
    %v2706 = vpack.c.b16 %v2226, %v2218
    %v2707 = vpack.c.b16 %v2235, %v2227
    %v2708 = vpack.c.b16 %v2236, %v2228
    %v2709 = vpack.c.b16 %v2237, %v2229
    %v2710 = vpack.c.b16 %v2238, %v2230
    %v2711 = vpack.c.b16 %v2239, %v2231
    %v2712 = vpack.c.b16 %v2240, %v2232
    %v2713 = vpack.c.b16 %v2241, %v2233
    %v2714 = vpack.c.b16 %v2242, %v2234
    %v2715 = vpack.c.b16 %v2251, %v2243
    %v2716 = vpack.c.b16 %v2252, %v2244
    %v2717 = vpack.c.b16 %v2253, %v2245
    %v2718 = vpack.c.b16 %v2254, %v2246
    %v2719 = vpack.c.b16 %v2255, %v2247
    %v2720 = vpack.c.b16 %v2256, %v2248
    %v2721 = vpack.c.b16 %v2257, %v2249
    %v2722 = vpack.c.b16 %v2258, %v2250
    %v2723 = vpack.c.b16 %v2267, %v2259
    %v2724 = vpack.c.b16 %v2268, %v2260
    %v2725 = vpack.c.b16 %v2269, %v2261
    %v2726 = vpack.c.b16 %v2270, %v2262
    %v2727 = vpack.c.b16 %v2271, %v2263
    %v2728 = vpack.c.b16 %v2272, %v2264
    %v2729 = vpack.c.b16 %v2273, %v2265
    %v2730 = vpack.c.b16 %v2274, %v2266
    %v2731 = vpack.c.b16 %v2283, %v2275
    %v2732 = vpack.c.b16 %v2284, %v2276
    %v2733 = vpack.c.b16 %v2285, %v2277
    %v2734 = vpack.c.b16 %v2286, %v2278
    %v2735 = vpack.c.b16 %v2287, %v2279
    %v2736 = vpack.c.b16 %v2288, %v2280
    %v2737 = vpack.c.b16 %v2289, %v2281
    %v2738 = vpack.c.b16 %v2290, %v2282
    %v2739 = vpack.c.b16 %v2299, %v2291
    %v2740 = vpack.c.b16 %v2300, %v2292
    %v2741 = vpack.c.b16 %v2301, %v2293
    %v2742 = vpack.c.b16 %v2302, %v2294
    %v2743 = vpack.c.b16 %v2303, %v2295
    %v2744 = vpack.c.b16 %v2304, %v2296
    %v2745 = vpack.c.b16 %v2305, %v2297
    %v2746 = vpack.c.b16 %v2306, %v2298
    %v2747 = vpack.c.b16 %v2315, %v2307
    %v2748 = vpack.c.b16 %v2316, %v2308
    %v2749 = vpack.c.b16 %v2317, %v2309
    %v2750 = vpack.c.b16 %v2318, %v2310
    %v2751 = vpack.c.b16 %v2319, %v2311
    %v2752 = vpack.c.b16 %v2320, %v2312
    %v2753 = vpack.c.b16 %v2321, %v2313
    %v2754 = vpack.c.b16 %v2322, %v2314
    %v2755 = vpack.c.b16 %v2331, %v2323
    %v2756 = vpack.c.b16 %v2332, %v2324
    %v2757 = vpack.c.b16 %v2333, %v2325
    %v2758 = vpack.c.b16 %v2334, %v2326
    %v2759 = vpack.c.b16 %v2335, %v2327
    %v2760 = vpack.c.b16 %v2336, %v2328
    %v2761 = vpack.c.b16 %v2337, %v2329
    %v2762 = vpack.c.b16 %v2338, %v2330
    %v2763 = vpack.c.b16 %v2347, %v2339
    %v2764 = vpack.c.b16 %v2348, %v2340
    %v2765 = vpack.c.b16 %v2349, %v2341
    %v2766 = vpack.c.b16 %v2350, %v2342
    %v2767 = vpack.c.b16 %v2351, %v2343
    %v2768 = vpack.c.b16 %v2352, %v2344
    %v2769 = vpack.c.b16 %v2353, %v2345
    %v2770 = vpack.c.b16 %v2354, %v2346
    %v2771 = vpack.c.b16 %v2363, %v2355
    %v2772 = vpack.c.b16 %v2364, %v2356
    %v2773 = vpack.c.b16 %v2365, %v2357
    %v2774 = vpack.c.b16 %v2366, %v2358
    %v2775 = vpack.c.b16 %v2367, %v2359
    %v2776 = vpack.c.b16 %v2368, %v2360
    %v2777 = vpack.c.b16 %v2369, %v2361
    %v2778 = vpack.c.b16 %v2370, %v2362
    %v2779 = vpack.c.b16 %v2379, %v2371
    %v2780 = vpack.c.b16 %v2380, %v2372
    %v2781 = vpack.c.b16 %v2381, %v2373
    %v2782 = vpack.c.b16 %v2382, %v2374
    %v2783 = vpack.c.b16 %v2383, %v2375
    %v2784 = vpack.c.b16 %v2384, %v2376
    %v2785 = vpack.c.b16 %v2385, %v2377
    %v2786 = vpack.c.b16 %v2386, %v2378
    %v2787 = vpack.c.b16 %v2395, %v2387
    %v2788 = vpack.c.b16 %v2396, %v2388
    %v2789 = vpack.c.b16 %v2397, %v2389
    %v2790 = vpack.c.b16 %v2398, %v2390
    %v2791 = vpack.c.b16 %v2399, %v2391
    %v2792 = vpack.c.b16 %v2400, %v2392
    %v2793 = vpack.c.b16 %v2401, %v2393
    %v2794 = vpack.c.b16 %v2402, %v2394
    %v2795 = vpack.c.b16 %v2411, %v2403
    %v2796 = vpack.c.b16 %v2412, %v2404
    %v2797 = vpack.c.b16 %v2413, %v2405
    %v2798 = vpack.c.b16 %v2414, %v2406
    %v2799 = vpack.c.b16 %v2415, %v2407
    %v2800 = vpack.c.b16 %v2416, %v2408
    %v2801 = vpack.c.b16 %v2417, %v2409
    %v2802 = vpack.c.b16 %v2418, %v2410
    %v2803 = vpack.c.b16 %v2427, %v2419
    %v2804 = vpack.c.b16 %v2428, %v2420
    %v2805 = vpack.c.b16 %v2429, %v2421
    %v2806 = vpack.c.b16 %v2430, %v2422
    %v2807 = vpack.c.b16 %v2431, %v2423
    %v2808 = vpack.c.b16 %v2432, %v2424
    %v2809 = vpack.c.b16 %v2433, %v2425
    %v2810 = vpack.c.b16 %v2434, %v2426
    %v2811 = vpack.c.b16 %v2443, %v2435
    %v2812 = vpack.c.b16 %v2444, %v2436
    %v2813 = vpack.c.b16 %v2445, %v2437
    %v2814 = vpack.c.b16 %v2446, %v2438
    %v2815 = vpack.c.b16 %v2447, %v2439
    %v2816 = vpack.c.b16 %v2448, %v2440
    %v2817 = vpack.c.b16 %v2449, %v2441
    %v2818 = vpack.c.b16 %v2450, %v2442
    %v2819 = vpack.c.b16 %v2459, %v2451
    %v2820 = vpack.c.b16 %v2460, %v2452
    %v2821 = vpack.c.b16 %v2461, %v2453
    %v2822 = vpack.c.b16 %v2462, %v2454
    %v2823 = vpack.c.b16 %v2463, %v2455
    %v2824 = vpack.c.b16 %v2464, %v2456
    %v2825 = vpack.c.b16 %v2465, %v2457
    %v2826 = vpack.c.b16 %v2466, %v2458
    %v2827 = vpack.c.b16 %v2475, %v2467
    %v2828 = vpack.c.b16 %v2476, %v2468
    %v2829 = vpack.c.b16 %v2477, %v2469
    %v2830 = vpack.c.b16 %v2478, %v2470
    %v2831 = vpack.c.b16 %v2479, %v2471
    %v2832 = vpack.c.b16 %v2480, %v2472
    %v2833 = vpack.c.b16 %v2481, %v2473
    %v2834 = vpack.c.b16 %v2482, %v2474
    %v2835 = vpack.c.b16 %v2491, %v2483
    %v2836 = vpack.c.b16 %v2492, %v2484
    %v2837 = vpack.c.b16 %v2493, %v2485
    %v2838 = vpack.c.b16 %v2494, %v2486
    %v2839 = vpack.c.b16 %v2495, %v2487
    %v2840 = vpack.c.b16 %v2496, %v2488
    %v2841 = vpack.c.b16 %v2497, %v2489
    %v2842 = vpack.c.b16 %v2498, %v2490
    %v2843 = vpack.c.b16 %v2507, %v2499
    %v2844 = vpack.c.b16 %v2508, %v2500
    %v2845 = vpack.c.b16 %v2509, %v2501
    %v2846 = vpack.c.b16 %v2510, %v2502
    %v2847 = vpack.c.b16 %v2511, %v2503
    %v2848 = vpack.c.b16 %v2512, %v2504
    %v2849 = vpack.c.b16 %v2513, %v2505
    %v2850 = vpack.c.b16 %v2514, %v2506
    %v2851 = vpack.c.b16 %v2523, %v2515
    %v2852 = vpack.c.b16 %v2524, %v2516
    %v2853 = vpack.c.b16 %v2525, %v2517
    %v2854 = vpack.c.b16 %v2526, %v2518
    %v2855 = vpack.c.b16 %v2527, %v2519
    %v2856 = vpack.c.b16 %v2528, %v2520
    %v2857 = vpack.c.b16 %v2529, %v2521
    %v2858 = vpack.c.b16 %v2530, %v2522
    %v2859 = vpack.c.b16 %v2539, %v2531
    %v2860 = vpack.c.b16 %v2540, %v2532
    %v2861 = vpack.c.b16 %v2541, %v2533
    %v2862 = vpack.c.b16 %v2542, %v2534
    %v2863 = vpack.c.b16 %v2543, %v2535
    %v2864 = vpack.c.b16 %v2544, %v2536
    %v2865 = vpack.c.b16 %v2545, %v2537
    %v2866 = vpack.c.b16 %v2546, %v2538
    %v2867 = vpack.c.b16 %v2555, %v2547
    %v2868 = vpack.c.b16 %v2556, %v2548
    %v2869 = vpack.c.b16 %v2557, %v2549
    %v2870 = vpack.c.b16 %v2558, %v2550
    %v2871 = vpack.c.b16 %v2559, %v2551
    %v2872 = vpack.c.b16 %v2560, %v2552
    %v2873 = vpack.c.b16 %v2561, %v2553
    %v2874 = vpack.c.b16 %v2562, %v2554
    %v2875 = vpack.c.b16 %v2571, %v2563
    %v2876 = vpack.c.b16 %v2572, %v2564
    %v2877 = vpack.c.b16 %v2573, %v2565
    %v2878 = vpack.c.b16 %v2574, %v2566
    %v2879 = vpack.c.b16 %v2575, %v2567
    %v2880 = vpack.c.b16 %v2576, %v2568
    %v2881 = vpack.c.b16 %v2577, %v2569
    %v2882 = vpack.c.b16 %v2578, %v2570
    %v2883 = vpack.c.b16 %v2587, %v2579
    %v2884 = vpack.c.b16 %v2588, %v2580
    %v2885 = vpack.c.b16 %v2589, %v2581
    %v2886 = vpack.c.b16 %v2590, %v2582
    %v2887 = vpack.c.b16 %v2591, %v2583
    %v2888 = vpack.c.b16 %v2592, %v2584
    %v2889 = vpack.c.b16 %v2593, %v2585
    %v2890 = vpack.c.b16 %v2594, %v2586
    %v2891 = vpack.c.b16 %v2603, %v2595
    %v2892 = vpack.c.b16 %v2604, %v2596
    %v2893 = vpack.c.b16 %v2605, %v2597
    %v2894 = vpack.c.b16 %v2606, %v2598
    %v2895 = vpack.c.b16 %v2607, %v2599
    %v2896 = vpack.c.b16 %v2608, %v2600
    %v2897 = vpack.c.b16 %v2609, %v2601
    %v2898 = vpack.c.b16 %v2610, %v2602
    %v2899 = vpack.c.b16 %v2619, %v2611
    %v2900 = vpack.c.b16 %v2620, %v2612
    %v2901 = vpack.c.b16 %v2621, %v2613
    %v2902 = vpack.c.b16 %v2622, %v2614
    %v2903 = vpack.c.b16 %v2623, %v2615
    %v2904 = vpack.c.b16 %v2624, %v2616
    %v2905 = vpack.c.b16 %v2625, %v2617
    %v2906 = vpack.c.b16 %v2626, %v2618
    %v2907 = vpack.c.b16 %v2635, %v2627
    %v2908 = vpack.c.b16 %v2636, %v2628
    %v2909 = vpack.c.b16 %v2637, %v2629
    %v2910 = vpack.c.b16 %v2638, %v2630
    %v2911 = vpack.c.b16 %v2639, %v2631
    %v2912 = vpack.c.b16 %v2640, %v2632
    %v2913 = vpack.c.b16 %v2641, %v2633
    %v2914 = vpack.c.b16 %v2642, %v2634
    %v2915 = vpack.c.b16 %v2651, %v2643
    %v2916 = vpack.c.b16 %v2652, %v2644
    %v2917 = vpack.c.b16 %v2653, %v2645
    %v2918 = vpack.c.b16 %v2654, %v2646
    %v2919 = vpack.c.b16 %v2655, %v2647
    %v2920 = vpack.c.b16 %v2656, %v2648
    %v2921 = vpack.c.b16 %v2657, %v2649
    %v2922 = vpack.c.b16 %v2658, %v2650
    %v2923 = vpack.c.b16 %v2667, %v2659
    %v2924 = vpack.c.b16 %v2668, %v2660
    %v2925 = vpack.c.b16 %v2669, %v2661
    %v2926 = vpack.c.b16 %v2670, %v2662
    %v2927 = vpack.c.b16 %v2671, %v2663
    %v2928 = vpack.c.b16 %v2672, %v2664
    %v2929 = vpack.c.b16 %v2673, %v2665
    %v2930 = vpack.c.b16 %v2674, %v2666
    %3187 = vmatpush.bf16.msra.mxu0 %v2731
    %3188 = vmatpush.bf16.msra.mxu0 %v2723
    %3189 = vmatpush.bf16.msra.mxu0 %v2715
    %3190 = vmatpush.bf16.msra.mxu0 %v2707
    %3191 = vmatpush.bf16.msra.mxu0 %v2699
    %3192 = vmatpush.bf16.msra.mxu0 %v2691
    %3193 = vmatpush.bf16.msra.mxu0 %v2683
    %3194 = vmatpush.bf16.msra.mxu0 %v2675
    %3195 = vmatmul.bf16.gmra.mxu0 %v1874
    %v3196 = vpop.f32.mrf.mxu0
    %v3197 = vadd.f32 %v1891, %v3196
    %v3198 = vpop.f32.mrf.mxu0
    %v3199 = vadd.f32 %v1891, %v3198
    %3200 = vmatmul.bf16.gmra.mxu0 %v1878
    %v3201 = vpop.f32.mrf.mxu0
    %v3202 = vadd.f32 %v1891, %v3201
    %v3203 = vpop.f32.mrf.mxu0
    %v3204 = vadd.f32 %v1891, %v3203
    %3205 = vmatmul.bf16.gmra.mxu0 %v1882
    %v3206 = vpop.f32.mrf.mxu0
    %v3207 = vadd.f32 %v1891, %v3206
    %v3208 = vpop.f32.mrf.mxu0
    %v3209 = vadd.f32 %v1891, %v3208
    %3210 = vmatmul.bf16.gmra.mxu0 %v1886
    %v3211 = vpop.f32.mrf.mxu0
    %v3212 = vadd.f32 %v1891, %v3211
    %v3213 = vpop.f32.mrf.mxu0
    %v3214 = vadd.f32 %v1891, %v3213
    %3215 = vdwg.mxu0
    %3216 = vmatpush.bf16.msra.mxu0 %v2795
    %3217 = vmatpush.bf16.msra.mxu0 %v2787
    %3218 = vmatpush.bf16.msra.mxu0 %v2779
    %3219 = vmatpush.bf16.msra.mxu0 %v2771
    %3220 = vmatpush.bf16.msra.mxu0 %v2763
    %3221 = vmatpush.bf16.msra.mxu0 %v2755
    %3222 = vmatpush.bf16.msra.mxu0 %v2747
    %3223 = vmatpush.bf16.msra.mxu0 %v2739
    %3224 = vmatmul.bf16.gmra.mxu0 %v1875
    %v3225 = vpop.f32.mrf.mxu0
    %v3226 = vadd.f32 %v3197, %v3225
    %v3227 = vpop.f32.mrf.mxu0
    %v3228 = vadd.f32 %v3199, %v3227
    %3229 = vmatmul.bf16.gmra.mxu0 %v1879
    %v3230 = vpop.f32.mrf.mxu0
    %v3231 = vadd.f32 %v3202, %v3230
    %v3232 = vpop.f32.mrf.mxu0
    %v3233 = vadd.f32 %v3204, %v3232
    %3234 = vmatmul.bf16.gmra.mxu0 %v1883
    %v3235 = vpop.f32.mrf.mxu0
    %v3236 = vadd.f32 %v3207, %v3235
    %v3237 = vpop.f32.mrf.mxu0
    %v3238 = vadd.f32 %v3209, %v3237
    %3239 = vmatmul.bf16.gmra.mxu0 %v1887
    %v3240 = vpop.f32.mrf.mxu0
    %v3241 = vadd.f32 %v3212, %v3240
    %v3242 = vpop.f32.mrf.mxu0
    %v3243 = vadd.f32 %v3214, %v3242
    %3244 = vdwg.mxu0
    %3245 = vmatpush.bf16.msra.mxu0 %v2859
    %3246 = vmatpush.bf16.msra.mxu0 %v2851
    %3247 = vmatpush.bf16.msra.mxu0 %v2843
    %3248 = vmatpush.bf16.msra.mxu0 %v2835
    %3249 = vmatpush.bf16.msra.mxu0 %v2827
    %3250 = vmatpush.bf16.msra.mxu0 %v2819
    %3251 = vmatpush.bf16.msra.mxu0 %v2811
    %3252 = vmatpush.bf16.msra.mxu0 %v2803
    %3253 = vmatmul.bf16.gmra.mxu0 %v1876
    %v3254 = vpop.f32.mrf.mxu0
    %v3255 = vadd.f32 %v3226, %v3254
    %v3256 = vpop.f32.mrf.mxu0
    %v3257 = vadd.f32 %v3228, %v3256
    %3258 = vmatmul.bf16.gmra.mxu0 %v1880
    %v3259 = vpop.f32.mrf.mxu0
    %v3260 = vadd.f32 %v3231, %v3259
    %v3261 = vpop.f32.mrf.mxu0
    %v3262 = vadd.f32 %v3233, %v3261
    %3263 = vmatmul.bf16.gmra.mxu0 %v1884
    %v3264 = vpop.f32.mrf.mxu0
    %v3265 = vadd.f32 %v3236, %v3264
    %v3266 = vpop.f32.mrf.mxu0
    %v3267 = vadd.f32 %v3238, %v3266
    %3268 = vmatmul.bf16.gmra.mxu0 %v1888
    %v3269 = vpop.f32.mrf.mxu0
    %v3270 = vadd.f32 %v3241, %v3269
    %v3271 = vpop.f32.mrf.mxu0
    %v3272 = vadd.f32 %v3243, %v3271
    %3273 = vdwg.mxu0
    %3274 = vmatpush.bf16.msra.mxu0 %v2923
    %3275 = vmatpush.bf16.msra.mxu0 %v2915
    %3276 = vmatpush.bf16.msra.mxu0 %v2907
    %3277 = vmatpush.bf16.msra.mxu0 %v2899
    %3278 = vmatpush.bf16.msra.mxu0 %v2891
    %3279 = vmatpush.bf16.msra.mxu0 %v2883
    %3280 = vmatpush.bf16.msra.mxu0 %v2875
    %3281 = vmatpush.bf16.msra.mxu0 %v2867
    %3282 = vmatmul.bf16.gmra.mxu0 %v1877
    %v3283 = vpop.f32.mrf.mxu0
    %v3284 = vadd.f32 %v3255, %v3283
    %v3285 = vpop.f32.mrf.mxu0
    %v3286 = vadd.f32 %v3257, %v3285
    %3287 = vmatmul.bf16.gmra.mxu0 %v1881
    %v3288 = vpop.f32.mrf.mxu0
    %v3289 = vadd.f32 %v3260, %v3288
    %v3290 = vpop.f32.mrf.mxu0
    %v3291 = vadd.f32 %v3262, %v3290
    %3292 = vmatmul.bf16.gmra.mxu0 %v1885
    %v3293 = vpop.f32.mrf.mxu0
    %v3294 = vadd.f32 %v3265, %v3293
    %v3295 = vpop.f32.mrf.mxu0
    %v3296 = vadd.f32 %v3267, %v3295
    %3297 = vmatmul.bf16.gmra.mxu0 %v1889
    %v3298 = vpop.f32.mrf.mxu0
    %v3299 = vadd.f32 %v3270, %v3298
    %v3300 = vpop.f32.mrf.mxu0
    %v3301 = vadd.f32 %v3272, %v3300
    %3302 = vdwg.mxu0
    %3303 = vmatpush.bf16.msra.mxu0 %v2732
    %3304 = vmatpush.bf16.msra.mxu0 %v2724
    %3305 = vmatpush.bf16.msra.mxu0 %v2716
    %3306 = vmatpush.bf16.msra.mxu0 %v2708
    %3307 = vmatpush.bf16.msra.mxu0 %v2700
    %3308 = vmatpush.bf16.msra.mxu0 %v2692
    %3309 = vmatpush.bf16.msra.mxu0 %v2684
    %3310 = vmatpush.bf16.msra.mxu0 %v2676
    %3311 = vmatmul.bf16.gmra.mxu0 %v1874
    %v3312 = vpop.f32.mrf.mxu0
    %v3313 = vadd.f32 %v1892, %v3312
    %v3314 = vpop.f32.mrf.mxu0
    %v3315 = vadd.f32 %v1892, %v3314
    %3316 = vmatmul.bf16.gmra.mxu0 %v1878
    %v3317 = vpop.f32.mrf.mxu0
    %v3318 = vadd.f32 %v1892, %v3317
    %v3319 = vpop.f32.mrf.mxu0
    %v3320 = vadd.f32 %v1892, %v3319
    %3321 = vmatmul.bf16.gmra.mxu0 %v1882
    %v3322 = vpop.f32.mrf.mxu0
    %v3323 = vadd.f32 %v1892, %v3322
    %v3324 = vpop.f32.mrf.mxu0
    %v3325 = vadd.f32 %v1892, %v3324
    %3326 = vmatmul.bf16.gmra.mxu0 %v1886
    %v3327 = vpop.f32.mrf.mxu0
    %v3328 = vadd.f32 %v1892, %v3327
    %v3329 = vpop.f32.mrf.mxu0
    %v3330 = vadd.f32 %v1892, %v3329
    %3331 = vdwg.mxu0
    %3332 = vmatpush.bf16.msra.mxu0 %v2796
    %3333 = vmatpush.bf16.msra.mxu0 %v2788
    %3334 = vmatpush.bf16.msra.mxu0 %v2780
    %3335 = vmatpush.bf16.msra.mxu0 %v2772
    %3336 = vmatpush.bf16.msra.mxu0 %v2764
    %3337 = vmatpush.bf16.msra.mxu0 %v2756
    %3338 = vmatpush.bf16.msra.mxu0 %v2748
    %3339 = vmatpush.bf16.msra.mxu0 %v2740
    %3340 = vmatmul.bf16.gmra.mxu0 %v1875
    %v3341 = vpop.f32.mrf.mxu0
    %v3342 = vadd.f32 %v3313, %v3341
    %v3343 = vpop.f32.mrf.mxu0
    %v3344 = vadd.f32 %v3315, %v3343
    %3345 = vmatmul.bf16.gmra.mxu0 %v1879
    %v3346 = vpop.f32.mrf.mxu0
    %v3347 = vadd.f32 %v3318, %v3346
    %v3348 = vpop.f32.mrf.mxu0
    %v3349 = vadd.f32 %v3320, %v3348
    %3350 = vmatmul.bf16.gmra.mxu0 %v1883
    %v3351 = vpop.f32.mrf.mxu0
    %v3352 = vadd.f32 %v3323, %v3351
    %v3353 = vpop.f32.mrf.mxu0
    %v3354 = vadd.f32 %v3325, %v3353
    %3355 = vmatmul.bf16.gmra.mxu0 %v1887
    %v3356 = vpop.f32.mrf.mxu0
    %v3357 = vadd.f32 %v3328, %v3356
    %v3358 = vpop.f32.mrf.mxu0
    %v3359 = vadd.f32 %v3330, %v3358
    %3360 = vdwg.mxu0
    %3361 = vmatpush.bf16.msra.mxu0 %v2860
    %3362 = vmatpush.bf16.msra.mxu0 %v2852
    %3363 = vmatpush.bf16.msra.mxu0 %v2844
    %3364 = vmatpush.bf16.msra.mxu0 %v2836
    %3365 = vmatpush.bf16.msra.mxu0 %v2828
    %3366 = vmatpush.bf16.msra.mxu0 %v2820
    %3367 = vmatpush.bf16.msra.mxu0 %v2812
    %3368 = vmatpush.bf16.msra.mxu0 %v2804
    %3369 = vmatmul.bf16.gmra.mxu0 %v1876
    %v3370 = vpop.f32.mrf.mxu0
    %v3371 = vadd.f32 %v3342, %v3370
    %v3372 = vpop.f32.mrf.mxu0
    %v3373 = vadd.f32 %v3344, %v3372
    %3374 = vmatmul.bf16.gmra.mxu0 %v1880
    %v3375 = vpop.f32.mrf.mxu0
    %v3376 = vadd.f32 %v3347, %v3375
    %v3377 = vpop.f32.mrf.mxu0
    %v3378 = vadd.f32 %v3349, %v3377
    %3379 = vmatmul.bf16.gmra.mxu0 %v1884
    %v3380 = vpop.f32.mrf.mxu0
    %v3381 = vadd.f32 %v3352, %v3380
    %v3382 = vpop.f32.mrf.mxu0
    %v3383 = vadd.f32 %v3354, %v3382
    %3384 = vmatmul.bf16.gmra.mxu0 %v1888
    %v3385 = vpop.f32.mrf.mxu0
    %v3386 = vadd.f32 %v3357, %v3385
    %v3387 = vpop.f32.mrf.mxu0
    %v3388 = vadd.f32 %v3359, %v3387
    %3389 = vdwg.mxu0
    %3390 = vmatpush.bf16.msra.mxu0 %v2924
    %3391 = vmatpush.bf16.msra.mxu0 %v2916
    %3392 = vmatpush.bf16.msra.mxu0 %v2908
    %3393 = vmatpush.bf16.msra.mxu0 %v2900
    %3394 = vmatpush.bf16.msra.mxu0 %v2892
    %3395 = vmatpush.bf16.msra.mxu0 %v2884
    %3396 = vmatpush.bf16.msra.mxu0 %v2876
    %3397 = vmatpush.bf16.msra.mxu0 %v2868
    %3398 = vmatmul.bf16.gmra.mxu0 %v1877
    %v3399 = vpop.f32.mrf.mxu0
    %v3400 = vadd.f32 %v3371, %v3399
    %v3401 = vpop.f32.mrf.mxu0
    %v3402 = vadd.f32 %v3373, %v3401
    %3403 = vmatmul.bf16.gmra.mxu0 %v1881
    %v3404 = vpop.f32.mrf.mxu0
    %v3405 = vadd.f32 %v3376, %v3404
    %v3406 = vpop.f32.mrf.mxu0
    %v3407 = vadd.f32 %v3378, %v3406
    %3408 = vmatmul.bf16.gmra.mxu0 %v1885
    %v3409 = vpop.f32.mrf.mxu0
    %v3410 = vadd.f32 %v3381, %v3409
    %v3411 = vpop.f32.mrf.mxu0
    %v3412 = vadd.f32 %v3383, %v3411
    %3413 = vmatmul.bf16.gmra.mxu0 %v1889
    %v3414 = vpop.f32.mrf.mxu0
    %v3415 = vadd.f32 %v3386, %v3414
    %v3416 = vpop.f32.mrf.mxu0
    %v3417 = vadd.f32 %v3388, %v3416
    %3418 = vdwg.mxu0
    %3419 = vmatpush.bf16.msra.mxu0 %v2733
    %3420 = vmatpush.bf16.msra.mxu0 %v2725
    %3421 = vmatpush.bf16.msra.mxu0 %v2717
    %3422 = vmatpush.bf16.msra.mxu0 %v2709
    %3423 = vmatpush.bf16.msra.mxu0 %v2701
    %3424 = vmatpush.bf16.msra.mxu0 %v2693
    %3425 = vmatpush.bf16.msra.mxu0 %v2685
    %3426 = vmatpush.bf16.msra.mxu0 %v2677
    %3427 = vmatmul.bf16.gmra.mxu0 %v1874
    %v3428 = vpop.f32.mrf.mxu0
    %v3429 = vadd.f32 %v1893, %v3428
    %v3430 = vpop.f32.mrf.mxu0
    %v3431 = vadd.f32 %v1893, %v3430
    %3432 = vmatmul.bf16.gmra.mxu0 %v1878
    %v3433 = vpop.f32.mrf.mxu0
    %v3434 = vadd.f32 %v1893, %v3433
    %v3435 = vpop.f32.mrf.mxu0
    %v3436 = vadd.f32 %v1893, %v3435
    %3437 = vmatmul.bf16.gmra.mxu0 %v1882
    %v3438 = vpop.f32.mrf.mxu0
    %v3439 = vadd.f32 %v1893, %v3438
    %v3440 = vpop.f32.mrf.mxu0
    %v3441 = vadd.f32 %v1893, %v3440
    %3442 = vmatmul.bf16.gmra.mxu0 %v1886
    %v3443 = vpop.f32.mrf.mxu0
    %v3444 = vadd.f32 %v1893, %v3443
    %v3445 = vpop.f32.mrf.mxu0
    %v3446 = vadd.f32 %v1893, %v3445
    %3447 = vdwg.mxu0
    %3448 = vmatpush.bf16.msra.mxu0 %v2797
    %3449 = vmatpush.bf16.msra.mxu0 %v2789
    %3450 = vmatpush.bf16.msra.mxu0 %v2781
    %3451 = vmatpush.bf16.msra.mxu0 %v2773
    %3452 = vmatpush.bf16.msra.mxu0 %v2765
    %3453 = vmatpush.bf16.msra.mxu0 %v2757
    %3454 = vmatpush.bf16.msra.mxu0 %v2749
    %3455 = vmatpush.bf16.msra.mxu0 %v2741
    %3456 = vmatmul.bf16.gmra.mxu0 %v1875
    %v3457 = vpop.f32.mrf.mxu0
    %v3458 = vadd.f32 %v3429, %v3457
    %v3459 = vpop.f32.mrf.mxu0
    %v3460 = vadd.f32 %v3431, %v3459
    %3461 = vmatmul.bf16.gmra.mxu0 %v1879
    %v3462 = vpop.f32.mrf.mxu0
    %v3463 = vadd.f32 %v3434, %v3462
    %v3464 = vpop.f32.mrf.mxu0
    %v3465 = vadd.f32 %v3436, %v3464
    %3466 = vmatmul.bf16.gmra.mxu0 %v1883
    %v3467 = vpop.f32.mrf.mxu0
    %v3468 = vadd.f32 %v3439, %v3467
    %v3469 = vpop.f32.mrf.mxu0
    %v3470 = vadd.f32 %v3441, %v3469
    %3471 = vmatmul.bf16.gmra.mxu0 %v1887
    %v3472 = vpop.f32.mrf.mxu0
    %v3473 = vadd.f32 %v3444, %v3472
    %v3474 = vpop.f32.mrf.mxu0
    %v3475 = vadd.f32 %v3446, %v3474
    %3476 = vdwg.mxu0
    %3477 = vmatpush.bf16.msra.mxu0 %v2861
    %3478 = vmatpush.bf16.msra.mxu0 %v2853
    %3479 = vmatpush.bf16.msra.mxu0 %v2845
    %3480 = vmatpush.bf16.msra.mxu0 %v2837
    %3481 = vmatpush.bf16.msra.mxu0 %v2829
    %3482 = vmatpush.bf16.msra.mxu0 %v2821
    %3483 = vmatpush.bf16.msra.mxu0 %v2813
    %3484 = vmatpush.bf16.msra.mxu0 %v2805
    %3485 = vmatmul.bf16.gmra.mxu0 %v1876
    %v3486 = vpop.f32.mrf.mxu0
    %v3487 = vadd.f32 %v3458, %v3486
    %v3488 = vpop.f32.mrf.mxu0
    %v3489 = vadd.f32 %v3460, %v3488
    %3490 = vmatmul.bf16.gmra.mxu0 %v1880
    %v3491 = vpop.f32.mrf.mxu0
    %v3492 = vadd.f32 %v3463, %v3491
    %v3493 = vpop.f32.mrf.mxu0
    %v3494 = vadd.f32 %v3465, %v3493
    %3495 = vmatmul.bf16.gmra.mxu0 %v1884
    %v3496 = vpop.f32.mrf.mxu0
    %v3497 = vadd.f32 %v3468, %v3496
    %v3498 = vpop.f32.mrf.mxu0
    %v3499 = vadd.f32 %v3470, %v3498
    %3500 = vmatmul.bf16.gmra.mxu0 %v1888
    %v3501 = vpop.f32.mrf.mxu0
    %v3502 = vadd.f32 %v3473, %v3501
    %v3503 = vpop.f32.mrf.mxu0
    %v3504 = vadd.f32 %v3475, %v3503
    %3505 = vdwg.mxu0
    %3506 = vmatpush.bf16.msra.mxu0 %v2925
    %3507 = vmatpush.bf16.msra.mxu0 %v2917
    %3508 = vmatpush.bf16.msra.mxu0 %v2909
    %3509 = vmatpush.bf16.msra.mxu0 %v2901
    %3510 = vmatpush.bf16.msra.mxu0 %v2893
    %3511 = vmatpush.bf16.msra.mxu0 %v2885
    %3512 = vmatpush.bf16.msra.mxu0 %v2877
    %3513 = vmatpush.bf16.msra.mxu0 %v2869
    %3514 = vmatmul.bf16.gmra.mxu0 %v1877
    %v3515 = vpop.f32.mrf.mxu0
    %v3516 = vadd.f32 %v3487, %v3515
    %v3517 = vpop.f32.mrf.mxu0
    %v3518 = vadd.f32 %v3489, %v3517
    %3519 = vmatmul.bf16.gmra.mxu0 %v1881
    %v3520 = vpop.f32.mrf.mxu0
    %v3521 = vadd.f32 %v3492, %v3520
    %v3522 = vpop.f32.mrf.mxu0
    %v3523 = vadd.f32 %v3494, %v3522
    %3524 = vmatmul.bf16.gmra.mxu0 %v1885
    %v3525 = vpop.f32.mrf.mxu0
    %v3526 = vadd.f32 %v3497, %v3525
    %v3527 = vpop.f32.mrf.mxu0
    %v3528 = vadd.f32 %v3499, %v3527
    %3529 = vmatmul.bf16.gmra.mxu0 %v1889
    %v3530 = vpop.f32.mrf.mxu0
    %v3531 = vadd.f32 %v3502, %v3530
    %v3532 = vpop.f32.mrf.mxu0
    %v3533 = vadd.f32 %v3504, %v3532
    %3534 = vdwg.mxu0
    %3535 = vmatpush.bf16.msra.mxu0 %v2734
    %3536 = vmatpush.bf16.msra.mxu0 %v2726
    %3537 = vmatpush.bf16.msra.mxu0 %v2718
    %3538 = vmatpush.bf16.msra.mxu0 %v2710
    %3539 = vmatpush.bf16.msra.mxu0 %v2702
    %3540 = vmatpush.bf16.msra.mxu0 %v2694
    %3541 = vmatpush.bf16.msra.mxu0 %v2686
    %3542 = vmatpush.bf16.msra.mxu0 %v2678
    %3543 = vmatmul.bf16.gmra.mxu0 %v1874
    %v3544 = vpop.f32.mrf.mxu0
    %v3545 = vadd.f32 %v1894, %v3544
    %v3546 = vpop.f32.mrf.mxu0
    %v3547 = vadd.f32 %v1894, %v3546
    %3548 = vmatmul.bf16.gmra.mxu0 %v1878
    %v3549 = vpop.f32.mrf.mxu0
    %v3550 = vadd.f32 %v1894, %v3549
    %v3551 = vpop.f32.mrf.mxu0
    %v3552 = vadd.f32 %v1894, %v3551
    %3553 = vmatmul.bf16.gmra.mxu0 %v1882
    %v3554 = vpop.f32.mrf.mxu0
    %v3555 = vadd.f32 %v1894, %v3554
    %v3556 = vpop.f32.mrf.mxu0
    %v3557 = vadd.f32 %v1894, %v3556
    %3558 = vmatmul.bf16.gmra.mxu0 %v1886
    %v3559 = vpop.f32.mrf.mxu0
    %v3560 = vadd.f32 %v1894, %v3559
    %v3561 = vpop.f32.mrf.mxu0
    %v3562 = vadd.f32 %v1894, %v3561
    %3563 = vdwg.mxu0
    %3564 = vmatpush.bf16.msra.mxu0 %v2798
    %3565 = vmatpush.bf16.msra.mxu0 %v2790
    %3566 = vmatpush.bf16.msra.mxu0 %v2782
    %3567 = vmatpush.bf16.msra.mxu0 %v2774
    %3568 = vmatpush.bf16.msra.mxu0 %v2766
    %3569 = vmatpush.bf16.msra.mxu0 %v2758
    %3570 = vmatpush.bf16.msra.mxu0 %v2750
    %3571 = vmatpush.bf16.msra.mxu0 %v2742
    %3572 = vmatmul.bf16.gmra.mxu0 %v1875
    %v3573 = vpop.f32.mrf.mxu0
    %v3574 = vadd.f32 %v3545, %v3573
    %v3575 = vpop.f32.mrf.mxu0
    %v3576 = vadd.f32 %v3547, %v3575
    %3577 = vmatmul.bf16.gmra.mxu0 %v1879
    %v3578 = vpop.f32.mrf.mxu0
    %v3579 = vadd.f32 %v3550, %v3578
    %v3580 = vpop.f32.mrf.mxu0
    %v3581 = vadd.f32 %v3552, %v3580
    %3582 = vmatmul.bf16.gmra.mxu0 %v1883
    %v3583 = vpop.f32.mrf.mxu0
    %v3584 = vadd.f32 %v3555, %v3583
    %v3585 = vpop.f32.mrf.mxu0
    %v3586 = vadd.f32 %v3557, %v3585
    %3587 = vmatmul.bf16.gmra.mxu0 %v1887
    %v3588 = vpop.f32.mrf.mxu0
    %v3589 = vadd.f32 %v3560, %v3588
    %v3590 = vpop.f32.mrf.mxu0
    %v3591 = vadd.f32 %v3562, %v3590
    %3592 = vdwg.mxu0
    %3593 = vmatpush.bf16.msra.mxu0 %v2862
    %3594 = vmatpush.bf16.msra.mxu0 %v2854
    %3595 = vmatpush.bf16.msra.mxu0 %v2846
    %3596 = vmatpush.bf16.msra.mxu0 %v2838
    %3597 = vmatpush.bf16.msra.mxu0 %v2830
    %3598 = vmatpush.bf16.msra.mxu0 %v2822
    %3599 = vmatpush.bf16.msra.mxu0 %v2814
    %3600 = vmatpush.bf16.msra.mxu0 %v2806
    %3601 = vmatmul.bf16.gmra.mxu0 %v1876
    %v3602 = vpop.f32.mrf.mxu0
    %v3603 = vadd.f32 %v3574, %v3602
    %v3604 = vpop.f32.mrf.mxu0
    %v3605 = vadd.f32 %v3576, %v3604
    %3606 = vmatmul.bf16.gmra.mxu0 %v1880
    %v3607 = vpop.f32.mrf.mxu0
    %v3608 = vadd.f32 %v3579, %v3607
    %v3609 = vpop.f32.mrf.mxu0
    %v3610 = vadd.f32 %v3581, %v3609
    %3611 = vmatmul.bf16.gmra.mxu0 %v1884
    %v3612 = vpop.f32.mrf.mxu0
    %v3613 = vadd.f32 %v3584, %v3612
    %v3614 = vpop.f32.mrf.mxu0
    %v3615 = vadd.f32 %v3586, %v3614
    %3616 = vmatmul.bf16.gmra.mxu0 %v1888
    %v3617 = vpop.f32.mrf.mxu0
    %v3618 = vadd.f32 %v3589, %v3617
    %v3619 = vpop.f32.mrf.mxu0
    %v3620 = vadd.f32 %v3591, %v3619
    %3621 = vdwg.mxu0
    %3622 = vmatpush.bf16.msra.mxu0 %v2926
    %3623 = vmatpush.bf16.msra.mxu0 %v2918
    %3624 = vmatpush.bf16.msra.mxu0 %v2910
    %3625 = vmatpush.bf16.msra.mxu0 %v2902
    %3626 = vmatpush.bf16.msra.mxu0 %v2894
    %3627 = vmatpush.bf16.msra.mxu0 %v2886
    %3628 = vmatpush.bf16.msra.mxu0 %v2878
    %3629 = vmatpush.bf16.msra.mxu0 %v2870
    %3630 = vmatmul.bf16.gmra.mxu0 %v1877
    %v3631 = vpop.f32.mrf.mxu0
    %v3632 = vadd.f32 %v3603, %v3631
    %v3633 = vpop.f32.mrf.mxu0
    %v3634 = vadd.f32 %v3605, %v3633
    %3635 = vmatmul.bf16.gmra.mxu0 %v1881
    %v3636 = vpop.f32.mrf.mxu0
    %v3637 = vadd.f32 %v3608, %v3636
    %v3638 = vpop.f32.mrf.mxu0
    %v3639 = vadd.f32 %v3610, %v3638
    %3640 = vmatmul.bf16.gmra.mxu0 %v1885
    %v3641 = vpop.f32.mrf.mxu0
    %v3642 = vadd.f32 %v3613, %v3641
    %v3643 = vpop.f32.mrf.mxu0
    %v3644 = vadd.f32 %v3615, %v3643
    %3645 = vmatmul.bf16.gmra.mxu0 %v1889
    %v3646 = vpop.f32.mrf.mxu0
    %v3647 = vadd.f32 %v3618, %v3646
    %v3648 = vpop.f32.mrf.mxu0
    %v3649 = vadd.f32 %v3620, %v3648
    %3650 = vdwg.mxu0
    %3651 = vmatpush.bf16.msra.mxu0 %v2735
    %3652 = vmatpush.bf16.msra.mxu0 %v2727
    %3653 = vmatpush.bf16.msra.mxu0 %v2719
    %3654 = vmatpush.bf16.msra.mxu0 %v2711
    %3655 = vmatpush.bf16.msra.mxu0 %v2703
    %3656 = vmatpush.bf16.msra.mxu0 %v2695
    %3657 = vmatpush.bf16.msra.mxu0 %v2687
    %3658 = vmatpush.bf16.msra.mxu0 %v2679
    %3659 = vmatmul.bf16.gmra.mxu0 %v1874
    %v3660 = vpop.f32.mrf.mxu0
    %v3661 = vadd.f32 %v1895, %v3660
    %v3662 = vpop.f32.mrf.mxu0
    %v3663 = vadd.f32 %v1895, %v3662
    %3664 = vmatmul.bf16.gmra.mxu0 %v1878
    %v3665 = vpop.f32.mrf.mxu0
    %v3666 = vadd.f32 %v1895, %v3665
    %v3667 = vpop.f32.mrf.mxu0
    %v3668 = vadd.f32 %v1895, %v3667
    %3669 = vmatmul.bf16.gmra.mxu0 %v1882
    %v3670 = vpop.f32.mrf.mxu0
    %v3671 = vadd.f32 %v1895, %v3670
    %v3672 = vpop.f32.mrf.mxu0
    %v3673 = vadd.f32 %v1895, %v3672
    %3674 = vmatmul.bf16.gmra.mxu0 %v1886
    %v3675 = vpop.f32.mrf.mxu0
    %v3676 = vadd.f32 %v1895, %v3675
    %v3677 = vpop.f32.mrf.mxu0
    %v3678 = vadd.f32 %v1895, %v3677
    %3679 = vdwg.mxu0
    %3680 = vmatpush.bf16.msra.mxu0 %v2799
    %3681 = vmatpush.bf16.msra.mxu0 %v2791
    %3682 = vmatpush.bf16.msra.mxu0 %v2783
    %3683 = vmatpush.bf16.msra.mxu0 %v2775
    %3684 = vmatpush.bf16.msra.mxu0 %v2767
    %3685 = vmatpush.bf16.msra.mxu0 %v2759
    %3686 = vmatpush.bf16.msra.mxu0 %v2751
    %3687 = vmatpush.bf16.msra.mxu0 %v2743
    %3688 = vmatmul.bf16.gmra.mxu0 %v1875
    %v3689 = vpop.f32.mrf.mxu0
    %v3690 = vadd.f32 %v3661, %v3689
    %v3691 = vpop.f32.mrf.mxu0
    %v3692 = vadd.f32 %v3663, %v3691
    %3693 = vmatmul.bf16.gmra.mxu0 %v1879
    %v3694 = vpop.f32.mrf.mxu0
    %v3695 = vadd.f32 %v3666, %v3694
    %v3696 = vpop.f32.mrf.mxu0
    %v3697 = vadd.f32 %v3668, %v3696
    %3698 = vmatmul.bf16.gmra.mxu0 %v1883
    %v3699 = vpop.f32.mrf.mxu0
    %v3700 = vadd.f32 %v3671, %v3699
    %v3701 = vpop.f32.mrf.mxu0
    %v3702 = vadd.f32 %v3673, %v3701
    %3703 = vmatmul.bf16.gmra.mxu0 %v1887
    %v3704 = vpop.f32.mrf.mxu0
    %v3705 = vadd.f32 %v3676, %v3704
    %v3706 = vpop.f32.mrf.mxu0
    %v3707 = vadd.f32 %v3678, %v3706
    %3708 = vdwg.mxu0
    %3709 = vmatpush.bf16.msra.mxu0 %v2863
    %3710 = vmatpush.bf16.msra.mxu0 %v2855
    %3711 = vmatpush.bf16.msra.mxu0 %v2847
    %3712 = vmatpush.bf16.msra.mxu0 %v2839
    %3713 = vmatpush.bf16.msra.mxu0 %v2831
    %3714 = vmatpush.bf16.msra.mxu0 %v2823
    %3715 = vmatpush.bf16.msra.mxu0 %v2815
    %3716 = vmatpush.bf16.msra.mxu0 %v2807
    %3717 = vmatmul.bf16.gmra.mxu0 %v1876
    %v3718 = vpop.f32.mrf.mxu0
    %v3719 = vadd.f32 %v3690, %v3718
    %v3720 = vpop.f32.mrf.mxu0
    %v3721 = vadd.f32 %v3692, %v3720
    %3722 = vmatmul.bf16.gmra.mxu0 %v1880
    %v3723 = vpop.f32.mrf.mxu0
    %v3724 = vadd.f32 %v3695, %v3723
    %v3725 = vpop.f32.mrf.mxu0
    %v3726 = vadd.f32 %v3697, %v3725
    %3727 = vmatmul.bf16.gmra.mxu0 %v1884
    %v3728 = vpop.f32.mrf.mxu0
    %v3729 = vadd.f32 %v3700, %v3728
    %v3730 = vpop.f32.mrf.mxu0
    %v3731 = vadd.f32 %v3702, %v3730
    %3732 = vmatmul.bf16.gmra.mxu0 %v1888
    %v3733 = vpop.f32.mrf.mxu0
    %v3734 = vadd.f32 %v3705, %v3733
    %v3735 = vpop.f32.mrf.mxu0
    %v3736 = vadd.f32 %v3707, %v3735
    %3737 = vdwg.mxu0
    %3738 = vmatpush.bf16.msra.mxu0 %v2927
    %3739 = vmatpush.bf16.msra.mxu0 %v2919
    %3740 = vmatpush.bf16.msra.mxu0 %v2911
    %3741 = vmatpush.bf16.msra.mxu0 %v2903
    %3742 = vmatpush.bf16.msra.mxu0 %v2895
    %3743 = vmatpush.bf16.msra.mxu0 %v2887
    %3744 = vmatpush.bf16.msra.mxu0 %v2879
    %3745 = vmatpush.bf16.msra.mxu0 %v2871
    %3746 = vmatmul.bf16.gmra.mxu0 %v1877
    %v3747 = vpop.f32.mrf.mxu0
    %v3748 = vadd.f32 %v3719, %v3747
    %v3749 = vpop.f32.mrf.mxu0
    %v3750 = vadd.f32 %v3721, %v3749
    %3751 = vmatmul.bf16.gmra.mxu0 %v1881
    %v3752 = vpop.f32.mrf.mxu0
    %v3753 = vadd.f32 %v3724, %v3752
    %v3754 = vpop.f32.mrf.mxu0
    %v3755 = vadd.f32 %v3726, %v3754
    %3756 = vmatmul.bf16.gmra.mxu0 %v1885
    %v3757 = vpop.f32.mrf.mxu0
    %v3758 = vadd.f32 %v3729, %v3757
    %v3759 = vpop.f32.mrf.mxu0
    %v3760 = vadd.f32 %v3731, %v3759
    %3761 = vmatmul.bf16.gmra.mxu0 %v1889
    %v3762 = vpop.f32.mrf.mxu0
    %v3763 = vadd.f32 %v3734, %v3762
    %v3764 = vpop.f32.mrf.mxu0
    %v3765 = vadd.f32 %v3736, %v3764
    %3766 = vdwg.mxu0
    %3767 = vmatpush.bf16.msra.mxu0 %v2736
    %3768 = vmatpush.bf16.msra.mxu0 %v2728
    %3769 = vmatpush.bf16.msra.mxu0 %v2720
    %3770 = vmatpush.bf16.msra.mxu0 %v2712
    %3771 = vmatpush.bf16.msra.mxu0 %v2704
    %3772 = vmatpush.bf16.msra.mxu0 %v2696
    %3773 = vmatpush.bf16.msra.mxu0 %v2688
    %3774 = vmatpush.bf16.msra.mxu0 %v2680
    %3775 = vmatmul.bf16.gmra.mxu0 %v1874
    %v3776 = vpop.f32.mrf.mxu0
    %v3777 = vadd.f32 %v1896, %v3776
    %v3778 = vpop.f32.mrf.mxu0
    %v3779 = vadd.f32 %v1896, %v3778
    %3780 = vmatmul.bf16.gmra.mxu0 %v1878
    %v3781 = vpop.f32.mrf.mxu0
    %v3782 = vadd.f32 %v1896, %v3781
    %v3783 = vpop.f32.mrf.mxu0
    %v3784 = vadd.f32 %v1896, %v3783
    %3785 = vmatmul.bf16.gmra.mxu0 %v1882
    %v3786 = vpop.f32.mrf.mxu0
    %v3787 = vadd.f32 %v1896, %v3786
    %v3788 = vpop.f32.mrf.mxu0
    %v3789 = vadd.f32 %v1896, %v3788
    %3790 = vmatmul.bf16.gmra.mxu0 %v1886
    %v3791 = vpop.f32.mrf.mxu0
    %v3792 = vadd.f32 %v1896, %v3791
    %v3793 = vpop.f32.mrf.mxu0
    %v3794 = vadd.f32 %v1896, %v3793
    %3795 = vdwg.mxu0
    %3796 = vmatpush.bf16.msra.mxu0 %v2800
    %3797 = vmatpush.bf16.msra.mxu0 %v2792
    %3798 = vmatpush.bf16.msra.mxu0 %v2784
    %3799 = vmatpush.bf16.msra.mxu0 %v2776
    %3800 = vmatpush.bf16.msra.mxu0 %v2768
    %3801 = vmatpush.bf16.msra.mxu0 %v2760
    %3802 = vmatpush.bf16.msra.mxu0 %v2752
    %3803 = vmatpush.bf16.msra.mxu0 %v2744
    %3804 = vmatmul.bf16.gmra.mxu0 %v1875
    %v3805 = vpop.f32.mrf.mxu0
    %v3806 = vadd.f32 %v3777, %v3805
    %v3807 = vpop.f32.mrf.mxu0
    %v3808 = vadd.f32 %v3779, %v3807
    %3809 = vmatmul.bf16.gmra.mxu0 %v1879
    %v3810 = vpop.f32.mrf.mxu0
    %v3811 = vadd.f32 %v3782, %v3810
    %v3812 = vpop.f32.mrf.mxu0
    %v3813 = vadd.f32 %v3784, %v3812
    %3814 = vmatmul.bf16.gmra.mxu0 %v1883
    %v3815 = vpop.f32.mrf.mxu0
    %v3816 = vadd.f32 %v3787, %v3815
    %v3817 = vpop.f32.mrf.mxu0
    %v3818 = vadd.f32 %v3789, %v3817
    %3819 = vmatmul.bf16.gmra.mxu0 %v1887
    %v3820 = vpop.f32.mrf.mxu0
    %v3821 = vadd.f32 %v3792, %v3820
    %v3822 = vpop.f32.mrf.mxu0
    %v3823 = vadd.f32 %v3794, %v3822
    %3824 = vdwg.mxu0
    %3825 = vmatpush.bf16.msra.mxu0 %v2864
    %3826 = vmatpush.bf16.msra.mxu0 %v2856
    %3827 = vmatpush.bf16.msra.mxu0 %v2848
    %3828 = vmatpush.bf16.msra.mxu0 %v2840
    %3829 = vmatpush.bf16.msra.mxu0 %v2832
    %3830 = vmatpush.bf16.msra.mxu0 %v2824
    %3831 = vmatpush.bf16.msra.mxu0 %v2816
    %3832 = vmatpush.bf16.msra.mxu0 %v2808
    %3833 = vmatmul.bf16.gmra.mxu0 %v1876
    %v3834 = vpop.f32.mrf.mxu0
    %v3835 = vadd.f32 %v3806, %v3834
    %v3836 = vpop.f32.mrf.mxu0
    %v3837 = vadd.f32 %v3808, %v3836
    %3838 = vmatmul.bf16.gmra.mxu0 %v1880
    %v3839 = vpop.f32.mrf.mxu0
    %v3840 = vadd.f32 %v3811, %v3839
    %v3841 = vpop.f32.mrf.mxu0
    %v3842 = vadd.f32 %v3813, %v3841
    %3843 = vmatmul.bf16.gmra.mxu0 %v1884
    %v3844 = vpop.f32.mrf.mxu0
    %v3845 = vadd.f32 %v3816, %v3844
    %v3846 = vpop.f32.mrf.mxu0
    %v3847 = vadd.f32 %v3818, %v3846
    %3848 = vmatmul.bf16.gmra.mxu0 %v1888
    %v3849 = vpop.f32.mrf.mxu0
    %v3850 = vadd.f32 %v3821, %v3849
    %v3851 = vpop.f32.mrf.mxu0
    %v3852 = vadd.f32 %v3823, %v3851
    %3853 = vdwg.mxu0
    %3854 = vmatpush.bf16.msra.mxu0 %v2928
    %3855 = vmatpush.bf16.msra.mxu0 %v2920
    %3856 = vmatpush.bf16.msra.mxu0 %v2912
    %3857 = vmatpush.bf16.msra.mxu0 %v2904
    %3858 = vmatpush.bf16.msra.mxu0 %v2896
    %3859 = vmatpush.bf16.msra.mxu0 %v2888
    %3860 = vmatpush.bf16.msra.mxu0 %v2880
    %3861 = vmatpush.bf16.msra.mxu0 %v2872
    %3862 = vmatmul.bf16.gmra.mxu0 %v1877
    %v3863 = vpop.f32.mrf.mxu0
    %v3864 = vadd.f32 %v3835, %v3863
    %v3865 = vpop.f32.mrf.mxu0
    %v3866 = vadd.f32 %v3837, %v3865
    %3867 = vmatmul.bf16.gmra.mxu0 %v1881
    %v3868 = vpop.f32.mrf.mxu0
    %v3869 = vadd.f32 %v3840, %v3868
    %v3870 = vpop.f32.mrf.mxu0
    %v3871 = vadd.f32 %v3842, %v3870
    %3872 = vmatmul.bf16.gmra.mxu0 %v1885
    %v3873 = vpop.f32.mrf.mxu0
    %v3874 = vadd.f32 %v3845, %v3873
    %v3875 = vpop.f32.mrf.mxu0
    %v3876 = vadd.f32 %v3847, %v3875
    %3877 = vmatmul.bf16.gmra.mxu0 %v1889
    %v3878 = vpop.f32.mrf.mxu0
    %v3879 = vadd.f32 %v3850, %v3878
    %v3880 = vpop.f32.mrf.mxu0
    %v3881 = vadd.f32 %v3852, %v3880
    %3882 = vdwg.mxu0
    %3883 = vmatpush.bf16.msra.mxu0 %v2737
    %3884 = vmatpush.bf16.msra.mxu0 %v2729
    %3885 = vmatpush.bf16.msra.mxu0 %v2721
    %3886 = vmatpush.bf16.msra.mxu0 %v2713
    %3887 = vmatpush.bf16.msra.mxu0 %v2705
    %3888 = vmatpush.bf16.msra.mxu0 %v2697
    %3889 = vmatpush.bf16.msra.mxu0 %v2689
    %3890 = vmatpush.bf16.msra.mxu0 %v2681
    %3891 = vmatmul.bf16.gmra.mxu0 %v1874
    %v3892 = vpop.f32.mrf.mxu0
    %v3893 = vadd.f32 %v1897, %v3892
    %v3894 = vpop.f32.mrf.mxu0
    %v3895 = vadd.f32 %v1897, %v3894
    %3896 = vmatmul.bf16.gmra.mxu0 %v1878
    %v3897 = vpop.f32.mrf.mxu0
    %v3898 = vadd.f32 %v1897, %v3897
    %v3899 = vpop.f32.mrf.mxu0
    %v3900 = vadd.f32 %v1897, %v3899
    %3901 = vmatmul.bf16.gmra.mxu0 %v1882
    %v3902 = vpop.f32.mrf.mxu0
    %v3903 = vadd.f32 %v1897, %v3902
    %v3904 = vpop.f32.mrf.mxu0
    %v3905 = vadd.f32 %v1897, %v3904
    %3906 = vmatmul.bf16.gmra.mxu0 %v1886
    %v3907 = vpop.f32.mrf.mxu0
    %v3908 = vadd.f32 %v1897, %v3907
    %v3909 = vpop.f32.mrf.mxu0
    %v3910 = vadd.f32 %v1897, %v3909
    %3911 = vdwg.mxu0
    %3912 = vmatpush.bf16.msra.mxu0 %v2801
    %3913 = vmatpush.bf16.msra.mxu0 %v2793
    %3914 = vmatpush.bf16.msra.mxu0 %v2785
    %3915 = vmatpush.bf16.msra.mxu0 %v2777
    %3916 = vmatpush.bf16.msra.mxu0 %v2769
    %3917 = vmatpush.bf16.msra.mxu0 %v2761
    %3918 = vmatpush.bf16.msra.mxu0 %v2753
    %3919 = vmatpush.bf16.msra.mxu0 %v2745
    %3920 = vmatmul.bf16.gmra.mxu0 %v1875
    %v3921 = vpop.f32.mrf.mxu0
    %v3922 = vadd.f32 %v3893, %v3921
    %v3923 = vpop.f32.mrf.mxu0
    %v3924 = vadd.f32 %v3895, %v3923
    %3925 = vmatmul.bf16.gmra.mxu0 %v1879
    %v3926 = vpop.f32.mrf.mxu0
    %v3927 = vadd.f32 %v3898, %v3926
    %v3928 = vpop.f32.mrf.mxu0
    %v3929 = vadd.f32 %v3900, %v3928
    %3930 = vmatmul.bf16.gmra.mxu0 %v1883
    %v3931 = vpop.f32.mrf.mxu0
    %v3932 = vadd.f32 %v3903, %v3931
    %v3933 = vpop.f32.mrf.mxu0
    %v3934 = vadd.f32 %v3905, %v3933
    %3935 = vmatmul.bf16.gmra.mxu0 %v1887
    %v3936 = vpop.f32.mrf.mxu0
    %v3937 = vadd.f32 %v3908, %v3936
    %v3938 = vpop.f32.mrf.mxu0
    %v3939 = vadd.f32 %v3910, %v3938
    %3940 = vdwg.mxu0
    %3941 = vmatpush.bf16.msra.mxu0 %v2865
    %3942 = vmatpush.bf16.msra.mxu0 %v2857
    %3943 = vmatpush.bf16.msra.mxu0 %v2849
    %3944 = vmatpush.bf16.msra.mxu0 %v2841
    %3945 = vmatpush.bf16.msra.mxu0 %v2833
    %3946 = vmatpush.bf16.msra.mxu0 %v2825
    %3947 = vmatpush.bf16.msra.mxu0 %v2817
    %3948 = vmatpush.bf16.msra.mxu0 %v2809
    %3949 = vmatmul.bf16.gmra.mxu0 %v1876
    %v3950 = vpop.f32.mrf.mxu0
    %v3951 = vadd.f32 %v3922, %v3950
    %v3952 = vpop.f32.mrf.mxu0
    %v3953 = vadd.f32 %v3924, %v3952
    %3954 = vmatmul.bf16.gmra.mxu0 %v1880
    %v3955 = vpop.f32.mrf.mxu0
    %v3956 = vadd.f32 %v3927, %v3955
    %v3957 = vpop.f32.mrf.mxu0
    %v3958 = vadd.f32 %v3929, %v3957
    %3959 = vmatmul.bf16.gmra.mxu0 %v1884
    %v3960 = vpop.f32.mrf.mxu0
    %v3961 = vadd.f32 %v3932, %v3960
    %v3962 = vpop.f32.mrf.mxu0
    %v3963 = vadd.f32 %v3934, %v3962
    %3964 = vmatmul.bf16.gmra.mxu0 %v1888
    %v3965 = vpop.f32.mrf.mxu0
    %v3966 = vadd.f32 %v3937, %v3965
    %v3967 = vpop.f32.mrf.mxu0
    %v3968 = vadd.f32 %v3939, %v3967
    %3969 = vdwg.mxu0
    %3970 = vmatpush.bf16.msra.mxu0 %v2929
    %3971 = vmatpush.bf16.msra.mxu0 %v2921
    %3972 = vmatpush.bf16.msra.mxu0 %v2913
    %3973 = vmatpush.bf16.msra.mxu0 %v2905
    %3974 = vmatpush.bf16.msra.mxu0 %v2897
    %3975 = vmatpush.bf16.msra.mxu0 %v2889
    %3976 = vmatpush.bf16.msra.mxu0 %v2881
    %3977 = vmatpush.bf16.msra.mxu0 %v2873
    %3978 = vmatmul.bf16.gmra.mxu0 %v1877
    %v3979 = vpop.f32.mrf.mxu0
    %v3980 = vadd.f32 %v3951, %v3979
    %v3981 = vpop.f32.mrf.mxu0
    %v3982 = vadd.f32 %v3953, %v3981
    %3983 = vmatmul.bf16.gmra.mxu0 %v1881
    %v3984 = vpop.f32.mrf.mxu0
    %v3985 = vadd.f32 %v3956, %v3984
    %v3986 = vpop.f32.mrf.mxu0
    %v3987 = vadd.f32 %v3958, %v3986
    %3988 = vmatmul.bf16.gmra.mxu0 %v1885
    %v3989 = vpop.f32.mrf.mxu0
    %v3990 = vadd.f32 %v3961, %v3989
    %v3991 = vpop.f32.mrf.mxu0
    %v3992 = vadd.f32 %v3963, %v3991
    %3993 = vmatmul.bf16.gmra.mxu0 %v1889
    %v3994 = vpop.f32.mrf.mxu0
    %v3995 = vadd.f32 %v3966, %v3994
    %v3996 = vpop.f32.mrf.mxu0
    %v3997 = vadd.f32 %v3968, %v3996
    %3998 = vdwg.mxu0
    %3999 = vmatpush.bf16.msra.mxu0 %v2738
    %4000 = vmatpush.bf16.msra.mxu0 %v2730
    %4001 = vmatpush.bf16.msra.mxu0 %v2722
    %4002 = vmatpush.bf16.msra.mxu0 %v2714
    %4003 = vmatpush.bf16.msra.mxu0 %v2706
    %4004 = vmatpush.bf16.msra.mxu0 %v2698
    %4005 = vmatpush.bf16.msra.mxu0 %v2690
    %4006 = vmatpush.bf16.msra.mxu0 %v2682
    %4007 = vmatmul.bf16.gmra.mxu0 %v1874
    %v4008 = vpop.f32.mrf.mxu0
    %v4009 = vadd.f32 %v1898, %v4008
    %v4010 = vpop.f32.mrf.mxu0
    %v4011 = vadd.f32 %v1898, %v4010
    %4012 = vmatmul.bf16.gmra.mxu0 %v1878
    %v4013 = vpop.f32.mrf.mxu0
    %v4014 = vadd.f32 %v1898, %v4013
    %v4015 = vpop.f32.mrf.mxu0
    %v4016 = vadd.f32 %v1898, %v4015
    %4017 = vmatmul.bf16.gmra.mxu0 %v1882
    %v4018 = vpop.f32.mrf.mxu0
    %v4019 = vadd.f32 %v1898, %v4018
    %v4020 = vpop.f32.mrf.mxu0
    %v4021 = vadd.f32 %v1898, %v4020
    %4022 = vmatmul.bf16.gmra.mxu0 %v1886
    %v4023 = vpop.f32.mrf.mxu0
    %v4024 = vadd.f32 %v1898, %v4023
    %v4025 = vpop.f32.mrf.mxu0
    %v4026 = vadd.f32 %v1898, %v4025
    %4027 = vdwg.mxu0
    %4028 = vmatpush.bf16.msra.mxu0 %v2802
    %4029 = vmatpush.bf16.msra.mxu0 %v2794
    %4030 = vmatpush.bf16.msra.mxu0 %v2786
    %4031 = vmatpush.bf16.msra.mxu0 %v2778
    %4032 = vmatpush.bf16.msra.mxu0 %v2770
    %4033 = vmatpush.bf16.msra.mxu0 %v2762
    %4034 = vmatpush.bf16.msra.mxu0 %v2754
    %4035 = vmatpush.bf16.msra.mxu0 %v2746
    %4036 = vmatmul.bf16.gmra.mxu0 %v1875
    %v4037 = vpop.f32.mrf.mxu0
    %v4038 = vadd.f32 %v4009, %v4037
    %v4039 = vpop.f32.mrf.mxu0
    %v4040 = vadd.f32 %v4011, %v4039
    %4041 = vmatmul.bf16.gmra.mxu0 %v1879
    %v4042 = vpop.f32.mrf.mxu0
    %v4043 = vadd.f32 %v4014, %v4042
    %v4044 = vpop.f32.mrf.mxu0
    %v4045 = vadd.f32 %v4016, %v4044
    %4046 = vmatmul.bf16.gmra.mxu0 %v1883
    %v4047 = vpop.f32.mrf.mxu0
    %v4048 = vadd.f32 %v4019, %v4047
    %v4049 = vpop.f32.mrf.mxu0
    %v4050 = vadd.f32 %v4021, %v4049
    %4051 = vmatmul.bf16.gmra.mxu0 %v1887
    %v4052 = vpop.f32.mrf.mxu0
    %v4053 = vadd.f32 %v4024, %v4052
    %v4054 = vpop.f32.mrf.mxu0
    %v4055 = vadd.f32 %v4026, %v4054
    %4056 = vdwg.mxu0
    %4057 = vmatpush.bf16.msra.mxu0 %v2866
    %4058 = vmatpush.bf16.msra.mxu0 %v2858
    %4059 = vmatpush.bf16.msra.mxu0 %v2850
    %4060 = vmatpush.bf16.msra.mxu0 %v2842
    %4061 = vmatpush.bf16.msra.mxu0 %v2834
    %4062 = vmatpush.bf16.msra.mxu0 %v2826
    %4063 = vmatpush.bf16.msra.mxu0 %v2818
    %4064 = vmatpush.bf16.msra.mxu0 %v2810
    %4065 = vmatmul.bf16.gmra.mxu0 %v1876
    %v4066 = vpop.f32.mrf.mxu0
    %v4067 = vadd.f32 %v4038, %v4066
    %v4068 = vpop.f32.mrf.mxu0
    %v4069 = vadd.f32 %v4040, %v4068
    %4070 = vmatmul.bf16.gmra.mxu0 %v1880
    %v4071 = vpop.f32.mrf.mxu0
    %v4072 = vadd.f32 %v4043, %v4071
    %v4073 = vpop.f32.mrf.mxu0
    %v4074 = vadd.f32 %v4045, %v4073
    %4075 = vmatmul.bf16.gmra.mxu0 %v1884
    %v4076 = vpop.f32.mrf.mxu0
    %v4077 = vadd.f32 %v4048, %v4076
    %v4078 = vpop.f32.mrf.mxu0
    %v4079 = vadd.f32 %v4050, %v4078
    %4080 = vmatmul.bf16.gmra.mxu0 %v1888
    %v4081 = vpop.f32.mrf.mxu0
    %v4082 = vadd.f32 %v4053, %v4081
    %v4083 = vpop.f32.mrf.mxu0
    %v4084 = vadd.f32 %v4055, %v4083
    %4085 = vdwg.mxu0
    %4086 = vmatpush.bf16.msra.mxu0 %v2930
    %4087 = vmatpush.bf16.msra.mxu0 %v2922
    %4088 = vmatpush.bf16.msra.mxu0 %v2914
    %4089 = vmatpush.bf16.msra.mxu0 %v2906
    %4090 = vmatpush.bf16.msra.mxu0 %v2898
    %4091 = vmatpush.bf16.msra.mxu0 %v2890
    %4092 = vmatpush.bf16.msra.mxu0 %v2882
    %4093 = vmatpush.bf16.msra.mxu0 %v2874
    %4094 = vmatmul.bf16.gmra.mxu0 %v1877
    %v4095 = vpop.f32.mrf.mxu0
    %v4096 = vadd.f32 %v4067, %v4095
    %v4097 = vpop.f32.mrf.mxu0
    %v4098 = vadd.f32 %v4069, %v4097
    %4099 = vmatmul.bf16.gmra.mxu0 %v1881
    %v4100 = vpop.f32.mrf.mxu0
    %v4101 = vadd.f32 %v4072, %v4100
    %v4102 = vpop.f32.mrf.mxu0
    %v4103 = vadd.f32 %v4074, %v4102
    %4104 = vmatmul.bf16.gmra.mxu0 %v1885
    %v4105 = vpop.f32.mrf.mxu0
    %v4106 = vadd.f32 %v4077, %v4105
    %v4107 = vpop.f32.mrf.mxu0
    %v4108 = vadd.f32 %v4079, %v4107
    %4109 = vmatmul.bf16.gmra.mxu0 %v1889
    %v4110 = vpop.f32.mrf.mxu0
    %v4111 = vadd.f32 %v4082, %v4110
    %v4112 = vpop.f32.mrf.mxu0
    %v4113 = vadd.f32 %v4084, %v4112
    %4114 = vdwg.mxu0
    %v4115 = vld [vmem:[#allocation13 + $0x1b] sm:$0xff]
    %v4116 = vld [vmem:[#allocation13 + $0x23] sm:$0xff]
    %v4117 = vadd.f32 %v3284, %v3286
    %v4118 = vadd.f32 %v4117, %v3289
    %v4119 = vadd.f32 %v4118, %v3291
    %v4120 = vadd.f32 %v4119, %v3294
    %v4121 = vadd.f32 %v4120, %v3296
    %v4122 = vadd.f32 %v4121, %v3299
    %v4123 = vadd.f32 %v4122, %v3301
    %v4124 = vrot.slane %v4123, 4
    %v4125 = vadd.f32 %v4123, %v4124
    %v4126 = vrot.slane %v4125, 2
    %v4127 = vadd.f32 %v4125, %v4126
    %v4128 = vrot.slane %v4127, 1
    %v4129 = vadd.f32 %v4127, %v4128
    %v4130 = vadd.f32 %v3400, %v3402
    %v4131 = vadd.f32 %v4130, %v3405
    %v4132 = vadd.f32 %v4131, %v3407
    %v4133 = vadd.f32 %v4132, %v3410
    %v4134 = vadd.f32 %v4133, %v3412
    %v4135 = vadd.f32 %v4134, %v3415
    %v4136 = vadd.f32 %v4135, %v3417
    %v4137 = vrot.slane %v4136, 4
    %v4138 = vadd.f32 %v4136, %v4137
    %v4139 = vrot.slane %v4138, 2
    %v4140 = vadd.f32 %v4138, %v4139
    %v4141 = vrot.slane %v4140, 1
    %v4142 = vadd.f32 %v4140, %v4141
    %v4143 = vadd.f32 %v3516, %v3518
    %v4144 = vadd.f32 %v4143, %v3521
    %v4145 = vadd.f32 %v4144, %v3523
    %v4146 = vadd.f32 %v4145, %v3526
    %v4147 = vadd.f32 %v4146, %v3528
    %v4148 = vadd.f32 %v4147, %v3531
    %v4149 = vadd.f32 %v4148, %v3533
    %v4150 = vrot.slane %v4149, 4
    %v4151 = vadd.f32 %v4149, %v4150
    %v4152 = vrot.slane %v4151, 2
    %v4153 = vadd.f32 %v4151, %v4152
    %v4154 = vrot.slane %v4153, 1
    %v4155 = vadd.f32 %v4153, %v4154
    %v4156 = vadd.f32 %v3632, %v3634
    %v4157 = vadd.f32 %v4156, %v3637
    %v4158 = vadd.f32 %v4157, %v3639
    %v4159 = vadd.f32 %v4158, %v3642
    %v4160 = vadd.f32 %v4159, %v3644
    %v4161 = vadd.f32 %v4160, %v3647
    %v4162 = vadd.f32 %v4161, %v3649
    %v4163 = vrot.slane %v4162, 4
    %v4164 = vadd.f32 %v4162, %v4163
    %v4165 = vrot.slane %v4164, 2
    %v4166 = vadd.f32 %v4164, %v4165
    %v4167 = vrot.slane %v4166, 1
    %v4168 = vadd.f32 %v4166, %v4167
    %v4169 = vadd.f32 %v3748, %v3750
    %v4170 = vadd.f32 %v4169, %v3753
    %v4171 = vadd.f32 %v4170, %v3755
    %v4172 = vadd.f32 %v4171, %v3758
    %v4173 = vadd.f32 %v4172, %v3760
    %v4174 = vadd.f32 %v4173, %v3763
    %v4175 = vadd.f32 %v4174, %v3765
    %v4176 = vrot.slane %v4175, 4
    %v4177 = vadd.f32 %v4175, %v4176
    %v4178 = vrot.slane %v4177, 2
    %v4179 = vadd.f32 %v4177, %v4178
    %v4180 = vrot.slane %v4179, 1
    %v4181 = vadd.f32 %v4179, %v4180
    %v4182 = vadd.f32 %v3864, %v3866
    %v4183 = vadd.f32 %v4182, %v3869
    %v4184 = vadd.f32 %v4183, %v3871
    %v4185 = vadd.f32 %v4184, %v3874
    %v4186 = vadd.f32 %v4185, %v3876
    %v4187 = vadd.f32 %v4186, %v3879
    %v4188 = vadd.f32 %v4187, %v3881
    %v4189 = vrot.slane %v4188, 4
    %v4190 = vadd.f32 %v4188, %v4189
    %v4191 = vrot.slane %v4190, 2
    %v4192 = vadd.f32 %v4190, %v4191
    %v4193 = vrot.slane %v4192, 1
    %v4194 = vadd.f32 %v4192, %v4193
    %v4195 = vadd.f32 %v3980, %v3982
    %v4196 = vadd.f32 %v4195, %v3985
    %v4197 = vadd.f32 %v4196, %v3987
    %v4198 = vadd.f32 %v4197, %v3990
    %v4199 = vadd.f32 %v4198, %v3992
    %v4200 = vadd.f32 %v4199, %v3995
    %v4201 = vadd.f32 %v4200, %v3997
    %v4202 = vrot.slane %v4201, 4
    %v4203 = vadd.f32 %v4201, %v4202
    %v4204 = vrot.slane %v4203, 2
    %v4205 = vadd.f32 %v4203, %v4204
    %v4206 = vrot.slane %v4205, 1
    %v4207 = vadd.f32 %v4205, %v4206
    %v4208 = vadd.f32 %v4096, %v4098
    %v4209 = vadd.f32 %v4208, %v4101
    %v4210 = vadd.f32 %v4209, %v4103
    %v4211 = vadd.f32 %v4210, %v4106
    %v4212 = vadd.f32 %v4211, %v4108
    %v4213 = vadd.f32 %v4212, %v4111
    %v4214 = vadd.f32 %v4213, %v4113
    %v4215 = vrot.slane %v4214, 4
    %v4216 = vadd.f32 %v4214, %v4215
    %v4217 = vrot.slane %v4216, 2
    %v4218 = vadd.f32 %v4216, %v4217
    %v4219 = vrot.slane %v4218, 1
    %v4220 = vadd.f32 %v4218, %v4219
    %v4221 = vmul.f32 %v4129, %v449
    %v4222 = vmul.f32 %v4142, %v449
    %v4223 = vmul.f32 %v4155, %v449
    %v4224 = vmul.f32 %v4168, %v449
    %v4225 = vmul.f32 %v4181, %v449
    %v4226 = vmul.f32 %v4194, %v449
    %v4227 = vmul.f32 %v4207, %v449
    %v4228 = vmul.f32 %v4220, %v449
    %v4229 = vmul.f32 %v3284, %v3284
    %v4230 = vmul.f32 %v3400, %v3400
    %v4231 = vmul.f32 %v3516, %v3516
    %v4232 = vmul.f32 %v3632, %v3632
    %v4233 = vmul.f32 %v3748, %v3748
    %v4234 = vmul.f32 %v3864, %v3864
    %v4235 = vmul.f32 %v3980, %v3980
    %v4236 = vmul.f32 %v4096, %v4096
    %v4237 = vmul.f32 %v3286, %v3286
    %v4238 = vmul.f32 %v3402, %v3402
    %v4239 = vmul.f32 %v3518, %v3518
    %v4240 = vmul.f32 %v3634, %v3634
    %v4241 = vmul.f32 %v3750, %v3750
    %v4242 = vmul.f32 %v3866, %v3866
    %v4243 = vmul.f32 %v3982, %v3982
    %v4244 = vmul.f32 %v4098, %v4098
    %v4245 = vmul.f32 %v3289, %v3289
    %v4246 = vmul.f32 %v3405, %v3405
    %v4247 = vmul.f32 %v3521, %v3521
    %v4248 = vmul.f32 %v3637, %v3637
    %v4249 = vmul.f32 %v3753, %v3753
    %v4250 = vmul.f32 %v3869, %v3869
    %v4251 = vmul.f32 %v3985, %v3985
    %v4252 = vmul.f32 %v4101, %v4101
    %v4253 = vmul.f32 %v3291, %v3291
    %v4254 = vmul.f32 %v3407, %v3407
    %v4255 = vmul.f32 %v3523, %v3523
    %v4256 = vmul.f32 %v3639, %v3639
    %v4257 = vmul.f32 %v3755, %v3755
    %v4258 = vmul.f32 %v3871, %v3871
    %v4259 = vmul.f32 %v3987, %v3987
    %v4260 = vmul.f32 %v4103, %v4103
    %v4261 = vmul.f32 %v3294, %v3294
    %v4262 = vmul.f32 %v3410, %v3410
    %v4263 = vmul.f32 %v3526, %v3526
    %v4264 = vmul.f32 %v3642, %v3642
    %v4265 = vmul.f32 %v3758, %v3758
    %v4266 = vmul.f32 %v3874, %v3874
    %v4267 = vmul.f32 %v3990, %v3990
    %v4268 = vmul.f32 %v4106, %v4106
    %v4269 = vmul.f32 %v3296, %v3296
    %v4270 = vmul.f32 %v3412, %v3412
    %v4271 = vmul.f32 %v3528, %v3528
    %v4272 = vmul.f32 %v3644, %v3644
    %v4273 = vmul.f32 %v3760, %v3760
    %v4274 = vmul.f32 %v3876, %v3876
    %v4275 = vmul.f32 %v3992, %v3992
    %v4276 = vmul.f32 %v4108, %v4108
    %v4277 = vmul.f32 %v3299, %v3299
    %v4278 = vmul.f32 %v3415, %v3415
    %v4279 = vmul.f32 %v3531, %v3531
    %v4280 = vmul.f32 %v3647, %v3647
    %v4281 = vmul.f32 %v3763, %v3763
    %v4282 = vmul.f32 %v3879, %v3879
    %v4283 = vmul.f32 %v3995, %v3995
    %v4284 = vmul.f32 %v4111, %v4111
    %v4285 = vmul.f32 %v3301, %v3301
    %v4286 = vmul.f32 %v3417, %v3417
    %v4287 = vmul.f32 %v3533, %v3533
    %v4288 = vmul.f32 %v3649, %v3649
    %v4289 = vmul.f32 %v3765, %v3765
    %v4290 = vmul.f32 %v3881, %v3881
    %v4291 = vmul.f32 %v3997, %v3997
    %v4292 = vmul.f32 %v4113, %v4113
    %v4293 = vadd.f32 %v4229, %v4237
    %v4294 = vadd.f32 %v4293, %v4245
    %v4295 = vadd.f32 %v4294, %v4253
    %v4296 = vadd.f32 %v4295, %v4261
    %v4297 = vadd.f32 %v4296, %v4269
    %v4298 = vadd.f32 %v4297, %v4277
    %v4299 = vadd.f32 %v4298, %v4285
    %v4300 = vrot.slane %v4299, 4
    %v4301 = vadd.f32 %v4299, %v4300
    %v4302 = vrot.slane %v4301, 2
    %v4303 = vadd.f32 %v4301, %v4302
    %v4304 = vrot.slane %v4303, 1
    %v4305 = vadd.f32 %v4303, %v4304
    %v4306 = vadd.f32 %v4230, %v4238
    %v4307 = vadd.f32 %v4306, %v4246
    %v4308 = vadd.f32 %v4307, %v4254
    %v4309 = vadd.f32 %v4308, %v4262
    %v4310 = vadd.f32 %v4309, %v4270
    %v4311 = vadd.f32 %v4310, %v4278
    %v4312 = vadd.f32 %v4311, %v4286
    %v4313 = vrot.slane %v4312, 4
    %v4314 = vadd.f32 %v4312, %v4313
    %v4315 = vrot.slane %v4314, 2
    %v4316 = vadd.f32 %v4314, %v4315
    %v4317 = vrot.slane %v4316, 1
    %v4318 = vadd.f32 %v4316, %v4317
    %v4319 = vadd.f32 %v4231, %v4239
    %v4320 = vadd.f32 %v4319, %v4247
    %v4321 = vadd.f32 %v4320, %v4255
    %v4322 = vadd.f32 %v4321, %v4263
    %v4323 = vadd.f32 %v4322, %v4271
    %v4324 = vadd.f32 %v4323, %v4279
    %v4325 = vadd.f32 %v4324, %v4287
    %v4326 = vrot.slane %v4325, 4
    %v4327 = vadd.f32 %v4325, %v4326
    %v4328 = vrot.slane %v4327, 2
    %v4329 = vadd.f32 %v4327, %v4328
    %v4330 = vrot.slane %v4329, 1
    %v4331 = vadd.f32 %v4329, %v4330
    %v4332 = vadd.f32 %v4232, %v4240
    %v4333 = vadd.f32 %v4332, %v4248
    %v4334 = vadd.f32 %v4333, %v4256
    %v4335 = vadd.f32 %v4334, %v4264
    %v4336 = vadd.f32 %v4335, %v4272
    %v4337 = vadd.f32 %v4336, %v4280
    %v4338 = vadd.f32 %v4337, %v4288
    %v4339 = vrot.slane %v4338, 4
    %v4340 = vadd.f32 %v4338, %v4339
    %v4341 = vrot.slane %v4340, 2
    %v4342 = vadd.f32 %v4340, %v4341
    %v4343 = vrot.slane %v4342, 1
    %v4344 = vadd.f32 %v4342, %v4343
    %v4345 = vadd.f32 %v4233, %v4241
    %v4346 = vadd.f32 %v4345, %v4249
    %v4347 = vadd.f32 %v4346, %v4257
    %v4348 = vadd.f32 %v4347, %v4265
    %v4349 = vadd.f32 %v4348, %v4273
    %v4350 = vadd.f32 %v4349, %v4281
    %v4351 = vadd.f32 %v4350, %v4289
    %v4352 = vrot.slane %v4351, 4
    %v4353 = vadd.f32 %v4351, %v4352
    %v4354 = vrot.slane %v4353, 2
    %v4355 = vadd.f32 %v4353, %v4354
    %v4356 = vrot.slane %v4355, 1
    %v4357 = vadd.f32 %v4355, %v4356
    %v4358 = vadd.f32 %v4234, %v4242
    %v4359 = vadd.f32 %v4358, %v4250
    %v4360 = vadd.f32 %v4359, %v4258
    %v4361 = vadd.f32 %v4360, %v4266
    %v4362 = vadd.f32 %v4361, %v4274
    %v4363 = vadd.f32 %v4362, %v4282
    %v4364 = vadd.f32 %v4363, %v4290
    %v4365 = vrot.slane %v4364, 4
    %v4366 = vadd.f32 %v4364, %v4365
    %v4367 = vrot.slane %v4366, 2
    %v4368 = vadd.f32 %v4366, %v4367
    %v4369 = vrot.slane %v4368, 1
    %v4370 = vadd.f32 %v4368, %v4369
    %v4371 = vadd.f32 %v4235, %v4243
    %v4372 = vadd.f32 %v4371, %v4251
    %v4373 = vadd.f32 %v4372, %v4259
    %v4374 = vadd.f32 %v4373, %v4267
    %v4375 = vadd.f32 %v4374, %v4275
    %v4376 = vadd.f32 %v4375, %v4283
    %v4377 = vadd.f32 %v4376, %v4291
    %v4378 = vrot.slane %v4377, 4
    %v4379 = vadd.f32 %v4377, %v4378
    %v4380 = vrot.slane %v4379, 2
    %v4381 = vadd.f32 %v4379, %v4380
    %v4382 = vrot.slane %v4381, 1
    %v4383 = vadd.f32 %v4381, %v4382
    %v4384 = vadd.f32 %v4236, %v4244
    %v4385 = vadd.f32 %v4384, %v4252
    %v4386 = vadd.f32 %v4385, %v4260
    %v4387 = vadd.f32 %v4386, %v4268
    %v4388 = vadd.f32 %v4387, %v4276
    %v4389 = vadd.f32 %v4388, %v4284
    %v4390 = vadd.f32 %v4389, %v4292
    %v4391 = vrot.slane %v4390, 4
    %v4392 = vadd.f32 %v4390, %v4391
    %v4393 = vrot.slane %v4392, 2
    %v4394 = vadd.f32 %v4392, %v4393
    %v4395 = vrot.slane %v4394, 1
    %v4396 = vadd.f32 %v4394, %v4395
    %v4397 = vmul.f32 %v4305, %v449
    %v4398 = vmul.f32 %v4318, %v449
    %v4399 = vmul.f32 %v4331, %v449
    %v4400 = vmul.f32 %v4344, %v449
    %v4401 = vmul.f32 %v4357, %v449
    %v4402 = vmul.f32 %v4370, %v449
    %v4403 = vmul.f32 %v4383, %v449
    %v4404 = vmul.f32 %v4396, %v449
    %v4405 = vmul.f32 %v4221, %v4221
    %v4406 = vmul.f32 %v4222, %v4222
    %v4407 = vmul.f32 %v4223, %v4223
    %v4408 = vmul.f32 %v4224, %v4224
    %v4409 = vmul.f32 %v4225, %v4225
    %v4410 = vmul.f32 %v4226, %v4226
    %v4411 = vmul.f32 %v4227, %v4227
    %v4412 = vmul.f32 %v4228, %v4228
    %v4413 = vsub.f32 %v4397, %v4405
    %v4414 = vsub.f32 %v4398, %v4406
    %v4415 = vsub.f32 %v4399, %v4407
    %v4416 = vsub.f32 %v4400, %v4408
    %v4417 = vsub.f32 %v4401, %v4409
    %v4418 = vsub.f32 %v4402, %v4410
    %v4419 = vsub.f32 %v4403, %v4411
    %v4420 = vsub.f32 %v4404, %v4412
    %v4421 = vadd.f32 %v4413, 0.8
    %v4422 = vadd.f32 %v4414, 0.8
    %v4423 = vadd.f32 %v4415, 0.8
    %v4424 = vadd.f32 %v4416, 0.8
    %v4425 = vadd.f32 %v4417, 0.8
    %v4426 = vadd.f32 %v4418, 0.8
    %v4427 = vadd.f32 %v4419, 0.8
    %v4428 = vadd.f32 %v4420, 0.8
    %v4429 = vrsqrt.pop %v4421
    %v4430 = vmul.f32 %v4429, %v4421
    %v4431 = vmul.f32 %v4430, %v4429
    %v4432 = vmul.f32 0.5, %v4431
    %v4433 = vsub.f32 1.5, %v4432
    %v4434 = vmul.f32 %v4429, %v4433
    %vm4435 = vweird.f32 %v4421
    %vm4436 = vweird.f32 %v4429
    %vm4437 = vmor %vm4435, %vm4436
    %v4438 = vsel %vm4437, %v4429, %v4434
    %v4439 = vrsqrt.pop %v4422
    %v4440 = vmul.f32 %v4439, %v4422
    %v4441 = vmul.f32 %v4440, %v4439
    %v4442 = vmul.f32 0.5, %v4441
    %v4443 = vsub.f32 1.5, %v4442
    %v4444 = vmul.f32 %v4439, %v4443
    %vm4445 = vweird.f32 %v4422
    %vm4446 = vweird.f32 %v4439
    %vm4447 = vmor %vm4445, %vm4446
    %v4448 = vsel %vm4447, %v4439, %v4444
    %v4449 = vrsqrt.pop %v4423
    %v4450 = vmul.f32 %v4449, %v4423
    %v4451 = vmul.f32 %v4450, %v4449
    %v4452 = vmul.f32 0.5, %v4451
    %v4453 = vsub.f32 1.5, %v4452
    %v4454 = vmul.f32 %v4449, %v4453
    %vm4455 = vweird.f32 %v4423
    %vm4456 = vweird.f32 %v4449
    %vm4457 = vmor %vm4455, %vm4456
    %v4458 = vsel %vm4457, %v4449, %v4454
    %v4459 = vrsqrt.pop %v4424
    %v4460 = vmul.f32 %v4459, %v4424
    %v4461 = vmul.f32 %v4460, %v4459
    %v4462 = vmul.f32 0.5, %v4461
    %v4463 = vsub.f32 1.5, %v4462
    %v4464 = vmul.f32 %v4459, %v4463
    %vm4465 = vweird.f32 %v4424
    %vm4466 = vweird.f32 %v4459
    %vm4467 = vmor %vm4465, %vm4466
    %v4468 = vsel %vm4467, %v4459, %v4464
    %v4469 = vrsqrt.pop %v4425
    %v4470 = vmul.f32 %v4469, %v4425
    %v4471 = vmul.f32 %v4470, %v4469
    %v4472 = vmul.f32 0.5, %v4471
    %v4473 = vsub.f32 1.5, %v4472
    %v4474 = vmul.f32 %v4469, %v4473
    %vm4475 = vweird.f32 %v4425
    %vm4476 = vweird.f32 %v4469
    %vm4477 = vmor %vm4475, %vm4476
    %v4478 = vsel %vm4477, %v4469, %v4474
    %v4479 = vrsqrt.pop %v4426
    %v4480 = vmul.f32 %v4479, %v4426
    %v4481 = vmul.f32 %v4480, %v4479
    %v4482 = vmul.f32 0.5, %v4481
    %v4483 = vsub.f32 1.5, %v4482
    %v4484 = vmul.f32 %v4479, %v4483
    %vm4485 = vweird.f32 %v4426
    %vm4486 = vweird.f32 %v4479
    %vm4487 = vmor %vm4485, %vm4486
    %v4488 = vsel %vm4487, %v4479, %v4484
    %v4489 = vrsqrt.pop %v4427
    %v4490 = vmul.f32 %v4489, %v4427
    %v4491 = vmul.f32 %v4490, %v4489
    %v4492 = vmul.f32 0.5, %v4491
    %v4493 = vsub.f32 1.5, %v4492
    %v4494 = vmul.f32 %v4489, %v4493
    %vm4495 = vweird.f32 %v4427
    %vm4496 = vweird.f32 %v4489
    %vm4497 = vmor %vm4495, %vm4496
    %v4498 = vsel %vm4497, %v4489, %v4494
    %v4499 = vrsqrt.pop %v4428
    %v4500 = vmul.f32 %v4499, %v4428
    %v4501 = vmul.f32 %v4500, %v4499
    %v4502 = vmul.f32 0.5, %v4501
    %v4503 = vsub.f32 1.5, %v4502
    %v4504 = vmul.f32 %v4499, %v4503
    %vm4505 = vweird.f32 %v4428
    %vm4506 = vweird.f32 %v4499
    %vm4507 = vmor %vm4505, %vm4506
    %v4508 = vsel %vm4507, %v4499, %v4504
    %v4510 = vperm.slane %v4115, 0
    %v4511 = vperm.slane %v4115, 1
    %v4512 = vperm.slane %v4115, 2
    %v4513 = vperm.slane %v4115, 3
    %v4514 = vperm.slane %v4115, 4
    %v4515 = vperm.slane %v4115, 5
    %v4516 = vperm.slane %v4115, 6
    %v4517 = vperm.slane %v4115, 7
    %v4526 = vmul.f32 %v4438, %v4510
    %v4527 = vmul.f32 %v4448, %v4511
    %v4528 = vmul.f32 %v4458, %v4512
    %v4529 = vmul.f32 %v4468, %v4513
    %v4530 = vmul.f32 %v4478, %v4514
    %v4531 = vmul.f32 %v4488, %v4515
    %v4532 = vmul.f32 %v4498, %v4516
    %v4533 = vmul.f32 %v4508, %v4517
    %v4534 = vmul.f32 %v4221, %v4526
    %v4535 = vmul.f32 %v4222, %v4527
    %v4536 = vmul.f32 %v4223, %v4528
    %v4537 = vmul.f32 %v4224, %v4529
    %v4538 = vmul.f32 %v4225, %v4530
    %v4539 = vmul.f32 %v4226, %v4531
    %v4540 = vmul.f32 %v4227, %v4532
    %v4541 = vmul.f32 %v4228, %v4533
    %v4550 = vrot.slane %v4535, 7
    %v4551 = vrot.slane %v4536, 6
    %v4552 = vrot.slane %v4537, 5
    %v4553 = vrot.slane %v4538, 4
    %v4554 = vrot.slane %v4539, 3
    %v4555 = vrot.slane %v4540, 2
    %v4556 = vrot.slane %v4541, 1
    %v4557 = vsel %vm534, %v4534, %v4550
    %v4558 = vsel %vm1466, %v4551, %v4552
    %v4559 = vsel %vm1468, %v4557, %v4558
    %vm4560 = vcmask 1044484
    %v4561 = vsel %vm4560, %v4553, %v4554
    %vm4562 = vcmask 1046534
    %v4563 = vsel %vm4562, %v4555, %v4556
    %vm4564 = vcmask 1045508
    %v4565 = vsel %vm4564, %v4561, %v4563
    %vm4566 = vcmask 1043456
    %v4567 = vsel %vm4566, %v4559, %v4565
    %v4569 = vsub.f32 %v4116, %v4567
    %v4570 = vperm.slane %v4526, 0
    %v4571 = vperm.slane %v4527, 0
    %v4572 = vperm.slane %v4528, 0
    %v4573 = vperm.slane %v4529, 0
    %v4574 = vperm.slane %v4530, 0
    %v4575 = vperm.slane %v4531, 0
    %v4576 = vperm.slane %v4532, 0
    %v4577 = vperm.slane %v4533, 0
    %v4578 = vmul.f32 %v3284, %v4570
    %v4579 = vmul.f32 %v3400, %v4571
    %v4580 = vmul.f32 %v3516, %v4572
    %v4581 = vmul.f32 %v3632, %v4573
    %v4582 = vmul.f32 %v3748, %v4574
    %v4583 = vmul.f32 %v3864, %v4575
    %v4584 = vmul.f32 %v3980, %v4576
    %v4585 = vmul.f32 %v4096, %v4577
    %v4586 = vmul.f32 %v3286, %v4570
    %v4587 = vmul.f32 %v3402, %v4571
    %v4588 = vmul.f32 %v3518, %v4572
    %v4589 = vmul.f32 %v3634, %v4573
    %v4590 = vmul.f32 %v3750, %v4574
    %v4591 = vmul.f32 %v3866, %v4575
    %v4592 = vmul.f32 %v3982, %v4576
    %v4593 = vmul.f32 %v4098, %v4577
    %v4594 = vmul.f32 %v3289, %v4570
    %v4595 = vmul.f32 %v3405, %v4571
    %v4596 = vmul.f32 %v3521, %v4572
    %v4597 = vmul.f32 %v3637, %v4573
    %v4598 = vmul.f32 %v3753, %v4574
    %v4599 = vmul.f32 %v3869, %v4575
    %v4600 = vmul.f32 %v3985, %v4576
    %v4601 = vmul.f32 %v4101, %v4577
    %v4602 = vmul.f32 %v3291, %v4570
    %v4603 = vmul.f32 %v3407, %v4571
    %v4604 = vmul.f32 %v3523, %v4572
    %v4605 = vmul.f32 %v3639, %v4573
    %v4606 = vmul.f32 %v3755, %v4574
    %v4607 = vmul.f32 %v3871, %v4575
    %v4608 = vmul.f32 %v3987, %v4576
    %v4609 = vmul.f32 %v4103, %v4577
    %v4610 = vmul.f32 %v3294, %v4570
    %v4611 = vmul.f32 %v3410, %v4571
    %v4612 = vmul.f32 %v3526, %v4572
    %v4613 = vmul.f32 %v3642, %v4573
    %v4614 = vmul.f32 %v3758, %v4574
    %v4615 = vmul.f32 %v3874, %v4575
    %v4616 = vmul.f32 %v3990, %v4576
    %v4617 = vmul.f32 %v4106, %v4577
    %v4618 = vmul.f32 %v3296, %v4570
    %v4619 = vmul.f32 %v3412, %v4571
    %v4620 = vmul.f32 %v3528, %v4572
    %v4621 = vmul.f32 %v3644, %v4573
    %v4622 = vmul.f32 %v3760, %v4574
    %v4623 = vmul.f32 %v3876, %v4575
    %v4624 = vmul.f32 %v3992, %v4576
    %v4625 = vmul.f32 %v4108, %v4577
    %v4626 = vmul.f32 %v3299, %v4570
    %v4627 = vmul.f32 %v3415, %v4571
    %v4628 = vmul.f32 %v3531, %v4572
    %v4629 = vmul.f32 %v3647, %v4573
    %v4630 = vmul.f32 %v3763, %v4574
    %v4631 = vmul.f32 %v3879, %v4575
    %v4632 = vmul.f32 %v3995, %v4576
    %v4633 = vmul.f32 %v4111, %v4577
    %v4634 = vmul.f32 %v3301, %v4570
    %v4635 = vmul.f32 %v3417, %v4571
    %v4636 = vmul.f32 %v3533, %v4572
    %v4637 = vmul.f32 %v3649, %v4573
    %v4638 = vmul.f32 %v3765, %v4574
    %v4639 = vmul.f32 %v3881, %v4575
    %v4640 = vmul.f32 %v3997, %v4576
    %v4641 = vmul.f32 %v4113, %v4577
    %v4643 = vperm.slane %v4569, 0
    %v4644 = vperm.slane %v4569, 1
    %v4645 = vperm.slane %v4569, 2
    %v4646 = vperm.slane %v4569, 3
    %v4647 = vperm.slane %v4569, 4
    %v4648 = vperm.slane %v4569, 5
    %v4649 = vperm.slane %v4569, 6
    %v4650 = vperm.slane %v4569, 7
    %v4659 = vadd.f32 %v4578, %v4643
    %v4660 = vadd.f32 %v4579, %v4644
    %v4661 = vadd.f32 %v4580, %v4645
    %v4662 = vadd.f32 %v4581, %v4646
    %v4663 = vadd.f32 %v4582, %v4647
    %v4664 = vadd.f32 %v4583, %v4648
    %v4665 = vadd.f32 %v4584, %v4649
    %v4666 = vadd.f32 %v4585, %v4650
    %v4667 = vadd.f32 %v4586, %v4643
    %v4668 = vadd.f32 %v4587, %v4644
    %v4669 = vadd.f32 %v4588, %v4645
    %v4670 = vadd.f32 %v4589, %v4646
    %v4671 = vadd.f32 %v4590, %v4647
    %v4672 = vadd.f32 %v4591, %v4648
    %v4673 = vadd.f32 %v4592, %v4649
    %v4674 = vadd.f32 %v4593, %v4650
    %v4675 = vadd.f32 %v4594, %v4643
    %v4676 = vadd.f32 %v4595, %v4644
    %v4677 = vadd.f32 %v4596, %v4645
    %v4678 = vadd.f32 %v4597, %v4646
    %v4679 = vadd.f32 %v4598, %v4647
    %v4680 = vadd.f32 %v4599, %v4648
    %v4681 = vadd.f32 %v4600, %v4649
    %v4682 = vadd.f32 %v4601, %v4650
    %v4683 = vadd.f32 %v4602, %v4643
    %v4684 = vadd.f32 %v4603, %v4644
    %v4685 = vadd.f32 %v4604, %v4645
    %v4686 = vadd.f32 %v4605, %v4646
    %v4687 = vadd.f32 %v4606, %v4647
    %v4688 = vadd.f32 %v4607, %v4648
    %v4689 = vadd.f32 %v4608, %v4649
    %v4690 = vadd.f32 %v4609, %v4650
    %v4691 = vadd.f32 %v4610, %v4643
    %v4692 = vadd.f32 %v4611, %v4644
    %v4693 = vadd.f32 %v4612, %v4645
    %v4694 = vadd.f32 %v4613, %v4646
    %v4695 = vadd.f32 %v4614, %v4647
    %v4696 = vadd.f32 %v4615, %v4648
    %v4697 = vadd.f32 %v4616, %v4649
    %v4698 = vadd.f32 %v4617, %v4650
    %v4699 = vadd.f32 %v4618, %v4643
    %v4700 = vadd.f32 %v4619, %v4644
    %v4701 = vadd.f32 %v4620, %v4645
    %v4702 = vadd.f32 %v4621, %v4646
    %v4703 = vadd.f32 %v4622, %v4647
    %v4704 = vadd.f32 %v4623, %v4648
    %v4705 = vadd.f32 %v4624, %v4649
    %v4706 = vadd.f32 %v4625, %v4650
    %v4707 = vadd.f32 %v4626, %v4643
    %v4708 = vadd.f32 %v4627, %v4644
    %v4709 = vadd.f32 %v4628, %v4645
    %v4710 = vadd.f32 %v4629, %v4646
    %v4711 = vadd.f32 %v4630, %v4647
    %v4712 = vadd.f32 %v4631, %v4648
    %v4713 = vadd.f32 %v4632, %v4649
    %v4714 = vadd.f32 %v4633, %v4650
    %v4715 = vadd.f32 %v4634, %v4643
    %v4716 = vadd.f32 %v4635, %v4644
    %v4717 = vadd.f32 %v4636, %v4645
    %v4718 = vadd.f32 %v4637, %v4646
    %v4719 = vadd.f32 %v4638, %v4647
    %v4720 = vadd.f32 %v4639, %v4648
    %v4721 = vadd.f32 %v4640, %v4649
    %v4722 = vadd.f32 %v4641, %v4650
    %v4723 = vmul.f32 %v4659, 0.2
    %v4724 = vmul.f32 %v4660, 0.2
    %v4725 = vmul.f32 %v4661, 0.2
    %v4726 = vmul.f32 %v4662, 0.2
    %v4727 = vmul.f32 %v4663, 0.2
    %v4728 = vmul.f32 %v4664, 0.2
    %v4729 = vmul.f32 %v4665, 0.2
    %v4730 = vmul.f32 %v4666, 0.2
    %v4731 = vmul.f32 %v4667, 0.2
    %v4732 = vmul.f32 %v4668, 0.2
    %v4733 = vmul.f32 %v4669, 0.2
    %v4734 = vmul.f32 %v4670, 0.2
    %v4735 = vmul.f32 %v4671, 0.2
    %v4736 = vmul.f32 %v4672, 0.2
    %v4737 = vmul.f32 %v4673, 0.2
    %v4738 = vmul.f32 %v4674, 0.2
    %v4739 = vmul.f32 %v4675, 0.2
    %v4740 = vmul.f32 %v4676, 0.2
    %v4741 = vmul.f32 %v4677, 0.2
    %v4742 = vmul.f32 %v4678, 0.2
    %v4743 = vmul.f32 %v4679, 0.2
    %v4744 = vmul.f32 %v4680, 0.2
    %v4745 = vmul.f32 %v4681, 0.2
    %v4746 = vmul.f32 %v4682, 0.2
    %v4747 = vmul.f32 %v4683, 0.2
    %v4748 = vmul.f32 %v4684, 0.2
    %v4749 = vmul.f32 %v4685, 0.2
    %v4750 = vmul.f32 %v4686, 0.2
    %v4751 = vmul.f32 %v4687, 0.2
    %v4752 = vmul.f32 %v4688, 0.2
    %v4753 = vmul.f32 %v4689, 0.2
    %v4754 = vmul.f32 %v4690, 0.2
    %v4755 = vmul.f32 %v4691, 0.2
    %v4756 = vmul.f32 %v4692, 0.2
    %v4757 = vmul.f32 %v4693, 0.2
    %v4758 = vmul.f32 %v4694, 0.2
    %v4759 = vmul.f32 %v4695, 0.2
    %v4760 = vmul.f32 %v4696, 0.2
    %v4761 = vmul.f32 %v4697, 0.2
    %v4762 = vmul.f32 %v4698, 0.2
    %v4763 = vmul.f32 %v4699, 0.2
    %v4764 = vmul.f32 %v4700, 0.2
    %v4765 = vmul.f32 %v4701, 0.2
    %v4766 = vmul.f32 %v4702, 0.2
    %v4767 = vmul.f32 %v4703, 0.2
    %v4768 = vmul.f32 %v4704, 0.2
    %v4769 = vmul.f32 %v4705, 0.2
    %v4770 = vmul.f32 %v4706, 0.2
    %v4771 = vmul.f32 %v4707, 0.2
    %v4772 = vmul.f32 %v4708, 0.2
    %v4773 = vmul.f32 %v4709, 0.2
    %v4774 = vmul.f32 %v4710, 0.2
    %v4775 = vmul.f32 %v4711, 0.2
    %v4776 = vmul.f32 %v4712, 0.2
    %v4777 = vmul.f32 %v4713, 0.2
    %v4778 = vmul.f32 %v4714, 0.2
    %v4779 = vmul.f32 %v4715, 0.2
    %v4780 = vmul.f32 %v4716, 0.2
    %v4781 = vmul.f32 %v4717, 0.2
    %v4782 = vmul.f32 %v4718, 0.2
    %v4783 = vmul.f32 %v4719, 0.2
    %v4784 = vmul.f32 %v4720, 0.2
    %v4785 = vmul.f32 %v4721, 0.2
    %v4786 = vmul.f32 %v4722, 0.2
    %v4787 = vmax.f32 %v4659, %v4723
    %v4788 = vmax.f32 %v4660, %v4724
    %v4789 = vmax.f32 %v4661, %v4725
    %v4790 = vmax.f32 %v4662, %v4726
    %v4791 = vmax.f32 %v4663, %v4727
    %v4792 = vmax.f32 %v4664, %v4728
    %v4793 = vmax.f32 %v4665, %v4729
    %v4794 = vmax.f32 %v4666, %v4730
    %v4795 = vmax.f32 %v4667, %v4731
    %v4796 = vmax.f32 %v4668, %v4732
    %v4797 = vmax.f32 %v4669, %v4733
    %v4798 = vmax.f32 %v4670, %v4734
    %v4799 = vmax.f32 %v4671, %v4735
    %v4800 = vmax.f32 %v4672, %v4736
    %v4801 = vmax.f32 %v4673, %v4737
    %v4802 = vmax.f32 %v4674, %v4738
    %v4803 = vmax.f32 %v4675, %v4739
    %v4804 = vmax.f32 %v4676, %v4740
    %v4805 = vmax.f32 %v4677, %v4741
    %v4806 = vmax.f32 %v4678, %v4742
    %v4807 = vmax.f32 %v4679, %v4743
    %v4808 = vmax.f32 %v4680, %v4744
    %v4809 = vmax.f32 %v4681, %v4745
    %v4810 = vmax.f32 %v4682, %v4746
    %v4811 = vmax.f32 %v4683, %v4747
    %v4812 = vmax.f32 %v4684, %v4748
    %v4813 = vmax.f32 %v4685, %v4749
    %v4814 = vmax.f32 %v4686, %v4750
    %v4815 = vmax.f32 %v4687, %v4751
    %v4816 = vmax.f32 %v4688, %v4752
    %v4817 = vmax.f32 %v4689, %v4753
    %v4818 = vmax.f32 %v4690, %v4754
    %v4819 = vmax.f32 %v4691, %v4755
    %v4820 = vmax.f32 %v4692, %v4756
    %v4821 = vmax.f32 %v4693, %v4757
    %v4822 = vmax.f32 %v4694, %v4758
    %v4823 = vmax.f32 %v4695, %v4759
    %v4824 = vmax.f32 %v4696, %v4760
    %v4825 = vmax.f32 %v4697, %v4761
    %v4826 = vmax.f32 %v4698, %v4762
    %v4827 = vmax.f32 %v4699, %v4763
    %v4828 = vmax.f32 %v4700, %v4764
    %v4829 = vmax.f32 %v4701, %v4765
    %v4830 = vmax.f32 %v4702, %v4766
    %v4831 = vmax.f32 %v4703, %v4767
    %v4832 = vmax.f32 %v4704, %v4768
    %v4833 = vmax.f32 %v4705, %v4769
    %v4834 = vmax.f32 %v4706, %v4770
    %v4835 = vmax.f32 %v4707, %v4771
    %v4836 = vmax.f32 %v4708, %v4772
    %v4837 = vmax.f32 %v4709, %v4773
    %v4838 = vmax.f32 %v4710, %v4774
    %v4839 = vmax.f32 %v4711, %v4775
    %v4840 = vmax.f32 %v4712, %v4776
    %v4841 = vmax.f32 %v4713, %v4777
    %v4842 = vmax.f32 %v4714, %v4778
    %v4843 = vmax.f32 %v4715, %v4779
    %v4844 = vmax.f32 %v4716, %v4780
    %v4845 = vmax.f32 %v4717, %v4781
    %v4846 = vmax.f32 %v4718, %v4782
    %v4847 = vmax.f32 %v4719, %v4783
    %v4848 = vmax.f32 %v4720, %v4784
    %v4849 = vmax.f32 %v4721, %v4785
    %v4850 = vmax.f32 %v4722, %v4786
    %s4851 = smul.u32 4, 128
    %s4852 = smul.u32 %s4851, 2
    %s4853 = sshll.u32 %s4852, 4
    %4854 = dma.done %s112, %s4853
    %v4855 = vld [vmem:[#allocation3] sm:$0xff]
    %v4856 = vld [vmem:[#allocation3 + $0x8] sm:$0xff]
    %v4857 = vld [vmem:[#allocation3 + $0x10] sm:$0xff]
    %v4858 = vld [vmem:[#allocation3 + $0x18] sm:$0xff]
    %v4859 = vld [vmem:[#allocation3 + $0x20] sm:$0xff]
    %v4860 = vld [vmem:[#allocation3 + $0x28] sm:$0xff]
    %v4861 = vld [vmem:[#allocation3 + $0x30] sm:$0xff]
    %v4862 = vld [vmem:[#allocation3 + $0x38] sm:$0xff]
    %v4863 = vld [vmem:[#allocation3 + $0x40] sm:$0xff]
    %v4864 = vld [vmem:[#allocation3 + $0x48] sm:$0xff]
    %v4865 = vld [vmem:[#allocation3 + $0x50] sm:$0xff]
    %v4866 = vld [vmem:[#allocation3 + $0x58] sm:$0xff]
    %v4867 = vld [vmem:[#allocation3 + $0x60] sm:$0xff]
    %v4868 = vld [vmem:[#allocation3 + $0x68] sm:$0xff]
    %v4869 = vld [vmem:[#allocation3 + $0x70] sm:$0xff]
    %v4870 = vld [vmem:[#allocation3 + $0x78] sm:$0xff]
    %v4871 = vld [vmem:[#allocation3 + $0x80] sm:$0xff]
    %v4872 = vld [vmem:[#allocation3 + $0x88] sm:$0xff]
    %v4873 = vld [vmem:[#allocation3 + $0x90] sm:$0xff]
    %v4874 = vld [vmem:[#allocation3 + $0x98] sm:$0xff]
    %v4875 = vld [vmem:[#allocation3 + $0xa0] sm:$0xff]
    %v4876 = vld [vmem:[#allocation3 + $0xa8] sm:$0xff]
    %v4877 = vld [vmem:[#allocation3 + $0xb0] sm:$0xff]
    %v4878 = vld [vmem:[#allocation3 + $0xb8] sm:$0xff]
    %v4879 = vld [vmem:[#allocation3 + $0xc0] sm:$0xff]
    %v4880 = vld [vmem:[#allocation3 + $0xc8] sm:$0xff]
    %v4881 = vld [vmem:[#allocation3 + $0xd0] sm:$0xff]
    %v4882 = vld [vmem:[#allocation3 + $0xd8] sm:$0xff]
    %v4883 = vld [vmem:[#allocation3 + $0xe0] sm:$0xff]
    %v4884 = vld [vmem:[#allocation3 + $0xe8] sm:$0xff]
    %v4885 = vld [vmem:[#allocation3 + $0xf0] sm:$0xff]
    %v4886 = vld [vmem:[#allocation3 + $0xf8] sm:$0xff]
    %v4887 = vld [vmem:[#allocation3 + $0x100] sm:$0xff]
    %v4888 = vld [vmem:[#allocation3 + $0x108] sm:$0xff]
    %v4889 = vld [vmem:[#allocation3 + $0x110] sm:$0xff]
    %v4890 = vld [vmem:[#allocation3 + $0x118] sm:$0xff]
    %v4891 = vld [vmem:[#allocation3 + $0x120] sm:$0xff]
    %v4892 = vld [vmem:[#allocation3 + $0x128] sm:$0xff]
    %v4893 = vld [vmem:[#allocation3 + $0x130] sm:$0xff]
    %v4894 = vld [vmem:[#allocation3 + $0x138] sm:$0xff]
    %v4895 = vld [vmem:[#allocation3 + $0x140] sm:$0xff]
    %v4896 = vld [vmem:[#allocation3 + $0x148] sm:$0xff]
    %v4897 = vld [vmem:[#allocation3 + $0x150] sm:$0xff]
    %v4898 = vld [vmem:[#allocation3 + $0x158] sm:$0xff]
    %v4899 = vld [vmem:[#allocation3 + $0x160] sm:$0xff]
    %v4900 = vld [vmem:[#allocation3 + $0x168] sm:$0xff]
    %v4901 = vld [vmem:[#allocation3 + $0x170] sm:$0xff]
    %v4902 = vld [vmem:[#allocation3 + $0x178] sm:$0xff]
    %v4903 = vld [vmem:[#allocation3 + $0x180] sm:$0xff]
    %v4904 = vld [vmem:[#allocation3 + $0x188] sm:$0xff]
    %v4905 = vld [vmem:[#allocation3 + $0x190] sm:$0xff]
    %v4906 = vld [vmem:[#allocation3 + $0x198] sm:$0xff]
    %v4907 = vld [vmem:[#allocation3 + $0x1a0] sm:$0xff]
    %v4908 = vld [vmem:[#allocation3 + $0x1a8] sm:$0xff]
    %v4909 = vld [vmem:[#allocation3 + $0x1b0] sm:$0xff]
    %v4910 = vld [vmem:[#allocation3 + $0x1b8] sm:$0xff]
    %v4911 = vld [vmem:[#allocation3 + $0x1c0] sm:$0xff]
    %v4912 = vld [vmem:[#allocation3 + $0x1c8] sm:$0xff]
    %v4913 = vld [vmem:[#allocation3 + $0x1d0] sm:$0xff]
    %v4914 = vld [vmem:[#allocation3 + $0x1d8] sm:$0xff]
    %v4915 = vld [vmem:[#allocation3 + $0x1e0] sm:$0xff]
    %v4916 = vld [vmem:[#allocation3 + $0x1e8] sm:$0xff]
    %v4917 = vld [vmem:[#allocation3 + $0x1f0] sm:$0xff]
    %v4918 = vld [vmem:[#allocation3 + $0x1f8] sm:$0xff]
    %v4919 = vld [vmem:[#allocation3 + $0x200] sm:$0xff]
    %v4920 = vld [vmem:[#allocation3 + $0x208] sm:$0xff]
    %v4921 = vld [vmem:[#allocation3 + $0x210] sm:$0xff]
    %v4922 = vld [vmem:[#allocation3 + $0x218] sm:$0xff]
    %v4923 = vld [vmem:[#allocation3 + $0x220] sm:$0xff]
    %v4924 = vld [vmem:[#allocation3 + $0x228] sm:$0xff]
    %v4925 = vld [vmem:[#allocation3 + $0x230] sm:$0xff]
    %v4926 = vld [vmem:[#allocation3 + $0x238] sm:$0xff]
    %v4927 = vld [vmem:[#allocation3 + $0x240] sm:$0xff]
    %v4928 = vld [vmem:[#allocation3 + $0x248] sm:$0xff]
    %v4929 = vld [vmem:[#allocation3 + $0x250] sm:$0xff]
    %v4930 = vld [vmem:[#allocation3 + $0x258] sm:$0xff]
    %v4931 = vld [vmem:[#allocation3 + $0x260] sm:$0xff]
    %v4932 = vld [vmem:[#allocation3 + $0x268] sm:$0xff]
    %v4933 = vld [vmem:[#allocation3 + $0x270] sm:$0xff]
    %v4934 = vld [vmem:[#allocation3 + $0x278] sm:$0xff]
    %v4935 = vld [vmem:[#allocation3 + $0x280] sm:$0xff]
    %v4936 = vld [vmem:[#allocation3 + $0x288] sm:$0xff]
    %v4937 = vld [vmem:[#allocation3 + $0x290] sm:$0xff]
    %v4938 = vld [vmem:[#allocation3 + $0x298] sm:$0xff]
    %v4939 = vld [vmem:[#allocation3 + $0x2a0] sm:$0xff]
    %v4940 = vld [vmem:[#allocation3 + $0x2a8] sm:$0xff]
    %v4941 = vld [vmem:[#allocation3 + $0x2b0] sm:$0xff]
    %v4942 = vld [vmem:[#allocation3 + $0x2b8] sm:$0xff]
    %v4943 = vld [vmem:[#allocation3 + $0x2c0] sm:$0xff]
    %v4944 = vld [vmem:[#allocation3 + $0x2c8] sm:$0xff]
    %v4945 = vld [vmem:[#allocation3 + $0x2d0] sm:$0xff]
    %v4946 = vld [vmem:[#allocation3 + $0x2d8] sm:$0xff]
    %v4947 = vld [vmem:[#allocation3 + $0x2e0] sm:$0xff]
    %v4948 = vld [vmem:[#allocation3 + $0x2e8] sm:$0xff]
    %v4949 = vld [vmem:[#allocation3 + $0x2f0] sm:$0xff]
    %v4950 = vld [vmem:[#allocation3 + $0x2f8] sm:$0xff]
    %v4951 = vld [vmem:[#allocation3 + $0x300] sm:$0xff]
    %v4952 = vld [vmem:[#allocation3 + $0x308] sm:$0xff]
    %v4953 = vld [vmem:[#allocation3 + $0x310] sm:$0xff]
    %v4954 = vld [vmem:[#allocation3 + $0x318] sm:$0xff]
    %v4955 = vld [vmem:[#allocation3 + $0x320] sm:$0xff]
    %v4956 = vld [vmem:[#allocation3 + $0x328] sm:$0xff]
    %v4957 = vld [vmem:[#allocation3 + $0x330] sm:$0xff]
    %v4958 = vld [vmem:[#allocation3 + $0x338] sm:$0xff]
    %v4959 = vld [vmem:[#allocation3 + $0x340] sm:$0xff]
    %v4960 = vld [vmem:[#allocation3 + $0x348] sm:$0xff]
    %v4961 = vld [vmem:[#allocation3 + $0x350] sm:$0xff]
    %v4962 = vld [vmem:[#allocation3 + $0x358] sm:$0xff]
    %v4963 = vld [vmem:[#allocation3 + $0x360] sm:$0xff]
    %v4964 = vld [vmem:[#allocation3 + $0x368] sm:$0xff]
    %v4965 = vld [vmem:[#allocation3 + $0x370] sm:$0xff]
    %v4966 = vld [vmem:[#allocation3 + $0x378] sm:$0xff]
    %v4967 = vld [vmem:[#allocation3 + $0x380] sm:$0xff]
    %v4968 = vld [vmem:[#allocation3 + $0x388] sm:$0xff]
    %v4969 = vld [vmem:[#allocation3 + $0x390] sm:$0xff]
    %v4970 = vld [vmem:[#allocation3 + $0x398] sm:$0xff]
    %v4971 = vld [vmem:[#allocation3 + $0x3a0] sm:$0xff]
    %v4972 = vld [vmem:[#allocation3 + $0x3a8] sm:$0xff]
    %v4973 = vld [vmem:[#allocation3 + $0x3b0] sm:$0xff]
    %v4974 = vld [vmem:[#allocation3 + $0x3b8] sm:$0xff]
    %v4975 = vld [vmem:[#allocation3 + $0x3c0] sm:$0xff]
    %v4976 = vld [vmem:[#allocation3 + $0x3c8] sm:$0xff]
    %v4977 = vld [vmem:[#allocation3 + $0x3d0] sm:$0xff]
    %v4978 = vld [vmem:[#allocation3 + $0x3d8] sm:$0xff]
    %v4979 = vld [vmem:[#allocation3 + $0x3e0] sm:$0xff]
    %v4980 = vld [vmem:[#allocation3 + $0x3e8] sm:$0xff]
    %v4981 = vld [vmem:[#allocation3 + $0x3f0] sm:$0xff]
    %v4982 = vld [vmem:[#allocation3 + $0x3f8] sm:$0xff]
    %v4983 = vld [vmem:[#allocation13 + $0x2b] sm:$0x3]
    %v4984 = vpack.c.bf16 %v4795, %v4787
    %v4985 = vpack.c.bf16 %v4796, %v4788
    %v4986 = vpack.c.bf16 %v4797, %v4789
    %v4987 = vpack.c.bf16 %v4798, %v4790
    %v4988 = vpack.c.bf16 %v4799, %v4791
    %v4989 = vpack.c.bf16 %v4800, %v4792
    %v4990 = vpack.c.bf16 %v4801, %v4793
    %v4991 = vpack.c.bf16 %v4802, %v4794
    %v4992 = vpack.c.bf16 %v4811, %v4803
    %v4993 = vpack.c.bf16 %v4812, %v4804
    %v4994 = vpack.c.bf16 %v4813, %v4805
    %v4995 = vpack.c.bf16 %v4814, %v4806
    %v4996 = vpack.c.bf16 %v4815, %v4807
    %v4997 = vpack.c.bf16 %v4816, %v4808
    %v4998 = vpack.c.bf16 %v4817, %v4809
    %v4999 = vpack.c.bf16 %v4818, %v4810
    %v5000 = vpack.c.bf16 %v4827, %v4819
    %v5001 = vpack.c.bf16 %v4828, %v4820
    %v5002 = vpack.c.bf16 %v4829, %v4821
    %v5003 = vpack.c.bf16 %v4830, %v4822
    %v5004 = vpack.c.bf16 %v4831, %v4823
    %v5005 = vpack.c.bf16 %v4832, %v4824
    %v5006 = vpack.c.bf16 %v4833, %v4825
    %v5007 = vpack.c.bf16 %v4834, %v4826
    %v5008 = vpack.c.bf16 %v4843, %v4835
    %v5009 = vpack.c.bf16 %v4844, %v4836
    %v5010 = vpack.c.bf16 %v4845, %v4837
    %v5011 = vpack.c.bf16 %v4846, %v4838
    %v5012 = vpack.c.bf16 %v4847, %v4839
    %v5013 = vpack.c.bf16 %v4848, %v4840
    %v5014 = vpack.c.bf16 %v4849, %v4841
    %v5015 = vpack.c.bf16 %v4850, %v4842
    %v5017 = vperm.slane %v4983, 0
    %v5018 = vperm.slane %v4983, 1
    %v5149 = vunpack.c.l.b16 %v4855
    %v5150 = vunpack.c.h.b16 %v4855
    %v5151 = vunpack.c.l.b16 %v4856
    %v5152 = vunpack.c.h.b16 %v4856
    %v5153 = vunpack.c.l.b16 %v4857
    %v5154 = vunpack.c.h.b16 %v4857
    %v5155 = vunpack.c.l.b16 %v4858
    %v5156 = vunpack.c.h.b16 %v4858
    %v5157 = vunpack.c.l.b16 %v4859
    %v5158 = vunpack.c.h.b16 %v4859
    %v5159 = vunpack.c.l.b16 %v4860
    %v5160 = vunpack.c.h.b16 %v4860
    %v5161 = vunpack.c.l.b16 %v4861
    %v5162 = vunpack.c.h.b16 %v4861
    %v5163 = vunpack.c.l.b16 %v4862
    %v5164 = vunpack.c.h.b16 %v4862
    %v5165 = vunpack.c.l.b16 %v4863
    %v5166 = vunpack.c.h.b16 %v4863
    %v5167 = vunpack.c.l.b16 %v4864
    %v5168 = vunpack.c.h.b16 %v4864
    %v5169 = vunpack.c.l.b16 %v4865
    %v5170 = vunpack.c.h.b16 %v4865
    %v5171 = vunpack.c.l.b16 %v4866
    %v5172 = vunpack.c.h.b16 %v4866
    %v5173 = vunpack.c.l.b16 %v4867
    %v5174 = vunpack.c.h.b16 %v4867
    %v5175 = vunpack.c.l.b16 %v4868
    %v5176 = vunpack.c.h.b16 %v4868
    %v5177 = vunpack.c.l.b16 %v4869
    %v5178 = vunpack.c.h.b16 %v4869
    %v5179 = vunpack.c.l.b16 %v4870
    %v5180 = vunpack.c.h.b16 %v4870
    %v5181 = vunpack.c.l.b16 %v4871
    %v5182 = vunpack.c.h.b16 %v4871
    %v5183 = vunpack.c.l.b16 %v4872
    %v5184 = vunpack.c.h.b16 %v4872
    %v5185 = vunpack.c.l.b16 %v4873
    %v5186 = vunpack.c.h.b16 %v4873
    %v5187 = vunpack.c.l.b16 %v4874
    %v5188 = vunpack.c.h.b16 %v4874
    %v5189 = vunpack.c.l.b16 %v4875
    %v5190 = vunpack.c.h.b16 %v4875
    %v5191 = vunpack.c.l.b16 %v4876
    %v5192 = vunpack.c.h.b16 %v4876
    %v5193 = vunpack.c.l.b16 %v4877
    %v5194 = vunpack.c.h.b16 %v4877
    %v5195 = vunpack.c.l.b16 %v4878
    %v5196 = vunpack.c.h.b16 %v4878
    %v5197 = vunpack.c.l.b16 %v4879
    %v5198 = vunpack.c.h.b16 %v4879
    %v5199 = vunpack.c.l.b16 %v4880
    %v5200 = vunpack.c.h.b16 %v4880
    %v5201 = vunpack.c.l.b16 %v4881
    %v5202 = vunpack.c.h.b16 %v4881
    %v5203 = vunpack.c.l.b16 %v4882
    %v5204 = vunpack.c.h.b16 %v4882
    %v5205 = vunpack.c.l.b16 %v4883
    %v5206 = vunpack.c.h.b16 %v4883
    %v5207 = vunpack.c.l.b16 %v4884
    %v5208 = vunpack.c.h.b16 %v4884
    %v5209 = vunpack.c.l.b16 %v4885
    %v5210 = vunpack.c.h.b16 %v4885
    %v5211 = vunpack.c.l.b16 %v4886
    %v5212 = vunpack.c.h.b16 %v4886
    %v5213 = vunpack.c.l.b16 %v4887
    %v5214 = vunpack.c.h.b16 %v4887
    %v5215 = vunpack.c.l.b16 %v4888
    %v5216 = vunpack.c.h.b16 %v4888
    %v5217 = vunpack.c.l.b16 %v4889
    %v5218 = vunpack.c.h.b16 %v4889
    %v5219 = vunpack.c.l.b16 %v4890
    %v5220 = vunpack.c.h.b16 %v4890
    %v5221 = vunpack.c.l.b16 %v4891
    %v5222 = vunpack.c.h.b16 %v4891
    %v5223 = vunpack.c.l.b16 %v4892
    %v5224 = vunpack.c.h.b16 %v4892
    %v5225 = vunpack.c.l.b16 %v4893
    %v5226 = vunpack.c.h.b16 %v4893
    %v5227 = vunpack.c.l.b16 %v4894
    %v5228 = vunpack.c.h.b16 %v4894
    %v5229 = vunpack.c.l.b16 %v4895
    %v5230 = vunpack.c.h.b16 %v4895
    %v5231 = vunpack.c.l.b16 %v4896
    %v5232 = vunpack.c.h.b16 %v4896
    %v5233 = vunpack.c.l.b16 %v4897
    %v5234 = vunpack.c.h.b16 %v4897
    %v5235 = vunpack.c.l.b16 %v4898
    %v5236 = vunpack.c.h.b16 %v4898
    %v5237 = vunpack.c.l.b16 %v4899
    %v5238 = vunpack.c.h.b16 %v4899
    %v5239 = vunpack.c.l.b16 %v4900
    %v5240 = vunpack.c.h.b16 %v4900
    %v5241 = vunpack.c.l.b16 %v4901
    %v5242 = vunpack.c.h.b16 %v4901
    %v5243 = vunpack.c.l.b16 %v4902
    %v5244 = vunpack.c.h.b16 %v4902
    %v5245 = vunpack.c.l.b16 %v4903
    %v5246 = vunpack.c.h.b16 %v4903
    %v5247 = vunpack.c.l.b16 %v4904
    %v5248 = vunpack.c.h.b16 %v4904
    %v5249 = vunpack.c.l.b16 %v4905
    %v5250 = vunpack.c.h.b16 %v4905
    %v5251 = vunpack.c.l.b16 %v4906
    %v5252 = vunpack.c.h.b16 %v4906
    %v5253 = vunpack.c.l.b16 %v4907
    %v5254 = vunpack.c.h.b16 %v4907
    %v5255 = vunpack.c.l.b16 %v4908
    %v5256 = vunpack.c.h.b16 %v4908
    %v5257 = vunpack.c.l.b16 %v4909
    %v5258 = vunpack.c.h.b16 %v4909
    %v5259 = vunpack.c.l.b16 %v4910
    %v5260 = vunpack.c.h.b16 %v4910
    %v5261 = vunpack.c.l.b16 %v4911
    %v5262 = vunpack.c.h.b16 %v4911
    %v5263 = vunpack.c.l.b16 %v4912
    %v5264 = vunpack.c.h.b16 %v4912
    %v5265 = vunpack.c.l.b16 %v4913
    %v5266 = vunpack.c.h.b16 %v4913
    %v5267 = vunpack.c.l.b16 %v4914
    %v5268 = vunpack.c.h.b16 %v4914
    %v5269 = vunpack.c.l.b16 %v4915
    %v5270 = vunpack.c.h.b16 %v4915
    %v5271 = vunpack.c.l.b16 %v4916
    %v5272 = vunpack.c.h.b16 %v4916
    %v5273 = vunpack.c.l.b16 %v4917
    %v5274 = vunpack.c.h.b16 %v4917
    %v5275 = vunpack.c.l.b16 %v4918
    %v5276 = vunpack.c.h.b16 %v4918
    %v5277 = vunpack.c.l.b16 %v4919
    %v5278 = vunpack.c.h.b16 %v4919
    %v5279 = vunpack.c.l.b16 %v4920
    %v5280 = vunpack.c.h.b16 %v4920
    %v5281 = vunpack.c.l.b16 %v4921
    %v5282 = vunpack.c.h.b16 %v4921
    %v5283 = vunpack.c.l.b16 %v4922
    %v5284 = vunpack.c.h.b16 %v4922
    %v5285 = vunpack.c.l.b16 %v4923
    %v5286 = vunpack.c.h.b16 %v4923
    %v5287 = vunpack.c.l.b16 %v4924
    %v5288 = vunpack.c.h.b16 %v4924
    %v5289 = vunpack.c.l.b16 %v4925
    %v5290 = vunpack.c.h.b16 %v4925
    %v5291 = vunpack.c.l.b16 %v4926
    %v5292 = vunpack.c.h.b16 %v4926
    %v5293 = vunpack.c.l.b16 %v4927
    %v5294 = vunpack.c.h.b16 %v4927
    %v5295 = vunpack.c.l.b16 %v4928
    %v5296 = vunpack.c.h.b16 %v4928
    %v5297 = vunpack.c.l.b16 %v4929
    %v5298 = vunpack.c.h.b16 %v4929
    %v5299 = vunpack.c.l.b16 %v4930
    %v5300 = vunpack.c.h.b16 %v4930
    %v5301 = vunpack.c.l.b16 %v4931
    %v5302 = vunpack.c.h.b16 %v4931
    %v5303 = vunpack.c.l.b16 %v4932
    %v5304 = vunpack.c.h.b16 %v4932
    %v5305 = vunpack.c.l.b16 %v4933
    %v5306 = vunpack.c.h.b16 %v4933
    %v5307 = vunpack.c.l.b16 %v4934
    %v5308 = vunpack.c.h.b16 %v4934
    %v5309 = vunpack.c.l.b16 %v4935
    %v5310 = vunpack.c.h.b16 %v4935
    %v5311 = vunpack.c.l.b16 %v4936
    %v5312 = vunpack.c.h.b16 %v4936
    %v5313 = vunpack.c.l.b16 %v4937
    %v5314 = vunpack.c.h.b16 %v4937
    %v5315 = vunpack.c.l.b16 %v4938
    %v5316 = vunpack.c.h.b16 %v4938
    %v5317 = vunpack.c.l.b16 %v4939
    %v5318 = vunpack.c.h.b16 %v4939
    %v5319 = vunpack.c.l.b16 %v4940
    %v5320 = vunpack.c.h.b16 %v4940
    %v5321 = vunpack.c.l.b16 %v4941
    %v5322 = vunpack.c.h.b16 %v4941
    %v5323 = vunpack.c.l.b16 %v4942
    %v5324 = vunpack.c.h.b16 %v4942
    %v5325 = vunpack.c.l.b16 %v4943
    %v5326 = vunpack.c.h.b16 %v4943
    %v5327 = vunpack.c.l.b16 %v4944
    %v5328 = vunpack.c.h.b16 %v4944
    %v5329 = vunpack.c.l.b16 %v4945
    %v5330 = vunpack.c.h.b16 %v4945
    %v5331 = vunpack.c.l.b16 %v4946
    %v5332 = vunpack.c.h.b16 %v4946
    %v5333 = vunpack.c.l.b16 %v4947
    %v5334 = vunpack.c.h.b16 %v4947
    %v5335 = vunpack.c.l.b16 %v4948
    %v5336 = vunpack.c.h.b16 %v4948
    %v5337 = vunpack.c.l.b16 %v4949
    %v5338 = vunpack.c.h.b16 %v4949
    %v5339 = vunpack.c.l.b16 %v4950
    %v5340 = vunpack.c.h.b16 %v4950
    %v5341 = vunpack.c.l.b16 %v4951
    %v5342 = vunpack.c.h.b16 %v4951
    %v5343 = vunpack.c.l.b16 %v4952
    %v5344 = vunpack.c.h.b16 %v4952
    %v5345 = vunpack.c.l.b16 %v4953
    %v5346 = vunpack.c.h.b16 %v4953
    %v5347 = vunpack.c.l.b16 %v4954
    %v5348 = vunpack.c.h.b16 %v4954
    %v5349 = vunpack.c.l.b16 %v4955
    %v5350 = vunpack.c.h.b16 %v4955
    %v5351 = vunpack.c.l.b16 %v4956
    %v5352 = vunpack.c.h.b16 %v4956
    %v5353 = vunpack.c.l.b16 %v4957
    %v5354 = vunpack.c.h.b16 %v4957
    %v5355 = vunpack.c.l.b16 %v4958
    %v5356 = vunpack.c.h.b16 %v4958
    %v5357 = vunpack.c.l.b16 %v4959
    %v5358 = vunpack.c.h.b16 %v4959
    %v5359 = vunpack.c.l.b16 %v4960
    %v5360 = vunpack.c.h.b16 %v4960
    %v5361 = vunpack.c.l.b16 %v4961
    %v5362 = vunpack.c.h.b16 %v4961
    %v5363 = vunpack.c.l.b16 %v4962
    %v5364 = vunpack.c.h.b16 %v4962
    %v5365 = vunpack.c.l.b16 %v4963
    %v5366 = vunpack.c.h.b16 %v4963
    %v5367 = vunpack.c.l.b16 %v4964
    %v5368 = vunpack.c.h.b16 %v4964
    %v5369 = vunpack.c.l.b16 %v4965
    %v5370 = vunpack.c.h.b16 %v4965
    %v5371 = vunpack.c.l.b16 %v4966
    %v5372 = vunpack.c.h.b16 %v4966
    %v5373 = vunpack.c.l.b16 %v4967
    %v5374 = vunpack.c.h.b16 %v4967
    %v5375 = vunpack.c.l.b16 %v4968
    %v5376 = vunpack.c.h.b16 %v4968
    %v5377 = vunpack.c.l.b16 %v4969
    %v5378 = vunpack.c.h.b16 %v4969
    %v5379 = vunpack.c.l.b16 %v4970
    %v5380 = vunpack.c.h.b16 %v4970
    %v5381 = vunpack.c.l.b16 %v4971
    %v5382 = vunpack.c.h.b16 %v4971
    %v5383 = vunpack.c.l.b16 %v4972
    %v5384 = vunpack.c.h.b16 %v4972
    %v5385 = vunpack.c.l.b16 %v4973
    %v5386 = vunpack.c.h.b16 %v4973
    %v5387 = vunpack.c.l.b16 %v4974
    %v5388 = vunpack.c.h.b16 %v4974
    %v5389 = vunpack.c.l.b16 %v4975
    %v5390 = vunpack.c.h.b16 %v4975
    %v5391 = vunpack.c.l.b16 %v4976
    %v5392 = vunpack.c.h.b16 %v4976
    %v5393 = vunpack.c.l.b16 %v4977
    %v5394 = vunpack.c.h.b16 %v4977
    %v5395 = vunpack.c.l.b16 %v4978
    %v5396 = vunpack.c.h.b16 %v4978
    %v5397 = vunpack.c.l.b16 %v4979
    %v5398 = vunpack.c.h.b16 %v4979
    %v5399 = vunpack.c.l.b16 %v4980
    %v5400 = vunpack.c.h.b16 %v4980
    %v5401 = vunpack.c.l.b16 %v4981
    %v5402 = vunpack.c.h.b16 %v4981
    %v5403 = vunpack.c.l.b16 %v4982
    %v5404 = vunpack.c.h.b16 %v4982
    %v5405 = vpack.c.b16 %v5151, %v5149
    %v5406 = vpack.c.b16 %v5152, %v5150
    %v5407 = vpack.c.b16 %v5155, %v5153
    %v5408 = vpack.c.b16 %v5156, %v5154
    %v5409 = vpack.c.b16 %v5159, %v5157
    %v5410 = vpack.c.b16 %v5160, %v5158
    %v5411 = vpack.c.b16 %v5163, %v5161
    %v5412 = vpack.c.b16 %v5164, %v5162
    %v5413 = vpack.c.b16 %v5167, %v5165
    %v5414 = vpack.c.b16 %v5168, %v5166
    %v5415 = vpack.c.b16 %v5171, %v5169
    %v5416 = vpack.c.b16 %v5172, %v5170
    %v5417 = vpack.c.b16 %v5175, %v5173
    %v5418 = vpack.c.b16 %v5176, %v5174
    %v5419 = vpack.c.b16 %v5179, %v5177
    %v5420 = vpack.c.b16 %v5180, %v5178
    %v5421 = vpack.c.b16 %v5183, %v5181
    %v5422 = vpack.c.b16 %v5184, %v5182
    %v5423 = vpack.c.b16 %v5187, %v5185
    %v5424 = vpack.c.b16 %v5188, %v5186
    %v5425 = vpack.c.b16 %v5191, %v5189
    %v5426 = vpack.c.b16 %v5192, %v5190
    %v5427 = vpack.c.b16 %v5195, %v5193
    %v5428 = vpack.c.b16 %v5196, %v5194
    %v5429 = vpack.c.b16 %v5199, %v5197
    %v5430 = vpack.c.b16 %v5200, %v5198
    %v5431 = vpack.c.b16 %v5203, %v5201
    %v5432 = vpack.c.b16 %v5204, %v5202
    %v5433 = vpack.c.b16 %v5207, %v5205
    %v5434 = vpack.c.b16 %v5208, %v5206
    %v5435 = vpack.c.b16 %v5211, %v5209
    %v5436 = vpack.c.b16 %v5212, %v5210
    %v5437 = vpack.c.b16 %v5215, %v5213
    %v5438 = vpack.c.b16 %v5216, %v5214
    %v5439 = vpack.c.b16 %v5219, %v5217
    %v5440 = vpack.c.b16 %v5220, %v5218
    %v5441 = vpack.c.b16 %v5223, %v5221
    %v5442 = vpack.c.b16 %v5224, %v5222
    %v5443 = vpack.c.b16 %v5227, %v5225
    %v5444 = vpack.c.b16 %v5228, %v5226
    %v5445 = vpack.c.b16 %v5231, %v5229
    %v5446 = vpack.c.b16 %v5232, %v5230
    %v5447 = vpack.c.b16 %v5235, %v5233
    %v5448 = vpack.c.b16 %v5236, %v5234
    %v5449 = vpack.c.b16 %v5239, %v5237
    %v5450 = vpack.c.b16 %v5240, %v5238
    %v5451 = vpack.c.b16 %v5243, %v5241
    %v5452 = vpack.c.b16 %v5244, %v5242
    %v5453 = vpack.c.b16 %v5247, %v5245
    %v5454 = vpack.c.b16 %v5248, %v5246
    %v5455 = vpack.c.b16 %v5251, %v5249
    %v5456 = vpack.c.b16 %v5252, %v5250
    %v5457 = vpack.c.b16 %v5255, %v5253
    %v5458 = vpack.c.b16 %v5256, %v5254
    %v5459 = vpack.c.b16 %v5259, %v5257
    %v5460 = vpack.c.b16 %v5260, %v5258
    %v5461 = vpack.c.b16 %v5263, %v5261
    %v5462 = vpack.c.b16 %v5264, %v5262
    %v5463 = vpack.c.b16 %v5267, %v5265
    %v5464 = vpack.c.b16 %v5268, %v5266
    %v5465 = vpack.c.b16 %v5271, %v5269
    %v5466 = vpack.c.b16 %v5272, %v5270
    %v5467 = vpack.c.b16 %v5275, %v5273
    %v5468 = vpack.c.b16 %v5276, %v5274
    %v5469 = vpack.c.b16 %v5279, %v5277
    %v5470 = vpack.c.b16 %v5280, %v5278
    %v5471 = vpack.c.b16 %v5283, %v5281
    %v5472 = vpack.c.b16 %v5284, %v5282
    %v5473 = vpack.c.b16 %v5287, %v5285
    %v5474 = vpack.c.b16 %v5288, %v5286
    %v5475 = vpack.c.b16 %v5291, %v5289
    %v5476 = vpack.c.b16 %v5292, %v5290
    %v5477 = vpack.c.b16 %v5295, %v5293
    %v5478 = vpack.c.b16 %v5296, %v5294
    %v5479 = vpack.c.b16 %v5299, %v5297
    %v5480 = vpack.c.b16 %v5300, %v5298
    %v5481 = vpack.c.b16 %v5303, %v5301
    %v5482 = vpack.c.b16 %v5304, %v5302
    %v5483 = vpack.c.b16 %v5307, %v5305
    %v5484 = vpack.c.b16 %v5308, %v5306
    %v5485 = vpack.c.b16 %v5311, %v5309
    %v5486 = vpack.c.b16 %v5312, %v5310
    %v5487 = vpack.c.b16 %v5315, %v5313
    %v5488 = vpack.c.b16 %v5316, %v5314
    %v5489 = vpack.c.b16 %v5319, %v5317
    %v5490 = vpack.c.b16 %v5320, %v5318
    %v5491 = vpack.c.b16 %v5323, %v5321
    %v5492 = vpack.c.b16 %v5324, %v5322
    %v5493 = vpack.c.b16 %v5327, %v5325
    %v5494 = vpack.c.b16 %v5328, %v5326
    %v5495 = vpack.c.b16 %v5331, %v5329
    %v5496 = vpack.c.b16 %v5332, %v5330
    %v5497 = vpack.c.b16 %v5335, %v5333
    %v5498 = vpack.c.b16 %v5336, %v5334
    %v5499 = vpack.c.b16 %v5339, %v5337
    %v5500 = vpack.c.b16 %v5340, %v5338
    %v5501 = vpack.c.b16 %v5343, %v5341
    %v5502 = vpack.c.b16 %v5344, %v5342
    %v5503 = vpack.c.b16 %v5347, %v5345
    %v5504 = vpack.c.b16 %v5348, %v5346
    %v5505 = vpack.c.b16 %v5351, %v5349
    %v5506 = vpack.c.b16 %v5352, %v5350
    %v5507 = vpack.c.b16 %v5355, %v5353
    %v5508 = vpack.c.b16 %v5356, %v5354
    %v5509 = vpack.c.b16 %v5359, %v5357
    %v5510 = vpack.c.b16 %v5360, %v5358
    %v5511 = vpack.c.b16 %v5363, %v5361
    %v5512 = vpack.c.b16 %v5364, %v5362
    %v5513 = vpack.c.b16 %v5367, %v5365
    %v5514 = vpack.c.b16 %v5368, %v5366
    %v5515 = vpack.c.b16 %v5371, %v5369
    %v5516 = vpack.c.b16 %v5372, %v5370
    %v5517 = vpack.c.b16 %v5375, %v5373
    %v5518 = vpack.c.b16 %v5376, %v5374
    %v5519 = vpack.c.b16 %v5379, %v5377
    %v5520 = vpack.c.b16 %v5380, %v5378
    %v5521 = vpack.c.b16 %v5383, %v5381
    %v5522 = vpack.c.b16 %v5384, %v5382
    %v5523 = vpack.c.b16 %v5387, %v5385
    %v5524 = vpack.c.b16 %v5388, %v5386
    %v5525 = vpack.c.b16 %v5391, %v5389
    %v5526 = vpack.c.b16 %v5392, %v5390
    %v5527 = vpack.c.b16 %v5395, %v5393
    %v5528 = vpack.c.b16 %v5396, %v5394
    %v5529 = vpack.c.b16 %v5399, %v5397
    %v5530 = vpack.c.b16 %v5400, %v5398
    %v5531 = vpack.c.b16 %v5403, %v5401
    %v5532 = vpack.c.b16 %v5404, %v5402
    %5661 = vmatpush.bf16.msra.mxu0 %v5419
    %5662 = vmatpush.bf16.msra.mxu0 %v5417
    %5663 = vmatpush.bf16.msra.mxu0 %v5415
    %5664 = vmatpush.bf16.msra.mxu0 %v5413
    %5665 = vmatpush.bf16.msra.mxu0 %v5411
    %5666 = vmatpush.bf16.msra.mxu0 %v5409
    %5667 = vmatpush.bf16.msra.mxu0 %v5407
    %5668 = vmatpush.bf16.msra.mxu0 %v5405
    %5669 = vmatmul.bf16.gmra.mxu0 %v4984
    %v5670 = vpop.f32.mrf.mxu0
    %v5671 = vadd.f32 %v5017, %v5670
    %v5672 = vpop.f32.mrf.mxu0
    %v5673 = vadd.f32 %v5017, %v5672
    %5674 = vmatmul.bf16.gmra.mxu0 %v4992
    %v5675 = vpop.f32.mrf.mxu0
    %v5676 = vadd.f32 %v5017, %v5675
    %v5677 = vpop.f32.mrf.mxu0
    %v5678 = vadd.f32 %v5017, %v5677
    %5679 = vmatmul.bf16.gmra.mxu0 %v5000
    %v5680 = vpop.f32.mrf.mxu0
    %v5681 = vadd.f32 %v5017, %v5680
    %v5682 = vpop.f32.mrf.mxu0
    %v5683 = vadd.f32 %v5017, %v5682
    %5684 = vmatmul.bf16.gmra.mxu0 %v5008
    %v5685 = vpop.f32.mrf.mxu0
    %v5686 = vadd.f32 %v5017, %v5685
    %v5687 = vpop.f32.mrf.mxu0
    %v5688 = vadd.f32 %v5017, %v5687
    %5689 = vdwg.mxu0
    %5690 = vmatpush.bf16.msra.mxu0 %v5435
    %5691 = vmatpush.bf16.msra.mxu0 %v5433
    %5692 = vmatpush.bf16.msra.mxu0 %v5431
    %5693 = vmatpush.bf16.msra.mxu0 %v5429
    %5694 = vmatpush.bf16.msra.mxu0 %v5427
    %5695 = vmatpush.bf16.msra.mxu0 %v5425
    %5696 = vmatpush.bf16.msra.mxu0 %v5423
    %5697 = vmatpush.bf16.msra.mxu0 %v5421
    %5698 = vmatmul.bf16.gmra.mxu0 %v4985
    %v5699 = vpop.f32.mrf.mxu0
    %v5700 = vadd.f32 %v5671, %v5699
    %v5701 = vpop.f32.mrf.mxu0
    %v5702 = vadd.f32 %v5673, %v5701
    %5703 = vmatmul.bf16.gmra.mxu0 %v4993
    %v5704 = vpop.f32.mrf.mxu0
    %v5705 = vadd.f32 %v5676, %v5704
    %v5706 = vpop.f32.mrf.mxu0
    %v5707 = vadd.f32 %v5678, %v5706
    %5708 = vmatmul.bf16.gmra.mxu0 %v5001
    %v5709 = vpop.f32.mrf.mxu0
    %v5710 = vadd.f32 %v5681, %v5709
    %v5711 = vpop.f32.mrf.mxu0
    %v5712 = vadd.f32 %v5683, %v5711
    %5713 = vmatmul.bf16.gmra.mxu0 %v5009
    %v5714 = vpop.f32.mrf.mxu0
    %v5715 = vadd.f32 %v5686, %v5714
    %v5716 = vpop.f32.mrf.mxu0
    %v5717 = vadd.f32 %v5688, %v5716
    %5718 = vdwg.mxu0
    %5719 = vmatpush.bf16.msra.mxu0 %v5451
    %5720 = vmatpush.bf16.msra.mxu0 %v5449
    %5721 = vmatpush.bf16.msra.mxu0 %v5447
    %5722 = vmatpush.bf16.msra.mxu0 %v5445
    %5723 = vmatpush.bf16.msra.mxu0 %v5443
    %5724 = vmatpush.bf16.msra.mxu0 %v5441
    %5725 = vmatpush.bf16.msra.mxu0 %v5439
    %5726 = vmatpush.bf16.msra.mxu0 %v5437
    %5727 = vmatmul.bf16.gmra.mxu0 %v4986
    %v5728 = vpop.f32.mrf.mxu0
    %v5729 = vadd.f32 %v5700, %v5728
    %v5730 = vpop.f32.mrf.mxu0
    %v5731 = vadd.f32 %v5702, %v5730
    %5732 = vmatmul.bf16.gmra.mxu0 %v4994
    %v5733 = vpop.f32.mrf.mxu0
    %v5734 = vadd.f32 %v5705, %v5733
    %v5735 = vpop.f32.mrf.mxu0
    %v5736 = vadd.f32 %v5707, %v5735
    %5737 = vmatmul.bf16.gmra.mxu0 %v5002
    %v5738 = vpop.f32.mrf.mxu0
    %v5739 = vadd.f32 %v5710, %v5738
    %v5740 = vpop.f32.mrf.mxu0
    %v5741 = vadd.f32 %v5712, %v5740
    %5742 = vmatmul.bf16.gmra.mxu0 %v5010
    %v5743 = vpop.f32.mrf.mxu0
    %v5744 = vadd.f32 %v5715, %v5743
    %v5745 = vpop.f32.mrf.mxu0
    %v5746 = vadd.f32 %v5717, %v5745
    %5747 = vdwg.mxu0
    %5748 = vmatpush.bf16.msra.mxu0 %v5467
    %5749 = vmatpush.bf16.msra.mxu0 %v5465
    %5750 = vmatpush.bf16.msra.mxu0 %v5463
    %5751 = vmatpush.bf16.msra.mxu0 %v5461
    %5752 = vmatpush.bf16.msra.mxu0 %v5459
    %5753 = vmatpush.bf16.msra.mxu0 %v5457
    %5754 = vmatpush.bf16.msra.mxu0 %v5455
    %5755 = vmatpush.bf16.msra.mxu0 %v5453
    %5756 = vmatmul.bf16.gmra.mxu0 %v4987
    %v5757 = vpop.f32.mrf.mxu0
    %v5758 = vadd.f32 %v5729, %v5757
    %v5759 = vpop.f32.mrf.mxu0
    %v5760 = vadd.f32 %v5731, %v5759
    %5761 = vmatmul.bf16.gmra.mxu0 %v4995
    %v5762 = vpop.f32.mrf.mxu0
    %v5763 = vadd.f32 %v5734, %v5762
    %v5764 = vpop.f32.mrf.mxu0
    %v5765 = vadd.f32 %v5736, %v5764
    %5766 = vmatmul.bf16.gmra.mxu0 %v5003
    %v5767 = vpop.f32.mrf.mxu0
    %v5768 = vadd.f32 %v5739, %v5767
    %v5769 = vpop.f32.mrf.mxu0
    %v5770 = vadd.f32 %v5741, %v5769
    %5771 = vmatmul.bf16.gmra.mxu0 %v5011
    %v5772 = vpop.f32.mrf.mxu0
    %v5773 = vadd.f32 %v5744, %v5772
    %v5774 = vpop.f32.mrf.mxu0
    %v5775 = vadd.f32 %v5746, %v5774
    %5776 = vdwg.mxu0
    %5777 = vmatpush.bf16.msra.mxu0 %v5483
    %5778 = vmatpush.bf16.msra.mxu0 %v5481
    %5779 = vmatpush.bf16.msra.mxu0 %v5479
    %5780 = vmatpush.bf16.msra.mxu0 %v5477
    %5781 = vmatpush.bf16.msra.mxu0 %v5475
    %5782 = vmatpush.bf16.msra.mxu0 %v5473
    %5783 = vmatpush.bf16.msra.mxu0 %v5471
    %5784 = vmatpush.bf16.msra.mxu0 %v5469
    %5785 = vmatmul.bf16.gmra.mxu0 %v4988
    %v5786 = vpop.f32.mrf.mxu0
    %v5787 = vadd.f32 %v5758, %v5786
    %v5788 = vpop.f32.mrf.mxu0
    %v5789 = vadd.f32 %v5760, %v5788
    %5790 = vmatmul.bf16.gmra.mxu0 %v4996
    %v5791 = vpop.f32.mrf.mxu0
    %v5792 = vadd.f32 %v5763, %v5791
    %v5793 = vpop.f32.mrf.mxu0
    %v5794 = vadd.f32 %v5765, %v5793
    %5795 = vmatmul.bf16.gmra.mxu0 %v5004
    %v5796 = vpop.f32.mrf.mxu0
    %v5797 = vadd.f32 %v5768, %v5796
    %v5798 = vpop.f32.mrf.mxu0
    %v5799 = vadd.f32 %v5770, %v5798
    %5800 = vmatmul.bf16.gmra.mxu0 %v5012
    %v5801 = vpop.f32.mrf.mxu0
    %v5802 = vadd.f32 %v5773, %v5801
    %v5803 = vpop.f32.mrf.mxu0
    %v5804 = vadd.f32 %v5775, %v5803
    %5805 = vdwg.mxu0
    %5806 = vmatpush.bf16.msra.mxu0 %v5499
    %5807 = vmatpush.bf16.msra.mxu0 %v5497
    %5808 = vmatpush.bf16.msra.mxu0 %v5495
    %5809 = vmatpush.bf16.msra.mxu0 %v5493
    %5810 = vmatpush.bf16.msra.mxu0 %v5491
    %5811 = vmatpush.bf16.msra.mxu0 %v5489
    %5812 = vmatpush.bf16.msra.mxu0 %v5487
    %5813 = vmatpush.bf16.msra.mxu0 %v5485
    %5814 = vmatmul.bf16.gmra.mxu0 %v4989
    %v5815 = vpop.f32.mrf.mxu0
    %v5816 = vadd.f32 %v5787, %v5815
    %v5817 = vpop.f32.mrf.mxu0
    %v5818 = vadd.f32 %v5789, %v5817
    %5819 = vmatmul.bf16.gmra.mxu0 %v4997
    %v5820 = vpop.f32.mrf.mxu0
    %v5821 = vadd.f32 %v5792, %v5820
    %v5822 = vpop.f32.mrf.mxu0
    %v5823 = vadd.f32 %v5794, %v5822
    %5824 = vmatmul.bf16.gmra.mxu0 %v5005
    %v5825 = vpop.f32.mrf.mxu0
    %v5826 = vadd.f32 %v5797, %v5825
    %v5827 = vpop.f32.mrf.mxu0
    %v5828 = vadd.f32 %v5799, %v5827
    %5829 = vmatmul.bf16.gmra.mxu0 %v5013
    %v5830 = vpop.f32.mrf.mxu0
    %v5831 = vadd.f32 %v5802, %v5830
    %v5832 = vpop.f32.mrf.mxu0
    %v5833 = vadd.f32 %v5804, %v5832
    %5834 = vdwg.mxu0
    %5835 = vmatpush.bf16.msra.mxu0 %v5515
    %5836 = vmatpush.bf16.msra.mxu0 %v5513
    %5837 = vmatpush.bf16.msra.mxu0 %v5511
    %5838 = vmatpush.bf16.msra.mxu0 %v5509
    %5839 = vmatpush.bf16.msra.mxu0 %v5507
    %5840 = vmatpush.bf16.msra.mxu0 %v5505
    %5841 = vmatpush.bf16.msra.mxu0 %v5503
    %5842 = vmatpush.bf16.msra.mxu0 %v5501
    %5843 = vmatmul.bf16.gmra.mxu0 %v4990
    %v5844 = vpop.f32.mrf.mxu0
    %v5845 = vadd.f32 %v5816, %v5844
    %v5846 = vpop.f32.mrf.mxu0
    %v5847 = vadd.f32 %v5818, %v5846
    %5848 = vmatmul.bf16.gmra.mxu0 %v4998
    %v5849 = vpop.f32.mrf.mxu0
    %v5850 = vadd.f32 %v5821, %v5849
    %v5851 = vpop.f32.mrf.mxu0
    %v5852 = vadd.f32 %v5823, %v5851
    %5853 = vmatmul.bf16.gmra.mxu0 %v5006
    %v5854 = vpop.f32.mrf.mxu0
    %v5855 = vadd.f32 %v5826, %v5854
    %v5856 = vpop.f32.mrf.mxu0
    %v5857 = vadd.f32 %v5828, %v5856
    %5858 = vmatmul.bf16.gmra.mxu0 %v5014
    %v5859 = vpop.f32.mrf.mxu0
    %v5860 = vadd.f32 %v5831, %v5859
    %v5861 = vpop.f32.mrf.mxu0
    %v5862 = vadd.f32 %v5833, %v5861
    %5863 = vdwg.mxu0
    %5864 = vmatpush.bf16.msra.mxu0 %v5531
    %5865 = vmatpush.bf16.msra.mxu0 %v5529
    %5866 = vmatpush.bf16.msra.mxu0 %v5527
    %5867 = vmatpush.bf16.msra.mxu0 %v5525
    %5868 = vmatpush.bf16.msra.mxu0 %v5523
    %5869 = vmatpush.bf16.msra.mxu0 %v5521
    %5870 = vmatpush.bf16.msra.mxu0 %v5519
    %5871 = vmatpush.bf16.msra.mxu0 %v5517
    %5872 = vmatmul.bf16.gmra.mxu0 %v4991
    %v5873 = vpop.f32.mrf.mxu0
    %v5874 = vadd.f32 %v5845, %v5873
    %v5875 = vpop.f32.mrf.mxu0
    %v5876 = vadd.f32 %v5847, %v5875
    %5877 = vmatmul.bf16.gmra.mxu0 %v4999
    %v5878 = vpop.f32.mrf.mxu0
    %v5879 = vadd.f32 %v5850, %v5878
    %v5880 = vpop.f32.mrf.mxu0
    %v5881 = vadd.f32 %v5852, %v5880
    %5882 = vmatmul.bf16.gmra.mxu0 %v5007
    %v5883 = vpop.f32.mrf.mxu0
    %v5884 = vadd.f32 %v5855, %v5883
    %v5885 = vpop.f32.mrf.mxu0
    %v5886 = vadd.f32 %v5857, %v5885
    %5887 = vmatmul.bf16.gmra.mxu0 %v5015
    %v5888 = vpop.f32.mrf.mxu0
    %v5889 = vadd.f32 %v5860, %v5888
    %v5890 = vpop.f32.mrf.mxu0
    %v5891 = vadd.f32 %v5862, %v5890
    %5892 = vdwg.mxu0
    %5893 = vmatpush.bf16.msra.mxu0 %v5420
    %5894 = vmatpush.bf16.msra.mxu0 %v5418
    %5895 = vmatpush.bf16.msra.mxu0 %v5416
    %5896 = vmatpush.bf16.msra.mxu0 %v5414
    %5897 = vmatpush.bf16.msra.mxu0 %v5412
    %5898 = vmatpush.bf16.msra.mxu0 %v5410
    %5899 = vmatpush.bf16.msra.mxu0 %v5408
    %5900 = vmatpush.bf16.msra.mxu0 %v5406
    %5901 = vmatmul.bf16.gmra.mxu0 %v4984
    %v5902 = vpop.f32.mrf.mxu0
    %v5903 = vadd.f32 %v5018, %v5902
    %v5904 = vpop.f32.mrf.mxu0
    %v5905 = vadd.f32 %v5018, %v5904
    %5906 = vmatmul.bf16.gmra.mxu0 %v4992
    %v5907 = vpop.f32.mrf.mxu0
    %v5908 = vadd.f32 %v5018, %v5907
    %v5909 = vpop.f32.mrf.mxu0
    %v5910 = vadd.f32 %v5018, %v5909
    %5911 = vmatmul.bf16.gmra.mxu0 %v5000
    %v5912 = vpop.f32.mrf.mxu0
    %v5913 = vadd.f32 %v5018, %v5912
    %v5914 = vpop.f32.mrf.mxu0
    %v5915 = vadd.f32 %v5018, %v5914
    %5916 = vmatmul.bf16.gmra.mxu0 %v5008
    %v5917 = vpop.f32.mrf.mxu0
    %v5918 = vadd.f32 %v5018, %v5917
    %v5919 = vpop.f32.mrf.mxu0
    %v5920 = vadd.f32 %v5018, %v5919
    %5921 = vdwg.mxu0
    %5922 = vmatpush.bf16.msra.mxu0 %v5436
    %5923 = vmatpush.bf16.msra.mxu0 %v5434
    %5924 = vmatpush.bf16.msra.mxu0 %v5432
    %5925 = vmatpush.bf16.msra.mxu0 %v5430
    %5926 = vmatpush.bf16.msra.mxu0 %v5428
    %5927 = vmatpush.bf16.msra.mxu0 %v5426
    %5928 = vmatpush.bf16.msra.mxu0 %v5424
    %5929 = vmatpush.bf16.msra.mxu0 %v5422
    %5930 = vmatmul.bf16.gmra.mxu0 %v4985
    %v5931 = vpop.f32.mrf.mxu0
    %v5932 = vadd.f32 %v5903, %v5931
    %v5933 = vpop.f32.mrf.mxu0
    %v5934 = vadd.f32 %v5905, %v5933
    %5935 = vmatmul.bf16.gmra.mxu0 %v4993
    %v5936 = vpop.f32.mrf.mxu0
    %v5937 = vadd.f32 %v5908, %v5936
    %v5938 = vpop.f32.mrf.mxu0
    %v5939 = vadd.f32 %v5910, %v5938
    %5940 = vmatmul.bf16.gmra.mxu0 %v5001
    %v5941 = vpop.f32.mrf.mxu0
    %v5942 = vadd.f32 %v5913, %v5941
    %v5943 = vpop.f32.mrf.mxu0
    %v5944 = vadd.f32 %v5915, %v5943
    %5945 = vmatmul.bf16.gmra.mxu0 %v5009
    %v5946 = vpop.f32.mrf.mxu0
    %v5947 = vadd.f32 %v5918, %v5946
    %v5948 = vpop.f32.mrf.mxu0
    %v5949 = vadd.f32 %v5920, %v5948
    %5950 = vdwg.mxu0
    %5951 = vmatpush.bf16.msra.mxu0 %v5452
    %5952 = vmatpush.bf16.msra.mxu0 %v5450
    %5953 = vmatpush.bf16.msra.mxu0 %v5448
    %5954 = vmatpush.bf16.msra.mxu0 %v5446
    %5955 = vmatpush.bf16.msra.mxu0 %v5444
    %5956 = vmatpush.bf16.msra.mxu0 %v5442
    %5957 = vmatpush.bf16.msra.mxu0 %v5440
    %5958 = vmatpush.bf16.msra.mxu0 %v5438
    %5959 = vmatmul.bf16.gmra.mxu0 %v4986
    %v5960 = vpop.f32.mrf.mxu0
    %v5961 = vadd.f32 %v5932, %v5960
    %v5962 = vpop.f32.mrf.mxu0
    %v5963 = vadd.f32 %v5934, %v5962
    %5964 = vmatmul.bf16.gmra.mxu0 %v4994
    %v5965 = vpop.f32.mrf.mxu0
    %v5966 = vadd.f32 %v5937, %v5965
    %v5967 = vpop.f32.mrf.mxu0
    %v5968 = vadd.f32 %v5939, %v5967
    %5969 = vmatmul.bf16.gmra.mxu0 %v5002
    %v5970 = vpop.f32.mrf.mxu0
    %v5971 = vadd.f32 %v5942, %v5970
    %v5972 = vpop.f32.mrf.mxu0
    %v5973 = vadd.f32 %v5944, %v5972
    %5974 = vmatmul.bf16.gmra.mxu0 %v5010
    %v5975 = vpop.f32.mrf.mxu0
    %v5976 = vadd.f32 %v5947, %v5975
    %v5977 = vpop.f32.mrf.mxu0
    %v5978 = vadd.f32 %v5949, %v5977
    %5979 = vdwg.mxu0
    %5980 = vmatpush.bf16.msra.mxu0 %v5468
    %5981 = vmatpush.bf16.msra.mxu0 %v5466
    %5982 = vmatpush.bf16.msra.mxu0 %v5464
    %5983 = vmatpush.bf16.msra.mxu0 %v5462
    %5984 = vmatpush.bf16.msra.mxu0 %v5460
    %5985 = vmatpush.bf16.msra.mxu0 %v5458
    %5986 = vmatpush.bf16.msra.mxu0 %v5456
    %5987 = vmatpush.bf16.msra.mxu0 %v5454
    %5988 = vmatmul.bf16.gmra.mxu0 %v4987
    %v5989 = vpop.f32.mrf.mxu0
    %v5990 = vadd.f32 %v5961, %v5989
    %v5991 = vpop.f32.mrf.mxu0
    %v5992 = vadd.f32 %v5963, %v5991
    %5993 = vmatmul.bf16.gmra.mxu0 %v4995
    %v5994 = vpop.f32.mrf.mxu0
    %v5995 = vadd.f32 %v5966, %v5994
    %v5996 = vpop.f32.mrf.mxu0
    %v5997 = vadd.f32 %v5968, %v5996
    %5998 = vmatmul.bf16.gmra.mxu0 %v5003
    %v5999 = vpop.f32.mrf.mxu0
    %v6000 = vadd.f32 %v5971, %v5999
    %v6001 = vpop.f32.mrf.mxu0
    %v6002 = vadd.f32 %v5973, %v6001
    %6003 = vmatmul.bf16.gmra.mxu0 %v5011
    %v6004 = vpop.f32.mrf.mxu0
    %v6005 = vadd.f32 %v5976, %v6004
    %v6006 = vpop.f32.mrf.mxu0
    %v6007 = vadd.f32 %v5978, %v6006
    %6008 = vdwg.mxu0
    %6009 = vmatpush.bf16.msra.mxu0 %v5484
    %6010 = vmatpush.bf16.msra.mxu0 %v5482
    %6011 = vmatpush.bf16.msra.mxu0 %v5480
    %6012 = vmatpush.bf16.msra.mxu0 %v5478
    %6013 = vmatpush.bf16.msra.mxu0 %v5476
    %6014 = vmatpush.bf16.msra.mxu0 %v5474
    %6015 = vmatpush.bf16.msra.mxu0 %v5472
    %6016 = vmatpush.bf16.msra.mxu0 %v5470
    %6017 = vmatmul.bf16.gmra.mxu0 %v4988
    %v6018 = vpop.f32.mrf.mxu0
    %v6019 = vadd.f32 %v5990, %v6018
    %v6020 = vpop.f32.mrf.mxu0
    %v6021 = vadd.f32 %v5992, %v6020
    %6022 = vmatmul.bf16.gmra.mxu0 %v4996
    %v6023 = vpop.f32.mrf.mxu0
    %v6024 = vadd.f32 %v5995, %v6023
    %v6025 = vpop.f32.mrf.mxu0
    %v6026 = vadd.f32 %v5997, %v6025
    %6027 = vmatmul.bf16.gmra.mxu0 %v5004
    %v6028 = vpop.f32.mrf.mxu0
    %v6029 = vadd.f32 %v6000, %v6028
    %v6030 = vpop.f32.mrf.mxu0
    %v6031 = vadd.f32 %v6002, %v6030
    %6032 = vmatmul.bf16.gmra.mxu0 %v5012
    %v6033 = vpop.f32.mrf.mxu0
    %v6034 = vadd.f32 %v6005, %v6033
    %v6035 = vpop.f32.mrf.mxu0
    %v6036 = vadd.f32 %v6007, %v6035
    %6037 = vdwg.mxu0
    %6038 = vmatpush.bf16.msra.mxu0 %v5500
    %6039 = vmatpush.bf16.msra.mxu0 %v5498
    %6040 = vmatpush.bf16.msra.mxu0 %v5496
    %6041 = vmatpush.bf16.msra.mxu0 %v5494
    %6042 = vmatpush.bf16.msra.mxu0 %v5492
    %6043 = vmatpush.bf16.msra.mxu0 %v5490
    %6044 = vmatpush.bf16.msra.mxu0 %v5488
    %6045 = vmatpush.bf16.msra.mxu0 %v5486
    %6046 = vmatmul.bf16.gmra.mxu0 %v4989
    %v6047 = vpop.f32.mrf.mxu0
    %v6048 = vadd.f32 %v6019, %v6047
    %v6049 = vpop.f32.mrf.mxu0
    %v6050 = vadd.f32 %v6021, %v6049
    %6051 = vmatmul.bf16.gmra.mxu0 %v4997
    %v6052 = vpop.f32.mrf.mxu0
    %v6053 = vadd.f32 %v6024, %v6052
    %v6054 = vpop.f32.mrf.mxu0
    %v6055 = vadd.f32 %v6026, %v6054
    %6056 = vmatmul.bf16.gmra.mxu0 %v5005
    %v6057 = vpop.f32.mrf.mxu0
    %v6058 = vadd.f32 %v6029, %v6057
    %v6059 = vpop.f32.mrf.mxu0
    %v6060 = vadd.f32 %v6031, %v6059
    %6061 = vmatmul.bf16.gmra.mxu0 %v5013
    %v6062 = vpop.f32.mrf.mxu0
    %v6063 = vadd.f32 %v6034, %v6062
    %v6064 = vpop.f32.mrf.mxu0
    %v6065 = vadd.f32 %v6036, %v6064
    %6066 = vdwg.mxu0
    %6067 = vmatpush.bf16.msra.mxu0 %v5516
    %6068 = vmatpush.bf16.msra.mxu0 %v5514
    %6069 = vmatpush.bf16.msra.mxu0 %v5512
    %6070 = vmatpush.bf16.msra.mxu0 %v5510
    %6071 = vmatpush.bf16.msra.mxu0 %v5508
    %6072 = vmatpush.bf16.msra.mxu0 %v5506
    %6073 = vmatpush.bf16.msra.mxu0 %v5504
    %6074 = vmatpush.bf16.msra.mxu0 %v5502
    %6075 = vmatmul.bf16.gmra.mxu0 %v4990
    %v6076 = vpop.f32.mrf.mxu0
    %v6077 = vadd.f32 %v6048, %v6076
    %v6078 = vpop.f32.mrf.mxu0
    %v6079 = vadd.f32 %v6050, %v6078
    %6080 = vmatmul.bf16.gmra.mxu0 %v4998
    %v6081 = vpop.f32.mrf.mxu0
    %v6082 = vadd.f32 %v6053, %v6081
    %v6083 = vpop.f32.mrf.mxu0
    %v6084 = vadd.f32 %v6055, %v6083
    %6085 = vmatmul.bf16.gmra.mxu0 %v5006
    %v6086 = vpop.f32.mrf.mxu0
    %v6087 = vadd.f32 %v6058, %v6086
    %v6088 = vpop.f32.mrf.mxu0
    %v6089 = vadd.f32 %v6060, %v6088
    %6090 = vmatmul.bf16.gmra.mxu0 %v5014
    %v6091 = vpop.f32.mrf.mxu0
    %v6092 = vadd.f32 %v6063, %v6091
    %v6093 = vpop.f32.mrf.mxu0
    %v6094 = vadd.f32 %v6065, %v6093
    %6095 = vdwg.mxu0
    %6096 = vmatpush.bf16.msra.mxu0 %v5532
    %6097 = vmatpush.bf16.msra.mxu0 %v5530
    %6098 = vmatpush.bf16.msra.mxu0 %v5528
    %6099 = vmatpush.bf16.msra.mxu0 %v5526
    %6100 = vmatpush.bf16.msra.mxu0 %v5524
    %6101 = vmatpush.bf16.msra.mxu0 %v5522
    %6102 = vmatpush.bf16.msra.mxu0 %v5520
    %6103 = vmatpush.bf16.msra.mxu0 %v5518
    %6104 = vmatmul.bf16.gmra.mxu0 %v4991
    %v6105 = vpop.f32.mrf.mxu0
    %v6106 = vadd.f32 %v6077, %v6105
    %v6107 = vpop.f32.mrf.mxu0
    %v6108 = vadd.f32 %v6079, %v6107
    %6109 = vmatmul.bf16.gmra.mxu0 %v4999
    %v6110 = vpop.f32.mrf.mxu0
    %v6111 = vadd.f32 %v6082, %v6110
    %v6112 = vpop.f32.mrf.mxu0
    %v6113 = vadd.f32 %v6084, %v6112
    %6114 = vmatmul.bf16.gmra.mxu0 %v5007
    %v6115 = vpop.f32.mrf.mxu0
    %v6116 = vadd.f32 %v6087, %v6115
    %v6117 = vpop.f32.mrf.mxu0
    %v6118 = vadd.f32 %v6089, %v6117
    %6119 = vmatmul.bf16.gmra.mxu0 %v5015
    %v6120 = vpop.f32.mrf.mxu0
    %v6121 = vadd.f32 %v6092, %v6120
    %v6122 = vpop.f32.mrf.mxu0
    %v6123 = vadd.f32 %v6094, %v6122
    %6124 = vdwg.mxu0
    %v6125 = vtanh.pop %v5874
    %v6126 = vtanh.pop %v6106
    %v6127 = vtanh.pop %v5876
    %v6128 = vtanh.pop %v6108
    %v6129 = vtanh.pop %v5879
    %v6130 = vtanh.pop %v6111
    %v6131 = vtanh.pop %v5881
    %v6132 = vtanh.pop %v6113
    %v6133 = vtanh.pop %v5884
    %v6134 = vtanh.pop %v6116
    %v6135 = vtanh.pop %v5886
    %v6136 = vtanh.pop %v6118
    %v6137 = vtanh.pop %v5889
    %v6138 = vtanh.pop %v6121
    %v6139 = vtanh.pop %v5891
    %v6140 = vtanh.pop %v6123
    %6141 = vst [vmem:[#allocation14] sm:$0xff] %v6125
    %6142 = vst [vmem:[#allocation14 + $0x8] sm:$0xff] %v6126
    %6143 = vst [vmem:[#allocation14 + $0x10] sm:$0xff] %v6127
    %6144 = vst [vmem:[#allocation14 + $0x18] sm:$0xff] %v6128
    %6145 = vst [vmem:[#allocation14 + $0x20] sm:$0xff] %v6129
    %6146 = vst [vmem:[#allocation14 + $0x28] sm:$0xff] %v6130
    %6147 = vst [vmem:[#allocation14 + $0x30] sm:$0xff] %v6131
    %6148 = vst [vmem:[#allocation14 + $0x38] sm:$0xff] %v6132
    %6149 = vst [vmem:[#allocation14 + $0x40] sm:$0xff] %v6133
    %6150 = vst [vmem:[#allocation14 + $0x48] sm:$0xff] %v6134
    %6151 = vst [vmem:[#allocation14 + $0x50] sm:$0xff] %v6135
    %6152 = vst [vmem:[#allocation14 + $0x58] sm:$0xff] %v6136
    %6153 = vst [vmem:[#allocation14 + $0x60] sm:$0xff] %v6137
    %6154 = vst [vmem:[#allocation14 + $0x68] sm:$0xff] %v6138
    %6155 = vst [vmem:[#allocation14 + $0x70] sm:$0xff] %v6139
    %6156 = vst [vmem:[#allocation14 + $0x78] sm:$0xff] %v6140
    // Predicated region
    $region50: #{tpu_custom_call.1} parent=1 // pred_check
      _
    $region51: #{tpu_custom_call.1} parent=1 // pred_check_branch
      %6158 = sbr.rel (0) target = $region53
    $region52: #{tpu_custom_call.1} parent=1 // pred_region
      %6160 = vsyncadd [#allocation7], 0
      %s6161 = sshll.u32 [#allocation14], 4
      %s6162 = int_to_ptr.vmem [resolvable:$true] %s6161
      %s6163 = sshll.u32 %s7, 4
      %s6164 = int_to_ptr.hbm [resolvable:$true] %s6163
      %6169 = dma.vmem_to_hbm [thread:$0]  %s6162, 2048, %s6164, [#allocation7], 256, 256, 16
    $region53: #{tpu_custom_call.1} parent=1 // pred_fallthru
      _
    // Predicated region
    $region54: #{tpu_custom_call.1} parent=1 // pred_check
      _
    $region55: #{tpu_custom_call.1} parent=1 // pred_check_branch
      %6171 = sbr.rel (0) target = $region57
    $region56: #{tpu_custom_call.1} parent=1 // pred_region
      %6173 = dma.done [#allocation7], 2048
    $region57: #{tpu_custom_call.1} parent=1 // pred_fallthru
      _
    %6174 = vsyncpa [#allocation6], 1
    %6175 = vsyncpa [#allocation9], 1
    %6176 = vsyncpa [#allocation12], 1
    %6177 = vsyncpa [#allocation7], 1
  %6178 = vsyncmov [#allocation4]
  %s6179 = vpop.sfrf %6178
  %p6180 = scmp.eq.s32.totalorder %s6179, 0
  %p6181 = pneg %p6180
  %6183 = shalt.err (%p6181)
  %s6184 = scalar_lea.sflag [#allocation4], 1
  %6185 = vsyncmov %s6184
  %s6186 = vpop.sfrf %6185
  %p6187 = scmp.eq.s32.totalorder %s6186, 0
  %p6188 = pneg %p6187
  %6190 = shalt.err (%p6188)

</llo_original>
